<compile_context>
chip_gen: v6e
topology: v6e:2x2x1
jax: 0.10.0
libtpu: 0.0.40
codegen_flags: <defaults>
</compile_context>

<pallas_src>
import math

import jax
import jax.numpy as jnp
from jax.experimental import pallas as pl
from jax.experimental.pallas import tpu as pltpu

LEAKY_SLOPE = 0.01  # PyTorch nn.LeakyReLU default negative_slope


def _leaky_relu(y):
    return jnp.where(y > 0, y, LEAKY_SLOPE * y)


def _fused_mlp3_kernel(x_ref, w1_ref, b1_ref, w2_ref, b2_ref, w3_ref, b3_ref, o_ref):
    """o = lrelu(lrelu(lrelu(x@W1+b1)@W2+b2)@W3+b3); single grid step, all in VMEM."""
    h = x_ref[...]  # (M, K) float32
    for w_ref, b_ref in ((w1_ref, b1_ref), (w2_ref, b2_ref), (w3_ref, b3_ref)):
        y = jnp.dot(
            h.astype(jnp.bfloat16),        # activations to bf16 for the MXU
            w_ref[...],                    # bf16 weights
            preferred_element_type=jnp.float32,  # f32 accumulation
        )
        y = y + b_ref[...]                 # f32 bias broadcast over rows
        h = _leaky_relu(y)                 # f32 activation
    o_ref[...] = h.astype(o_ref.dtype)


@jax.jit
def manual_alignment_forward(x, params):
    """Forward pass of ManualAlignment as one fused Pallas call.

    x: (M, D_in) f32.  params: [(w, b)] * 3 with w: (D_in, D_out) bf16, b: (1, D_out) f32.
    """
    (w1, b1), (w2, b2), (w3, b3) = params
    M, _ = x.shape
    H = w3.shape[1]

    def full_block(a):
        # Full-extent block => one DMA per array, single grid step, lane-dense stores.
        return pl.BlockSpec(a.shape, lambda i, nd=a.ndim: (0,) * nd)

    return pl.pallas_call(
        _fused_mlp3_kernel,
        out_shape=jax.ShapeDtypeStruct((M, H), jnp.float32),
        grid=(1,),
        in_specs=[
            full_block(x),
            full_block(w1), full_block(b1),
            full_block(w2), full_block(b2),
            full_block(w3), full_block(b3),
        ],
        out_specs=pl.BlockSpec((M, H), lambda i: (0, 0)),
        compiler_params=pltpu.CompilerParams(
            dimension_semantics=("arbitrary",),
        ),
    )(x, w1, b1, w2, b2, w3, b3)


def init_manual_alignment_params(key, input_dim=768, hidden=768,
                                 weight_dtype=jnp.bfloat16):
    """Mimic nn.Linear default init U[-1/sqrt(fan_in), 1/sqrt(fan_in)].

    Weights are stored already transposed as (fan_in, fan_out) and cast to bf16;
    biases stay f32 with shape (1, fan_out).
    """
    dims = [(input_dim, hidden), (hidden, hidden), (hidden, hidden)]
    params = []
    for fan_in, fan_out in dims:
        key, kw, kb = jax.random.split(key, 3)
        bound = 1.0 / math.sqrt(fan_in)
        w = jax.random.uniform(kw, (fan_in, fan_out), jnp.float32, -bound, bound)
        b = jax.random.uniform(kb, (1, fan_out), jnp.float32, -bound, bound)
        params.append((w.astype(weight_dtype), b))
    return params


def manual_alignment_reference(x, params):
    """Pure-JAX reference with the same numerics (bf16 operands, f32 accumulate)."""
    h = x
    for w, b in params:
        y = jnp.dot(
            h.astype(jnp.bfloat16).astype(jnp.float32),
            w.astype(jnp.float32),
        ) + b
        h = jnp.where(y > 0, y, LEAKY_SLOPE * y)
    return h


if __name__ == "__main__":
    key = jax.random.PRNGKey(0)
    k_params, k_x = jax.random.split(key)

    input_dim = 768          # module default; hidden width fixed at 768 by the module
    batch = 8                # small batch of embeddings

    params = init_manual_alignment_params(k_params, input_dim=input_dim)
    x = jax.random.normal(k_x, (batch, input_dim), jnp.float32)

    out = jax.block_until_ready(manual_alignment_forward(x, params))

    ref = manual_alignment_reference(x, params)
    assert out.shape == (batch, 768), out.shape
    assert jnp.allclose(out, ref, atol=3e-3, rtol=3e-3), (
        "mismatch vs reference: max abs err = "
        f"{float(jnp.max(jnp.abs(out - ref)))}"
    )

    print("KERNEL_OK")
</pallas_src>

<mosaic_0001>
module attributes {stable_mosaic.version = 11 : i64} {
  func.func @_fused_mlp3_kernel(%arg0: i32, %arg1: memref<8x768xf32, #tpu.memory_space<vmem>>, %arg2: memref<768x768xbf16, #tpu.memory_space<vmem>>, %arg3: memref<1x768xf32, #tpu.memory_space<vmem>>, %arg4: memref<768x768xbf16, #tpu.memory_space<vmem>>, %arg5: memref<1x768xf32, #tpu.memory_space<vmem>>, %arg6: memref<768x768xbf16, #tpu.memory_space<vmem>>, %arg7: memref<1x768xf32, #tpu.memory_space<vmem>>, %arg8: memref<8x768xf32, #tpu.memory_space<vmem>>) attributes {dimension_semantics = [#tpu.dimension_semantics<arbitrary>], iteration_bounds = array<i64: 1>, scalar_prefetch = 0 : i64, scratch_operands = 0 : i64, tpu.core_type = #tpu.core_type<tc>, window_params = [{pipeline_mode = #tpu.pipeline_mode<synchronous>, transform_indices = @transform_0, window_bounds = array<i64: 8, 768>}, {pipeline_mode = #tpu.pipeline_mode<synchronous>, transform_indices = @transform_1, window_bounds = array<i64: 768, 768>}, {pipeline_mode = #tpu.pipeline_mode<synchronous>, transform_indices = @transform_2, window_bounds = array<i64: 1, 768>}, {pipeline_mode = #tpu.pipeline_mode<synchronous>, transform_indices = @transform_3, window_bounds = array<i64: 768, 768>}, {pipeline_mode = #tpu.pipeline_mode<synchronous>, transform_indices = @transform_4, window_bounds = array<i64: 1, 768>}, {pipeline_mode = #tpu.pipeline_mode<synchronous>, transform_indices = @transform_5, window_bounds = array<i64: 768, 768>}, {pipeline_mode = #tpu.pipeline_mode<synchronous>, transform_indices = @transform_6, window_bounds = array<i64: 1, 768>}, {pipeline_mode = #tpu.pipeline_mode<synchronous>, transform_indices = @transform_7, window_bounds = array<i64: 8, 768>}]} {
    %c0 = arith.constant 0 : index
    %c0_0 = arith.constant 0 : index
    %0 = vector.load %arg1[%c0, %c0_0] : memref<8x768xf32, #tpu.memory_space<vmem>>, vector<8x768xf32>
    %1 = arith.truncf %0 : vector<8x768xf32> to vector<8x768xbf16>
    %c0_1 = arith.constant 0 : index
    %c0_2 = arith.constant 0 : index
    %2 = vector.load %arg2[%c0_1, %c0_2] : memref<768x768xbf16, #tpu.memory_space<vmem>>, vector<768x768xbf16>
    %cst = arith.constant dense<0.000000e+00> : vector<8x768xf32>
    %3 = tpu.matmul %1, %2, %cst {dimension_numbers = #tpu.dot_dimension_numbers<[1], [0], [0], [1], [0, 0, 1, 1], [], []>} : vector<8x768xbf16>, vector<768x768xbf16>, vector<8x768xf32> -> vector<8x768xf32>
    %c0_3 = arith.constant 0 : index
    %c0_4 = arith.constant 0 : index
    %4 = vector.load %arg3[%c0_3, %c0_4] : memref<1x768xf32, #tpu.memory_space<vmem>>, vector<1x768xf32>
    %5 = vector.broadcast %4 : vector<1x768xf32> to vector<8x768xf32>
    %6 = arith.addf %3, %5 : vector<8x768xf32>
    %cst_5 = arith.constant 0.000000e+00 : f32
    %7 = vector.broadcast %cst_5 : f32 to vector<8x768xf32>
    %8 = arith.cmpf ogt, %6, %7 : vector<8x768xf32>
    %cst_6 = arith.constant 0.00999999977 : f32
    %9 = vector.broadcast %cst_6 : f32 to vector<8x768xf32>
    %10 = arith.mulf %9, %6 : vector<8x768xf32>
    %11 = arith.select %8, %6, %10 : vector<8x768xi1>, vector<8x768xf32>
    %12 = arith.truncf %11 : vector<8x768xf32> to vector<8x768xbf16>
    %c0_7 = arith.constant 0 : index
    %c0_8 = arith.constant 0 : index
    %13 = vector.load %arg4[%c0_7, %c0_8] : memref<768x768xbf16, #tpu.memory_space<vmem>>, vector<768x768xbf16>
    %cst_9 = arith.constant dense<0.000000e+00> : vector<8x768xf32>
    %14 = tpu.matmul %12, %13, %cst_9 {dimension_numbers = #tpu.dot_dimension_numbers<[1], [0], [0], [1], [0, 0, 1, 1], [], []>} : vector<8x768xbf16>, vector<768x768xbf16>, vector<8x768xf32> -> vector<8x768xf32>
    %c0_10 = arith.constant 0 : index
    %c0_11 = arith.constant 0 : index
    %15 = vector.load %arg5[%c0_10, %c0_11] : memref<1x768xf32, #tpu.memory_space<vmem>>, vector<1x768xf32>
    %16 = vector.broadcast %15 : vector<1x768xf32> to vector<8x768xf32>
    %17 = arith.addf %14, %16 : vector<8x768xf32>
    %cst_12 = arith.constant 0.000000e+00 : f32
    %18 = vector.broadcast %cst_12 : f32 to vector<8x768xf32>
    %19 = arith.cmpf ogt, %17, %18 : vector<8x768xf32>
    %cst_13 = arith.constant 0.00999999977 : f32
    %20 = vector.broadcast %cst_13 : f32 to vector<8x768xf32>
    %21 = arith.mulf %20, %17 : vector<8x768xf32>
    %22 = arith.select %19, %17, %21 : vector<8x768xi1>, vector<8x768xf32>
    %23 = arith.truncf %22 : vector<8x768xf32> to vector<8x768xbf16>
    %c0_14 = arith.constant 0 : index
    %c0_15 = arith.constant 0 : index
    %24 = vector.load %arg6[%c0_14, %c0_15] : memref<768x768xbf16, #tpu.memory_space<vmem>>, vector<768x768xbf16>
    %cst_16 = arith.constant dense<0.000000e+00> : vector<8x768xf32>
    %25 = tpu.matmul %23, %24, %cst_16 {dimension_numbers = #tpu.dot_dimension_numbers<[1], [0], [0], [1], [0, 0, 1, 1], [], []>} : vector<8x768xbf16>, vector<768x768xbf16>, vector<8x768xf32> -> vector<8x768xf32>
    %c0_17 = arith.constant 0 : index
    %c0_18 = arith.constant 0 : index
    %26 = vector.load %arg7[%c0_17, %c0_18] : memref<1x768xf32, #tpu.memory_space<vmem>>, vector<1x768xf32>
    %27 = vector.broadcast %26 : vector<1x768xf32> to vector<8x768xf32>
    %28 = arith.addf %25, %27 : vector<8x768xf32>
    %cst_19 = arith.constant 0.000000e+00 : f32
    %29 = vector.broadcast %cst_19 : f32 to vector<8x768xf32>
    %30 = arith.cmpf ogt, %28, %29 : vector<8x768xf32>
    %cst_20 = arith.constant 0.00999999977 : f32
    %31 = vector.broadcast %cst_20 : f32 to vector<8x768xf32>
    %32 = arith.mulf %31, %28 : vector<8x768xf32>
    %33 = arith.select %30, %28, %32 : vector<8x768xi1>, vector<8x768xf32>
    %c0_21 = arith.constant 0 : index
    %c0_22 = arith.constant 0 : index
    %34 = vector.load %arg8[%c0_21, %c0_22] : memref<8x768xf32, #tpu.memory_space<vmem>>, vector<8x768xf32>
    tpu.vector_store %arg8[%c0_21, %c0_22], %33 {strides = array<i32>} : memref<8x768xf32, #tpu.memory_space<vmem>>, vector<8x768xf32>,
    return
  }
  func.func @transform_0(%arg0: i32) -> (i32, i32) {
    %c0_i32 = arith.constant 0 : i32
    %c0_i32_0 = arith.constant 0 : i32
    %c0_i32_1 = arith.constant 0 : i32
    return %c0_i32, %c0_i32_0 : i32, i32
  }
  func.func @transform_1(%arg0: i32) -> (i32, i32) {
    %c0_i32 = arith.constant 0 : i32
    %c0_i32_0 = arith.constant 0 : i32
    %c0_i32_1 = arith.constant 0 : i32
    return %c0_i32, %c0_i32_0 : i32, i32
  }
  func.func @transform_2(%arg0: i32) -> (i32, i32) {
    %c0_i32 = arith.constant 0 : i32
    %c0_i32_0 = arith.constant 0 : i32
    %c0_i32_1 = arith.constant 0 : i32
    return %c0_i32, %c0_i32_0 : i32, i32
  }
  func.func @transform_3(%arg0: i32) -> (i32, i32) {
    %c0_i32 = arith.constant 0 : i32
    %c0_i32_0 = arith.constant 0 : i32
    %c0_i32_1 = arith.constant 0 : i32
    return %c0_i32, %c0_i32_0 : i32, i32
  }
  func.func @transform_4(%arg0: i32) -> (i32, i32) {
    %c0_i32 = arith.constant 0 : i32
    %c0_i32_0 = arith.constant 0 : i32
    %c0_i32_1 = arith.constant 0 : i32
    return %c0_i32, %c0_i32_0 : i32, i32
  }
  func.func @transform_5(%arg0: i32) -> (i32, i32) {
    %c0_i32 = arith.constant 0 : i32
    %c0_i32_0 = arith.constant 0 : i32
    %c0_i32_1 = arith.constant 0 : i32
    return %c0_i32, %c0_i32_0 : i32, i32
  }
  func.func @transform_6(%arg0: i32) -> (i32, i32) {
    %c0_i32 = arith.constant 0 : i32
    %c0_i32_0 = arith.constant 0 : i32
    %c0_i32_1 = arith.constant 0 : i32
    return %c0_i32, %c0_i32_0 : i32, i32
  }
  func.func @transform_7(%arg0: i32) -> (i32, i32) {
    %c0_i32 = arith.constant 0 : i32
    %c0_i32_0 = arith.constant 0 : i32
    %c0_i32_1 = arith.constant 0 : i32
    return %c0_i32, %c0_i32_0 : i32, i32
  }
}

</mosaic_0001>

<llo_original>
// kernel: manual_alignment_forward.1
$region0: #{manual_alignment_forward.1}
  #allocation0 [shape = 'u32[]', space=smem, size = 0x4, offset = 0x4, fixed_abs, tag = 'smem constant byte address 0x4 - core index']
  #allocation1 [shape = 'u32[144,128]{1,0:T(1,128)}', space=vmem, size = 0x12000, scoped, tag = 'internal scratch']
  %s0 = inlined_call_operand.hbm [shape: f32[8,768], index: 0, kind: input, shape index: {}]
  %s1 = inlined_call_operand.hbm [shape: bf16[768,768], index: 1, kind: input, shape index: {}]
  %s2 = inlined_call_operand.hbm [shape: f32[1,768], index: 2, kind: input, shape index: {}]
  %s3 = inlined_call_operand.hbm [shape: bf16[768,768], index: 3, kind: input, shape index: {}]
  %s4 = inlined_call_operand.hbm [shape: f32[1,768], index: 4, kind: input, shape index: {}]
  %s5 = inlined_call_operand.hbm [shape: bf16[768,768], index: 5, kind: input, shape index: {}]
  %s6 = inlined_call_operand.hbm [shape: f32[1,768], index: 6, kind: input, shape index: {}]
  %s7 = inlined_call_operand.hbm [shape: f32[8,768], index: 7, kind: output, shape index: {}]
  %s8 = sld [smem:[#allocation0]]
  $region66: #{manual_alignment_forward.1} parent=0
    _
  %s10 = ssub.s32 1, %s8
  %s11 = scalar_select 0, %s10, %s8
  $region1: #{manual_alignment_forward.1} parent=0
    #allocation2 [shape = 'u8[24576]{0}', space=vmem, size = 0x6000, scoped, tag = 'input window, operand 0, single buffered']
    #allocation3 [shape = 's32[1]{0}', space=sflag, size = 0x4, scoped, tag = 'scoped memory for manual_alignment_forward.1']
    #allocation4 [shape = 's32[1]{0}', space=sflag, size = 0x4, scoped, tag = 'scoped memory for manual_alignment_forward.1']
    #allocation5 [shape = 'u8[1179648]{0}', space=vmem, size = 0x120000, scoped, tag = 'input window, operand 1, single buffered']
    #allocation6 [shape = 's32[1]{0}', space=sflag, size = 0x4, scoped, tag = 'scoped memory for manual_alignment_forward.1']
    #allocation7 [shape = 'u8[3072]{0}', space=vmem, size = 0xc00, scoped, tag = 'input window, operand 2, single buffered']
    #allocation8 [shape = 'u8[1179648]{0}', space=vmem, size = 0x120000, scoped, tag = 'input window, operand 3, single buffered']
    #allocation9 [shape = 's32[1]{0}', space=sflag, size = 0x4, scoped, tag = 'scoped memory for manual_alignment_forward.1']
    #allocation10 [shape = 'u8[3072]{0}', space=vmem, size = 0xc00, scoped, tag = 'input window, operand 4, single buffered']
    #allocation11 [shape = 'u8[1179648]{0}', space=vmem, size = 0x120000, scoped, tag = 'input window, operand 5, single buffered']
    #allocation12 [shape = 's32[1]{0}', space=sflag, size = 0x4, scoped, tag = 'scoped memory for manual_alignment_forward.1']
    #allocation13 [shape = 'u8[3072]{0}', space=vmem, size = 0xc00, scoped, tag = 'input window, operand 6, single buffered']
    #allocation14 [shape = 'u8[24576]{0}', space=vmem, size = 0x6000, scoped, tag = 'output window, operand 0, single buffered']
    %12 = vsyncpa [#allocation3], 0
    %13 = vsyncpa [#allocation6], 0
    %14 = vsyncpa [#allocation9], 0
    %15 = vsyncpa [#allocation12], 0
    %16 = vsyncpa [#allocation4], 0
    // Predicated region
    $region2: #{manual_alignment_forward.1} parent=1 // pred_check
      _
    $region3: #{manual_alignment_forward.1} parent=1 // pred_check_branch
      %18 = sbr.rel (0) target = $region5
    $region4: #{manual_alignment_forward.1} parent=1 // pred_region
      %s20 = ssub.s32 768, 768
      %21 = vsyncadd [#allocation3], %s20
      %s23 = sshll.u32 [#allocation2], 4
      %s24 = int_to_ptr.vmem [resolvable:$true] %s23
      %26 = dma.hbm_to_vmem [thread:$0]  %s0, 768, %s24, [#allocation3]
    $region5: #{manual_alignment_forward.1} parent=1 // pred_fallthru
      _
    // Predicated region
    $region6: #{manual_alignment_forward.1} parent=1 // pred_check
      _
    $region7: #{manual_alignment_forward.1} parent=1 // pred_check_branch
      %28 = sbr.rel (0) target = $region9
    $region8: #{manual_alignment_forward.1} parent=1 // pred_region
      %s30 = ssub.s32 36864, 36864
      %31 = vsyncadd [#allocation6], %s30
      %s32 = sshll.u32 [#allocation5], 4
      %s33 = int_to_ptr.vmem [resolvable:$true] %s32
      %38 = dma.hbm_to_vmem [thread:$0]  %s1, 36864, %s33, [#allocation6], 384, 384, 24
    $region9: #{manual_alignment_forward.1} parent=1 // pred_fallthru
      _
    // Predicated region
    $region10: #{manual_alignment_forward.1} parent=1 // pred_check
      _
    $region11: #{manual_alignment_forward.1} parent=1 // pred_check_branch
      %40 = sbr.rel (0) target = $region13
    $region12: #{manual_alignment_forward.1} parent=1 // pred_region
      %s42 = ssub.s32 96, 96
      %43 = vsyncadd [#allocation6], %s42
      %s45 = sshll.u32 [#allocation7], 4
      %s46 = int_to_ptr.vmem [resolvable:$true] %s45
      %48 = dma.hbm_to_vmem [thread:$0]  %s2, 96, %s46, [#allocation6]
    $region13: #{manual_alignment_forward.1} parent=1 // pred_fallthru
      _
    // Predicated region
    $region14: #{manual_alignment_forward.1} parent=1 // pred_check
      _
    $region15: #{manual_alignment_forward.1} parent=1 // pred_check_branch
      %50 = sbr.rel (0) target = $region17
    $region16: #{manual_alignment_forward.1} parent=1 // pred_region
      %s52 = ssub.s32 36864, 36864
      %53 = vsyncadd [#allocation9], %s52
      %s54 = sshll.u32 [#allocation8], 4
      %s55 = int_to_ptr.vmem [resolvable:$true] %s54
      %60 = dma.hbm_to_vmem [thread:$0]  %s3, 36864, %s55, [#allocation9], 384, 384, 24
    $region17: #{manual_alignment_forward.1} parent=1 // pred_fallthru
      _
    // Predicated region
    $region18: #{manual_alignment_forward.1} parent=1 // pred_check
      _
    $region19: #{manual_alignment_forward.1} parent=1 // pred_check_branch
      %62 = sbr.rel (0) target = $region21
    $region20: #{manual_alignment_forward.1} parent=1 // pred_region
      %s64 = ssub.s32 96, 96
      %65 = vsyncadd [#allocation9], %s64
      %s67 = sshll.u32 [#allocation10], 4
      %s68 = int_to_ptr.vmem [resolvable:$true] %s67
      %70 = dma.hbm_to_vmem [thread:$0]  %s4, 96, %s68, [#allocation9]
    $region21: #{manual_alignment_forward.1} parent=1 // pred_fallthru
      _
    // Predicated region
    $region22: #{manual_alignment_forward.1} parent=1 // pred_check
      _
    $region23: #{manual_alignment_forward.1} parent=1 // pred_check_branch
      %72 = sbr.rel (0) target = $region25
    $region24: #{manual_alignment_forward.1} parent=1 // pred_region
      %s74 = ssub.s32 36864, 36864
      %75 = vsyncadd [#allocation12], %s74
      %s76 = sshll.u32 [#allocation11], 4
      %s77 = int_to_ptr.vmem [resolvable:$true] %s76
      %82 = dma.hbm_to_vmem [thread:$0]  %s5, 36864, %s77, [#allocation12], 384, 384, 24
    $region25: #{manual_alignment_forward.1} parent=1 // pred_fallthru
      _
    // Predicated region
    $region26: #{manual_alignment_forward.1} parent=1 // pred_check
      _
    $region27: #{manual_alignment_forward.1} parent=1 // pred_check_branch
      %84 = sbr.rel (0) target = $region29
    $region28: #{manual_alignment_forward.1} parent=1 // pred_region
      %s86 = ssub.s32 96, 96
      %87 = vsyncadd [#allocation12], %s86
      %s89 = sshll.u32 [#allocation13], 4
      %s90 = int_to_ptr.vmem [resolvable:$true] %s89
      %92 = dma.hbm_to_vmem [thread:$0]  %s6, 96, %s90, [#allocation12]
    $region29: #{manual_alignment_forward.1} parent=1 // pred_fallthru
      _
    // Predicated region
    $region30: #{manual_alignment_forward.1} parent=1 // pred_check
      _
    $region31: #{manual_alignment_forward.1} parent=1 // pred_check_branch
      %94 = sbr.rel (0) target = $region33
    $region32: #{manual_alignment_forward.1} parent=1 // pred_region
      %95 = dma.done [#allocation3], 768
    $region33: #{manual_alignment_forward.1} parent=1 // pred_fallthru
      _
    // Predicated region
    $region34: #{manual_alignment_forward.1} parent=1 // pred_check
      _
    $region35: #{manual_alignment_forward.1} parent=1 // pred_check_branch
      %97 = sbr.rel (0) target = $region37
    $region36: #{manual_alignment_forward.1} parent=1 // pred_region
      %98 = dma.done [#allocation6], 36864
    $region37: #{manual_alignment_forward.1} parent=1 // pred_fallthru
      _
    // Predicated region
    $region38: #{manual_alignment_forward.1} parent=1 // pred_check
      _
    $region39: #{manual_alignment_forward.1} parent=1 // pred_check_branch
      %100 = sbr.rel (0) target = $region41
    $region40: #{manual_alignment_forward.1} parent=1 // pred_region
      %101 = dma.done [#allocation6], 96
    $region41: #{manual_alignment_forward.1} parent=1 // pred_fallthru
      _
    // Predicated region
    $region42: #{manual_alignment_forward.1} parent=1 // pred_check
      _
    $region43: #{manual_alignment_forward.1} parent=1 // pred_check_branch
      %103 = sbr.rel (0) target = $region45
    $region44: #{manual_alignment_forward.1} parent=1 // pred_region
      %104 = dma.done [#allocation9], 36864
    $region45: #{manual_alignment_forward.1} parent=1 // pred_fallthru
      _
    // Predicated region
    $region46: #{manual_alignment_forward.1} parent=1 // pred_check
      _
    $region47: #{manual_alignment_forward.1} parent=1 // pred_check_branch
      %106 = sbr.rel (0) target = $region49
    $region48: #{manual_alignment_forward.1} parent=1 // pred_region
      %107 = dma.done [#allocation9], 96
    $region49: #{manual_alignment_forward.1} parent=1 // pred_fallthru
      _
    // Predicated region
    $region50: #{manual_alignment_forward.1} parent=1 // pred_check
      _
    $region51: #{manual_alignment_forward.1} parent=1 // pred_check_branch
      %109 = sbr.rel (0) target = $region53
    $region52: #{manual_alignment_forward.1} parent=1 // pred_region
      %110 = dma.done [#allocation12], 36864
    $region53: #{manual_alignment_forward.1} parent=1 // pred_fallthru
      _
    // Predicated region
    $region54: #{manual_alignment_forward.1} parent=1 // pred_check
      _
    $region55: #{manual_alignment_forward.1} parent=1 // pred_check_branch
      %112 = sbr.rel (0) target = $region57
    $region56: #{manual_alignment_forward.1} parent=1 // pred_region
      %113 = dma.done [#allocation12], 96
    $region57: #{manual_alignment_forward.1} parent=1 // pred_fallthru
      _
    %v114 = vld [vmem:[#allocation2] sm:$0xff]
    %v115 = vld [vmem:[#allocation2 + $0x8] sm:$0xff]
    %v116 = vld [vmem:[#allocation2 + $0x10] sm:$0xff]
    %v117 = vld [vmem:[#allocation2 + $0x18] sm:$0xff]
    %v118 = vld [vmem:[#allocation2 + $0x20] sm:$0xff]
    %v119 = vld [vmem:[#allocation2 + $0x28] sm:$0xff]
    %v120 = vpack.c.bf16 %v114, %v114
    %v121 = vpack.c.bf16 %v115, %v115
    %v122 = vpack.c.bf16 %v116, %v116
    %v123 = vpack.c.bf16 %v117, %v117
    %v124 = vpack.c.bf16 %v118, %v118
    %v125 = vpack.c.bf16 %v119, %v119
    %v126 = vld [vmem:[#allocation5] sm:$0xff]
    %v127 = vld [vmem:[#allocation5 + $0x8] sm:$0xff]
    %v128 = vld [vmem:[#allocation5 + $0x10] sm:$0xff]
    %v129 = vld [vmem:[#allocation5 + $0x18] sm:$0xff]
    %v130 = vld [vmem:[#allocation5 + $0x20] sm:$0xff]
    %v131 = vld [vmem:[#allocation5 + $0x28] sm:$0xff]
    %v132 = vld [vmem:[#allocation5 + $0x30] sm:$0xff]
    %v133 = vld [vmem:[#allocation5 + $0x38] sm:$0xff]
    %v134 = vld [vmem:[#allocation5 + $0x40] sm:$0xff]
    %v135 = vld [vmem:[#allocation5 + $0x48] sm:$0xff]
    %v136 = vld [vmem:[#allocation5 + $0x50] sm:$0xff]
    %v137 = vld [vmem:[#allocation5 + $0x58] sm:$0xff]
    %v138 = vld [vmem:[#allocation5 + $0x60] sm:$0xff]
    %v139 = vld [vmem:[#allocation5 + $0x68] sm:$0xff]
    %v140 = vld [vmem:[#allocation5 + $0x70] sm:$0xff]
    %v141 = vld [vmem:[#allocation5 + $0x78] sm:$0xff]
    %v142 = vld [vmem:[#allocation5 + $0x80] sm:$0xff]
    %v143 = vld [vmem:[#allocation5 + $0x88] sm:$0xff]
    %v144 = vld [vmem:[#allocation5 + $0x90] sm:$0xff]
    %v145 = vld [vmem:[#allocation5 + $0x98] sm:$0xff]
    %v146 = vld [vmem:[#allocation5 + $0xa0] sm:$0xff]
    %v147 = vld [vmem:[#allocation5 + $0xa8] sm:$0xff]
    %v148 = vld [vmem:[#allocation5 + $0xb0] sm:$0xff]
    %v149 = vld [vmem:[#allocation5 + $0xb8] sm:$0xff]
    %v150 = vld [vmem:[#allocation5 + $0xc0] sm:$0xff]
    %v151 = vld [vmem:[#allocation5 + $0xc8] sm:$0xff]
    %v152 = vld [vmem:[#allocation5 + $0xd0] sm:$0xff]
    %v153 = vld [vmem:[#allocation5 + $0xd8] sm:$0xff]
    %v154 = vld [vmem:[#allocation5 + $0xe0] sm:$0xff]
    %v155 = vld [vmem:[#allocation5 + $0xe8] sm:$0xff]
    %v156 = vld [vmem:[#allocation5 + $0xf0] sm:$0xff]
    %v157 = vld [vmem:[#allocation5 + $0xf8] sm:$0xff]
    %v158 = vld [vmem:[#allocation5 + $0x100] sm:$0xff]
    %v159 = vld [vmem:[#allocation5 + $0x108] sm:$0xff]
    %v160 = vld [vmem:[#allocation5 + $0x110] sm:$0xff]
    %v161 = vld [vmem:[#allocation5 + $0x118] sm:$0xff]
    %v162 = vld [vmem:[#allocation5 + $0x120] sm:$0xff]
    %v163 = vld [vmem:[#allocation5 + $0x128] sm:$0xff]
    %v164 = vld [vmem:[#allocation5 + $0x130] sm:$0xff]
    %v165 = vld [vmem:[#allocation5 + $0x138] sm:$0xff]
    %v166 = vld [vmem:[#allocation5 + $0x140] sm:$0xff]
    %v167 = vld [vmem:[#allocation5 + $0x148] sm:$0xff]
    %v168 = vld [vmem:[#allocation5 + $0x150] sm:$0xff]
    %v169 = vld [vmem:[#allocation5 + $0x158] sm:$0xff]
    %v170 = vld [vmem:[#allocation5 + $0x160] sm:$0xff]
    %v171 = vld [vmem:[#allocation5 + $0x168] sm:$0xff]
    %v172 = vld [vmem:[#allocation5 + $0x170] sm:$0xff]
    %v173 = vld [vmem:[#allocation5 + $0x178] sm:$0xff]
    %v174 = vld [vmem:[#allocation5 + $0x180] sm:$0xff]
    %v175 = vld [vmem:[#allocation5 + $0x188] sm:$0xff]
    %v176 = vld [vmem:[#allocation5 + $0x190] sm:$0xff]
    %v177 = vld [vmem:[#allocation5 + $0x198] sm:$0xff]
    %v178 = vld [vmem:[#allocation5 + $0x1a0] sm:$0xff]
    %v179 = vld [vmem:[#allocation5 + $0x1a8] sm:$0xff]
    %v180 = vld [vmem:[#allocation5 + $0x1b0] sm:$0xff]
    %v181 = vld [vmem:[#allocation5 + $0x1b8] sm:$0xff]
    %v182 = vld [vmem:[#allocation5 + $0x1c0] sm:$0xff]
    %v183 = vld [vmem:[#allocation5 + $0x1c8] sm:$0xff]
    %v184 = vld [vmem:[#allocation5 + $0x1d0] sm:$0xff]
    %v185 = vld [vmem:[#allocation5 + $0x1d8] sm:$0xff]
    %v186 = vld [vmem:[#allocation5 + $0x1e0] sm:$0xff]
    %v187 = vld [vmem:[#allocation5 + $0x1e8] sm:$0xff]
    %v188 = vld [vmem:[#allocation5 + $0x1f0] sm:$0xff]
    %v189 = vld [vmem:[#allocation5 + $0x1f8] sm:$0xff]
    %v190 = vld [vmem:[#allocation5 + $0x200] sm:$0xff]
    %v191 = vld [vmem:[#allocation5 + $0x208] sm:$0xff]
    %v192 = vld [vmem:[#allocation5 + $0x210] sm:$0xff]
    %v193 = vld [vmem:[#allocation5 + $0x218] sm:$0xff]
    %v194 = vld [vmem:[#allocation5 + $0x220] sm:$0xff]
    %v195 = vld [vmem:[#allocation5 + $0x228] sm:$0xff]
    %v196 = vld [vmem:[#allocation5 + $0x230] sm:$0xff]
    %v197 = vld [vmem:[#allocation5 + $0x238] sm:$0xff]
    %v198 = vld [vmem:[#allocation5 + $0x240] sm:$0xff]
    %v199 = vld [vmem:[#allocation5 + $0x248] sm:$0xff]
    %v200 = vld [vmem:[#allocation5 + $0x250] sm:$0xff]
    %v201 = vld [vmem:[#allocation5 + $0x258] sm:$0xff]
    %v202 = vld [vmem:[#allocation5 + $0x260] sm:$0xff]
    %v203 = vld [vmem:[#allocation5 + $0x268] sm:$0xff]
    %v204 = vld [vmem:[#allocation5 + $0x270] sm:$0xff]
    %v205 = vld [vmem:[#allocation5 + $0x278] sm:$0xff]
    %v206 = vld [vmem:[#allocation5 + $0x280] sm:$0xff]
    %v207 = vld [vmem:[#allocation5 + $0x288] sm:$0xff]
    %v208 = vld [vmem:[#allocation5 + $0x290] sm:$0xff]
    %v209 = vld [vmem:[#allocation5 + $0x298] sm:$0xff]
    %v210 = vld [vmem:[#allocation5 + $0x2a0] sm:$0xff]
    %v211 = vld [vmem:[#allocation5 + $0x2a8] sm:$0xff]
    %v212 = vld [vmem:[#allocation5 + $0x2b0] sm:$0xff]
    %v213 = vld [vmem:[#allocation5 + $0x2b8] sm:$0xff]
    %v214 = vld [vmem:[#allocation5 + $0x2c0] sm:$0xff]
    %v215 = vld [vmem:[#allocation5 + $0x2c8] sm:$0xff]
    %v216 = vld [vmem:[#allocation5 + $0x2d0] sm:$0xff]
    %v217 = vld [vmem:[#allocation5 + $0x2d8] sm:$0xff]
    %v218 = vld [vmem:[#allocation5 + $0x2e0] sm:$0xff]
    %v219 = vld [vmem:[#allocation5 + $0x2e8] sm:$0xff]
    %v220 = vld [vmem:[#allocation5 + $0x2f0] sm:$0xff]
    %v221 = vld [vmem:[#allocation5 + $0x2f8] sm:$0xff]
    %v222 = vld [vmem:[#allocation5 + $0x300] sm:$0xff]
    %v223 = vld [vmem:[#allocation5 + $0x308] sm:$0xff]
    %v224 = vld [vmem:[#allocation5 + $0x310] sm:$0xff]
    %v225 = vld [vmem:[#allocation5 + $0x318] sm:$0xff]
    %v226 = vld [vmem:[#allocation5 + $0x320] sm:$0xff]
    %v227 = vld [vmem:[#allocation5 + $0x328] sm:$0xff]
    %v228 = vld [vmem:[#allocation5 + $0x330] sm:$0xff]
    %v229 = vld [vmem:[#allocation5 + $0x338] sm:$0xff]
    %v230 = vld [vmem:[#allocation5 + $0x340] sm:$0xff]
    %v231 = vld [vmem:[#allocation5 + $0x348] sm:$0xff]
    %v232 = vld [vmem:[#allocation5 + $0x350] sm:$0xff]
    %v233 = vld [vmem:[#allocation5 + $0x358] sm:$0xff]
    %v234 = vld [vmem:[#allocation5 + $0x360] sm:$0xff]
    %v235 = vld [vmem:[#allocation5 + $0x368] sm:$0xff]
    %v236 = vld [vmem:[#allocation5 + $0x370] sm:$0xff]
    %v237 = vld [vmem:[#allocation5 + $0x378] sm:$0xff]
    %v238 = vld [vmem:[#allocation5 + $0x380] sm:$0xff]
    %v239 = vld [vmem:[#allocation5 + $0x388] sm:$0xff]
    %v240 = vld [vmem:[#allocation5 + $0x390] sm:$0xff]
    %v241 = vld [vmem:[#allocation5 + $0x398] sm:$0xff]
    %v242 = vld [vmem:[#allocation5 + $0x3a0] sm:$0xff]
    %v243 = vld [vmem:[#allocation5 + $0x3a8] sm:$0xff]
    %v244 = vld [vmem:[#allocation5 + $0x3b0] sm:$0xff]
    %v245 = vld [vmem:[#allocation5 + $0x3b8] sm:$0xff]
    %v246 = vld [vmem:[#allocation5 + $0x3c0] sm:$0xff]
    %v247 = vld [vmem:[#allocation5 + $0x3c8] sm:$0xff]
    %v248 = vld [vmem:[#allocation5 + $0x3d0] sm:$0xff]
    %v249 = vld [vmem:[#allocation5 + $0x3d8] sm:$0xff]
    %v250 = vld [vmem:[#allocation5 + $0x3e0] sm:$0xff]
    %v251 = vld [vmem:[#allocation5 + $0x3e8] sm:$0xff]
    %v252 = vld [vmem:[#allocation5 + $0x3f0] sm:$0xff]
    %v253 = vld [vmem:[#allocation5 + $0x3f8] sm:$0xff]
    %v254 = vld [vmem:[#allocation5 + $0x400] sm:$0xff]
    %v255 = vld [vmem:[#allocation5 + $0x408] sm:$0xff]
    %v256 = vld [vmem:[#allocation5 + $0x410] sm:$0xff]
    %v257 = vld [vmem:[#allocation5 + $0x418] sm:$0xff]
    %v258 = vld [vmem:[#allocation5 + $0x420] sm:$0xff]
    %v259 = vld [vmem:[#allocation5 + $0x428] sm:$0xff]
    %v260 = vld [vmem:[#allocation5 + $0x430] sm:$0xff]
    %v261 = vld [vmem:[#allocation5 + $0x438] sm:$0xff]
    %v262 = vld [vmem:[#allocation5 + $0x440] sm:$0xff]
    %v263 = vld [vmem:[#allocation5 + $0x448] sm:$0xff]
    %v264 = vld [vmem:[#allocation5 + $0x450] sm:$0xff]
    %v265 = vld [vmem:[#allocation5 + $0x458] sm:$0xff]
    %v266 = vld [vmem:[#allocation5 + $0x460] sm:$0xff]
    %v267 = vld [vmem:[#allocation5 + $0x468] sm:$0xff]
    %v268 = vld [vmem:[#allocation5 + $0x470] sm:$0xff]
    %v269 = vld [vmem:[#allocation5 + $0x478] sm:$0xff]
    %v270 = vld [vmem:[#allocation5 + $0x480] sm:$0xff]
    %v271 = vld [vmem:[#allocation5 + $0x488] sm:$0xff]
    %v272 = vld [vmem:[#allocation5 + $0x490] sm:$0xff]
    %v273 = vld [vmem:[#allocation5 + $0x498] sm:$0xff]
    %v274 = vld [vmem:[#allocation5 + $0x4a0] sm:$0xff]
    %v275 = vld [vmem:[#allocation5 + $0x4a8] sm:$0xff]
    %v276 = vld [vmem:[#allocation5 + $0x4b0] sm:$0xff]
    %v277 = vld [vmem:[#allocation5 + $0x4b8] sm:$0xff]
    %v278 = vld [vmem:[#allocation5 + $0x4c0] sm:$0xff]
    %v279 = vld [vmem:[#allocation5 + $0x4c8] sm:$0xff]
    %v280 = vld [vmem:[#allocation5 + $0x4d0] sm:$0xff]
    %v281 = vld [vmem:[#allocation5 + $0x4d8] sm:$0xff]
    %v282 = vld [vmem:[#allocation5 + $0x4e0] sm:$0xff]
    %v283 = vld [vmem:[#allocation5 + $0x4e8] sm:$0xff]
    %v284 = vld [vmem:[#allocation5 + $0x4f0] sm:$0xff]
    %v285 = vld [vmem:[#allocation5 + $0x4f8] sm:$0xff]
    %v286 = vld [vmem:[#allocation5 + $0x500] sm:$0xff]
    %v287 = vld [vmem:[#allocation5 + $0x508] sm:$0xff]
    %v288 = vld [vmem:[#allocation5 + $0x510] sm:$0xff]
    %v289 = vld [vmem:[#allocation5 + $0x518] sm:$0xff]
    %v290 = vld [vmem:[#allocation5 + $0x520] sm:$0xff]
    %v291 = vld [vmem:[#allocation5 + $0x528] sm:$0xff]
    %v292 = vld [vmem:[#allocation5 + $0x530] sm:$0xff]
    %v293 = vld [vmem:[#allocation5 + $0x538] sm:$0xff]
    %v294 = vld [vmem:[#allocation5 + $0x540] sm:$0xff]
    %v295 = vld [vmem:[#allocation5 + $0x548] sm:$0xff]
    %v296 = vld [vmem:[#allocation5 + $0x550] sm:$0xff]
    %v297 = vld [vmem:[#allocation5 + $0x558] sm:$0xff]
    %v298 = vld [vmem:[#allocation5 + $0x560] sm:$0xff]
    %v299 = vld [vmem:[#allocation5 + $0x568] sm:$0xff]
    %v300 = vld [vmem:[#allocation5 + $0x570] sm:$0xff]
    %v301 = vld [vmem:[#allocation5 + $0x578] sm:$0xff]
    %v302 = vld [vmem:[#allocation5 + $0x580] sm:$0xff]
    %v303 = vld [vmem:[#allocation5 + $0x588] sm:$0xff]
    %v304 = vld [vmem:[#allocation5 + $0x590] sm:$0xff]
    %v305 = vld [vmem:[#allocation5 + $0x598] sm:$0xff]
    %v306 = vld [vmem:[#allocation5 + $0x5a0] sm:$0xff]
    %v307 = vld [vmem:[#allocation5 + $0x5a8] sm:$0xff]
    %v308 = vld [vmem:[#allocation5 + $0x5b0] sm:$0xff]
    %v309 = vld [vmem:[#allocation5 + $0x5b8] sm:$0xff]
    %v310 = vld [vmem:[#allocation5 + $0x5c0] sm:$0xff]
    %v311 = vld [vmem:[#allocation5 + $0x5c8] sm:$0xff]
    %v312 = vld [vmem:[#allocation5 + $0x5d0] sm:$0xff]
    %v313 = vld [vmem:[#allocation5 + $0x5d8] sm:$0xff]
    %v314 = vld [vmem:[#allocation5 + $0x5e0] sm:$0xff]
    %v315 = vld [vmem:[#allocation5 + $0x5e8] sm:$0xff]
    %v316 = vld [vmem:[#allocation5 + $0x5f0] sm:$0xff]
    %v317 = vld [vmem:[#allocation5 + $0x5f8] sm:$0xff]
    %v318 = vld [vmem:[#allocation5 + $0x600] sm:$0xff]
    %v319 = vld [vmem:[#allocation5 + $0x608] sm:$0xff]
    %v320 = vld [vmem:[#allocation5 + $0x610] sm:$0xff]
    %v321 = vld [vmem:[#allocation5 + $0x618] sm:$0xff]
    %v322 = vld [vmem:[#allocation5 + $0x620] sm:$0xff]
    %v323 = vld [vmem:[#allocation5 + $0x628] sm:$0xff]
    %v324 = vld [vmem:[#allocation5 + $0x630] sm:$0xff]
    %v325 = vld [vmem:[#allocation5 + $0x638] sm:$0xff]
    %v326 = vld [vmem:[#allocation5 + $0x640] sm:$0xff]
    %v327 = vld [vmem:[#allocation5 + $0x648] sm:$0xff]
    %v328 = vld [vmem:[#allocation5 + $0x650] sm:$0xff]
    %v329 = vld [vmem:[#allocation5 + $0x658] sm:$0xff]
    %v330 = vld [vmem:[#allocation5 + $0x660] sm:$0xff]
    %v331 = vld [vmem:[#allocation5 + $0x668] sm:$0xff]
    %v332 = vld [vmem:[#allocation5 + $0x670] sm:$0xff]
    %v333 = vld [vmem:[#allocation5 + $0x678] sm:$0xff]
    %v334 = vld [vmem:[#allocation5 + $0x680] sm:$0xff]
    %v335 = vld [vmem:[#allocation5 + $0x688] sm:$0xff]
    %v336 = vld [vmem:[#allocation5 + $0x690] sm:$0xff]
    %v337 = vld [vmem:[#allocation5 + $0x698] sm:$0xff]
    %v338 = vld [vmem:[#allocation5 + $0x6a0] sm:$0xff]
    %v339 = vld [vmem:[#allocation5 + $0x6a8] sm:$0xff]
    %v340 = vld [vmem:[#allocation5 + $0x6b0] sm:$0xff]
    %v341 = vld [vmem:[#allocation5 + $0x6b8] sm:$0xff]
    %v342 = vld [vmem:[#allocation5 + $0x6c0] sm:$0xff]
    %v343 = vld [vmem:[#allocation5 + $0x6c8] sm:$0xff]
    %v344 = vld [vmem:[#allocation5 + $0x6d0] sm:$0xff]
    %v345 = vld [vmem:[#allocation5 + $0x6d8] sm:$0xff]
    %v346 = vld [vmem:[#allocation5 + $0x6e0] sm:$0xff]
    %v347 = vld [vmem:[#allocation5 + $0x6e8] sm:$0xff]
    %v348 = vld [vmem:[#allocation5 + $0x6f0] sm:$0xff]
    %v349 = vld [vmem:[#allocation5 + $0x6f8] sm:$0xff]
    %v350 = vld [vmem:[#allocation5 + $0x700] sm:$0xff]
    %v351 = vld [vmem:[#allocation5 + $0x708] sm:$0xff]
    %v352 = vld [vmem:[#allocation5 + $0x710] sm:$0xff]
    %v353 = vld [vmem:[#allocation5 + $0x718] sm:$0xff]
    %v354 = vld [vmem:[#allocation5 + $0x720] sm:$0xff]
    %v355 = vld [vmem:[#allocation5 + $0x728] sm:$0xff]
    %v356 = vld [vmem:[#allocation5 + $0x730] sm:$0xff]
    %v357 = vld [vmem:[#allocation5 + $0x738] sm:$0xff]
    %v358 = vld [vmem:[#allocation5 + $0x740] sm:$0xff]
    %v359 = vld [vmem:[#allocation5 + $0x748] sm:$0xff]
    %v360 = vld [vmem:[#allocation5 + $0x750] sm:$0xff]
    %v361 = vld [vmem:[#allocation5 + $0x758] sm:$0xff]
    %v362 = vld [vmem:[#allocation5 + $0x760] sm:$0xff]
    %v363 = vld [vmem:[#allocation5 + $0x768] sm:$0xff]
    %v364 = vld [vmem:[#allocation5 + $0x770] sm:$0xff]
    %v365 = vld [vmem:[#allocation5 + $0x778] sm:$0xff]
    %v366 = vld [vmem:[#allocation5 + $0x780] sm:$0xff]
    %v367 = vld [vmem:[#allocation5 + $0x788] sm:$0xff]
    %v368 = vld [vmem:[#allocation5 + $0x790] sm:$0xff]
    %v369 = vld [vmem:[#allocation5 + $0x798] sm:$0xff]
    %v370 = vld [vmem:[#allocation5 + $0x7a0] sm:$0xff]
    %v371 = vld [vmem:[#allocation5 + $0x7a8] sm:$0xff]
    %v372 = vld [vmem:[#allocation5 + $0x7b0] sm:$0xff]
    %v373 = vld [vmem:[#allocation5 + $0x7b8] sm:$0xff]
    %v374 = vld [vmem:[#allocation5 + $0x7c0] sm:$0xff]
    %v375 = vld [vmem:[#allocation5 + $0x7c8] sm:$0xff]
    %v376 = vld [vmem:[#allocation5 + $0x7d0] sm:$0xff]
    %v377 = vld [vmem:[#allocation5 + $0x7d8] sm:$0xff]
    %v378 = vld [vmem:[#allocation5 + $0x7e0] sm:$0xff]
    %v379 = vld [vmem:[#allocation5 + $0x7e8] sm:$0xff]
    %v380 = vld [vmem:[#allocation5 + $0x7f0] sm:$0xff]
    %v381 = vld [vmem:[#allocation5 + $0x7f8] sm:$0xff]
    %v382 = vld [vmem:[#allocation5 + $0x800] sm:$0xff]
    %v383 = vld [vmem:[#allocation5 + $0x808] sm:$0xff]
    %v384 = vld [vmem:[#allocation5 + $0x810] sm:$0xff]
    %v385 = vld [vmem:[#allocation5 + $0x818] sm:$0xff]
    %v386 = vld [vmem:[#allocation5 + $0x820] sm:$0xff]
    %v387 = vld [vmem:[#allocation5 + $0x828] sm:$0xff]
    %v388 = vld [vmem:[#allocation5 + $0x830] sm:$0xff]
    %v389 = vld [vmem:[#allocation5 + $0x838] sm:$0xff]
    %v390 = vld [vmem:[#allocation5 + $0x840] sm:$0xff]
    %v391 = vld [vmem:[#allocation5 + $0x848] sm:$0xff]
    %v392 = vld [vmem:[#allocation5 + $0x850] sm:$0xff]
    %v393 = vld [vmem:[#allocation5 + $0x858] sm:$0xff]
    %v394 = vld [vmem:[#allocation5 + $0x860] sm:$0xff]
    %v395 = vld [vmem:[#allocation5 + $0x868] sm:$0xff]
    %v396 = vld [vmem:[#allocation5 + $0x870] sm:$0xff]
    %v397 = vld [vmem:[#allocation5 + $0x878] sm:$0xff]
    %v398 = vld [vmem:[#allocation5 + $0x880] sm:$0xff]
    %v399 = vld [vmem:[#allocation5 + $0x888] sm:$0xff]
    %v400 = vld [vmem:[#allocation5 + $0x890] sm:$0xff]
    %v401 = vld [vmem:[#allocation5 + $0x898] sm:$0xff]
    %v402 = vld [vmem:[#allocation5 + $0x8a0] sm:$0xff]
    %v403 = vld [vmem:[#allocation5 + $0x8a8] sm:$0xff]
    %v404 = vld [vmem:[#allocation5 + $0x8b0] sm:$0xff]
    %v405 = vld [vmem:[#allocation5 + $0x8b8] sm:$0xff]
    %v406 = vld [vmem:[#allocation5 + $0x8c0] sm:$0xff]
    %v407 = vld [vmem:[#allocation5 + $0x8c8] sm:$0xff]
    %v408 = vld [vmem:[#allocation5 + $0x8d0] sm:$0xff]
    %v409 = vld [vmem:[#allocation5 + $0x8d8] sm:$0xff]
    %v410 = vld [vmem:[#allocation5 + $0x8e0] sm:$0xff]
    %v411 = vld [vmem:[#allocation5 + $0x8e8] sm:$0xff]
    %v412 = vld [vmem:[#allocation5 + $0x8f0] sm:$0xff]
    %v413 = vld [vmem:[#allocation5 + $0x8f8] sm:$0xff]
    %v414 = vld [vmem:[#allocation7] sm:$0x3f]
    %v416 = vlaneseq
    %v417 = vshrl.u32 %v416, 7
    %v418 = vsub.s32 0, %v417
    %v419 = vrot.slane %v414, %v418
    %v420 = vlaneseq
    %v421 = vshrl.u32 %v420, 7
    %v422 = vsub.s32 1, %v421
    %v423 = vrot.slane %v414, %v422
    %v424 = vlaneseq
    %v425 = vshrl.u32 %v424, 7
    %v426 = vsub.s32 2, %v425
    %v427 = vrot.slane %v414, %v426
    %v428 = vlaneseq
    %v429 = vshrl.u32 %v428, 7
    %v430 = vsub.s32 3, %v429
    %v431 = vrot.slane %v414, %v430
    %v432 = vlaneseq
    %v433 = vshrl.u32 %v432, 7
    %v434 = vsub.s32 4, %v433
    %v435 = vrot.slane %v414, %v434
    %v436 = vlaneseq
    %v437 = vshrl.u32 %v436, 7
    %v438 = vsub.s32 5, %v437
    %v439 = vrot.slane %v414, %v438
    %v734 = vunpack.c.l.b16 %v126
    %v735 = vunpack.c.h.b16 %v126
    %v736 = vunpack.c.l.b16 %v127
    %v737 = vunpack.c.h.b16 %v127
    %v738 = vunpack.c.l.b16 %v128
    %v739 = vunpack.c.h.b16 %v128
    %v740 = vunpack.c.l.b16 %v129
    %v741 = vunpack.c.h.b16 %v129
    %v742 = vunpack.c.l.b16 %v130
    %v743 = vunpack.c.h.b16 %v130
    %v744 = vunpack.c.l.b16 %v131
    %v745 = vunpack.c.h.b16 %v131
    %v746 = vunpack.c.l.b16 %v132
    %v747 = vunpack.c.h.b16 %v132
    %v748 = vunpack.c.l.b16 %v133
    %v749 = vunpack.c.h.b16 %v133
    %v750 = vunpack.c.l.b16 %v134
    %v751 = vunpack.c.h.b16 %v134
    %v752 = vunpack.c.l.b16 %v135
    %v753 = vunpack.c.h.b16 %v135
    %v754 = vunpack.c.l.b16 %v136
    %v755 = vunpack.c.h.b16 %v136
    %v756 = vunpack.c.l.b16 %v137
    %v757 = vunpack.c.h.b16 %v137
    %v758 = vunpack.c.l.b16 %v138
    %v759 = vunpack.c.h.b16 %v138
    %v760 = vunpack.c.l.b16 %v139
    %v761 = vunpack.c.h.b16 %v139
    %v762 = vunpack.c.l.b16 %v140
    %v763 = vunpack.c.h.b16 %v140
    %v764 = vunpack.c.l.b16 %v141
    %v765 = vunpack.c.h.b16 %v141
    %v766 = vunpack.c.l.b16 %v142
    %v767 = vunpack.c.h.b16 %v142
    %v768 = vunpack.c.l.b16 %v143
    %v769 = vunpack.c.h.b16 %v143
    %v770 = vunpack.c.l.b16 %v144
    %v771 = vunpack.c.h.b16 %v144
    %v772 = vunpack.c.l.b16 %v145
    %v773 = vunpack.c.h.b16 %v145
    %v774 = vunpack.c.l.b16 %v146
    %v775 = vunpack.c.h.b16 %v146
    %v776 = vunpack.c.l.b16 %v147
    %v777 = vunpack.c.h.b16 %v147
    %v778 = vunpack.c.l.b16 %v148
    %v779 = vunpack.c.h.b16 %v148
    %v780 = vunpack.c.l.b16 %v149
    %v781 = vunpack.c.h.b16 %v149
    %v782 = vunpack.c.l.b16 %v150
    %v783 = vunpack.c.h.b16 %v150
    %v784 = vunpack.c.l.b16 %v151
    %v785 = vunpack.c.h.b16 %v151
    %v786 = vunpack.c.l.b16 %v152
    %v787 = vunpack.c.h.b16 %v152
    %v788 = vunpack.c.l.b16 %v153
    %v789 = vunpack.c.h.b16 %v153
    %v790 = vunpack.c.l.b16 %v154
    %v791 = vunpack.c.h.b16 %v154
    %v792 = vunpack.c.l.b16 %v155
    %v793 = vunpack.c.h.b16 %v155
    %v794 = vunpack.c.l.b16 %v156
    %v795 = vunpack.c.h.b16 %v156
    %v796 = vunpack.c.l.b16 %v157
    %v797 = vunpack.c.h.b16 %v157
    %v798 = vunpack.c.l.b16 %v158
    %v799 = vunpack.c.h.b16 %v158
    %v800 = vunpack.c.l.b16 %v159
    %v801 = vunpack.c.h.b16 %v159
    %v802 = vunpack.c.l.b16 %v160
    %v803 = vunpack.c.h.b16 %v160
    %v804 = vunpack.c.l.b16 %v161
    %v805 = vunpack.c.h.b16 %v161
    %v806 = vunpack.c.l.b16 %v162
    %v807 = vunpack.c.h.b16 %v162
    %v808 = vunpack.c.l.b16 %v163
    %v809 = vunpack.c.h.b16 %v163
    %v810 = vunpack.c.l.b16 %v164
    %v811 = vunpack.c.h.b16 %v164
    %v812 = vunpack.c.l.b16 %v165
    %v813 = vunpack.c.h.b16 %v165
    %v814 = vunpack.c.l.b16 %v166
    %v815 = vunpack.c.h.b16 %v166
    %v816 = vunpack.c.l.b16 %v167
    %v817 = vunpack.c.h.b16 %v167
    %v818 = vunpack.c.l.b16 %v168
    %v819 = vunpack.c.h.b16 %v168
    %v820 = vunpack.c.l.b16 %v169
    %v821 = vunpack.c.h.b16 %v169
    %v822 = vunpack.c.l.b16 %v170
    %v823 = vunpack.c.h.b16 %v170
    %v824 = vunpack.c.l.b16 %v171
    %v825 = vunpack.c.h.b16 %v171
    %v826 = vunpack.c.l.b16 %v172
    %v827 = vunpack.c.h.b16 %v172
    %v828 = vunpack.c.l.b16 %v173
    %v829 = vunpack.c.h.b16 %v173
    %v830 = vunpack.c.l.b16 %v174
    %v831 = vunpack.c.h.b16 %v174
    %v832 = vunpack.c.l.b16 %v175
    %v833 = vunpack.c.h.b16 %v175
    %v834 = vunpack.c.l.b16 %v176
    %v835 = vunpack.c.h.b16 %v176
    %v836 = vunpack.c.l.b16 %v177
    %v837 = vunpack.c.h.b16 %v177
    %v838 = vunpack.c.l.b16 %v178
    %v839 = vunpack.c.h.b16 %v178
    %v840 = vunpack.c.l.b16 %v179
    %v841 = vunpack.c.h.b16 %v179
    %v842 = vunpack.c.l.b16 %v180
    %v843 = vunpack.c.h.b16 %v180
    %v844 = vunpack.c.l.b16 %v181
    %v845 = vunpack.c.h.b16 %v181
    %v846 = vunpack.c.l.b16 %v182
    %v847 = vunpack.c.h.b16 %v182
    %v848 = vunpack.c.l.b16 %v183
    %v849 = vunpack.c.h.b16 %v183
    %v850 = vunpack.c.l.b16 %v184
    %v851 = vunpack.c.h.b16 %v184
    %v852 = vunpack.c.l.b16 %v185
    %v853 = vunpack.c.h.b16 %v185
    %v854 = vunpack.c.l.b16 %v186
    %v855 = vunpack.c.h.b16 %v186
    %v856 = vunpack.c.l.b16 %v187
    %v857 = vunpack.c.h.b16 %v187
    %v858 = vunpack.c.l.b16 %v188
    %v859 = vunpack.c.h.b16 %v188
    %v860 = vunpack.c.l.b16 %v189
    %v861 = vunpack.c.h.b16 %v189
    %v862 = vunpack.c.l.b16 %v190
    %v863 = vunpack.c.h.b16 %v190
    %v864 = vunpack.c.l.b16 %v191
    %v865 = vunpack.c.h.b16 %v191
    %v866 = vunpack.c.l.b16 %v192
    %v867 = vunpack.c.h.b16 %v192
    %v868 = vunpack.c.l.b16 %v193
    %v869 = vunpack.c.h.b16 %v193
    %v870 = vunpack.c.l.b16 %v194
    %v871 = vunpack.c.h.b16 %v194
    %v872 = vunpack.c.l.b16 %v195
    %v873 = vunpack.c.h.b16 %v195
    %v874 = vunpack.c.l.b16 %v196
    %v875 = vunpack.c.h.b16 %v196
    %v876 = vunpack.c.l.b16 %v197
    %v877 = vunpack.c.h.b16 %v197
    %v878 = vunpack.c.l.b16 %v198
    %v879 = vunpack.c.h.b16 %v198
    %v880 = vunpack.c.l.b16 %v199
    %v881 = vunpack.c.h.b16 %v199
    %v882 = vunpack.c.l.b16 %v200
    %v883 = vunpack.c.h.b16 %v200
    %v884 = vunpack.c.l.b16 %v201
    %v885 = vunpack.c.h.b16 %v201
    %v886 = vunpack.c.l.b16 %v202
    %v887 = vunpack.c.h.b16 %v202
    %v888 = vunpack.c.l.b16 %v203
    %v889 = vunpack.c.h.b16 %v203
    %v890 = vunpack.c.l.b16 %v204
    %v891 = vunpack.c.h.b16 %v204
    %v892 = vunpack.c.l.b16 %v205
    %v893 = vunpack.c.h.b16 %v205
    %v894 = vunpack.c.l.b16 %v206
    %v895 = vunpack.c.h.b16 %v206
    %v896 = vunpack.c.l.b16 %v207
    %v897 = vunpack.c.h.b16 %v207
    %v898 = vunpack.c.l.b16 %v208
    %v899 = vunpack.c.h.b16 %v208
    %v900 = vunpack.c.l.b16 %v209
    %v901 = vunpack.c.h.b16 %v209
    %v902 = vunpack.c.l.b16 %v210
    %v903 = vunpack.c.h.b16 %v210
    %v904 = vunpack.c.l.b16 %v211
    %v905 = vunpack.c.h.b16 %v211
    %v906 = vunpack.c.l.b16 %v212
    %v907 = vunpack.c.h.b16 %v212
    %v908 = vunpack.c.l.b16 %v213
    %v909 = vunpack.c.h.b16 %v213
    %v910 = vunpack.c.l.b16 %v214
    %v911 = vunpack.c.h.b16 %v214
    %v912 = vunpack.c.l.b16 %v215
    %v913 = vunpack.c.h.b16 %v215
    %v914 = vunpack.c.l.b16 %v216
    %v915 = vunpack.c.h.b16 %v216
    %v916 = vunpack.c.l.b16 %v217
    %v917 = vunpack.c.h.b16 %v217
    %v918 = vunpack.c.l.b16 %v218
    %v919 = vunpack.c.h.b16 %v218
    %v920 = vunpack.c.l.b16 %v219
    %v921 = vunpack.c.h.b16 %v219
    %v922 = vunpack.c.l.b16 %v220
    %v923 = vunpack.c.h.b16 %v220
    %v924 = vunpack.c.l.b16 %v221
    %v925 = vunpack.c.h.b16 %v221
    %v926 = vunpack.c.l.b16 %v222
    %v927 = vunpack.c.h.b16 %v222
    %v928 = vunpack.c.l.b16 %v223
    %v929 = vunpack.c.h.b16 %v223
    %v930 = vunpack.c.l.b16 %v224
    %v931 = vunpack.c.h.b16 %v224
    %v932 = vunpack.c.l.b16 %v225
    %v933 = vunpack.c.h.b16 %v225
    %v934 = vunpack.c.l.b16 %v226
    %v935 = vunpack.c.h.b16 %v226
    %v936 = vunpack.c.l.b16 %v227
    %v937 = vunpack.c.h.b16 %v227
    %v938 = vunpack.c.l.b16 %v228
    %v939 = vunpack.c.h.b16 %v228
    %v940 = vunpack.c.l.b16 %v229
    %v941 = vunpack.c.h.b16 %v229
    %v942 = vunpack.c.l.b16 %v230
    %v943 = vunpack.c.h.b16 %v230
    %v944 = vunpack.c.l.b16 %v231
    %v945 = vunpack.c.h.b16 %v231
    %v946 = vunpack.c.l.b16 %v232
    %v947 = vunpack.c.h.b16 %v232
    %v948 = vunpack.c.l.b16 %v233
    %v949 = vunpack.c.h.b16 %v233
    %v950 = vunpack.c.l.b16 %v234
    %v951 = vunpack.c.h.b16 %v234
    %v952 = vunpack.c.l.b16 %v235
    %v953 = vunpack.c.h.b16 %v235
    %v954 = vunpack.c.l.b16 %v236
    %v955 = vunpack.c.h.b16 %v236
    %v956 = vunpack.c.l.b16 %v237
    %v957 = vunpack.c.h.b16 %v237
    %v958 = vunpack.c.l.b16 %v238
    %v959 = vunpack.c.h.b16 %v238
    %v960 = vunpack.c.l.b16 %v239
    %v961 = vunpack.c.h.b16 %v239
    %v962 = vunpack.c.l.b16 %v240
    %v963 = vunpack.c.h.b16 %v240
    %v964 = vunpack.c.l.b16 %v241
    %v965 = vunpack.c.h.b16 %v241
    %v966 = vunpack.c.l.b16 %v242
    %v967 = vunpack.c.h.b16 %v242
    %v968 = vunpack.c.l.b16 %v243
    %v969 = vunpack.c.h.b16 %v243
    %v970 = vunpack.c.l.b16 %v244
    %v971 = vunpack.c.h.b16 %v244
    %v972 = vunpack.c.l.b16 %v245
    %v973 = vunpack.c.h.b16 %v245
    %v974 = vunpack.c.l.b16 %v246
    %v975 = vunpack.c.h.b16 %v246
    %v976 = vunpack.c.l.b16 %v247
    %v977 = vunpack.c.h.b16 %v247
    %v978 = vunpack.c.l.b16 %v248
    %v979 = vunpack.c.h.b16 %v248
    %v980 = vunpack.c.l.b16 %v249
    %v981 = vunpack.c.h.b16 %v249
    %v982 = vunpack.c.l.b16 %v250
    %v983 = vunpack.c.h.b16 %v250
    %v984 = vunpack.c.l.b16 %v251
    %v985 = vunpack.c.h.b16 %v251
    %v986 = vunpack.c.l.b16 %v252
    %v987 = vunpack.c.h.b16 %v252
    %v988 = vunpack.c.l.b16 %v253
    %v989 = vunpack.c.h.b16 %v253
    %v990 = vunpack.c.l.b16 %v254
    %v991 = vunpack.c.h.b16 %v254
    %v992 = vunpack.c.l.b16 %v255
    %v993 = vunpack.c.h.b16 %v255
    %v994 = vunpack.c.l.b16 %v256
    %v995 = vunpack.c.h.b16 %v256
    %v996 = vunpack.c.l.b16 %v257
    %v997 = vunpack.c.h.b16 %v257
    %v998 = vunpack.c.l.b16 %v258
    %v999 = vunpack.c.h.b16 %v258
    %v1000 = vunpack.c.l.b16 %v259
    %v1001 = vunpack.c.h.b16 %v259
    %v1002 = vunpack.c.l.b16 %v260
    %v1003 = vunpack.c.h.b16 %v260
    %v1004 = vunpack.c.l.b16 %v261
    %v1005 = vunpack.c.h.b16 %v261
    %v1006 = vunpack.c.l.b16 %v262
    %v1007 = vunpack.c.h.b16 %v262
    %v1008 = vunpack.c.l.b16 %v263
    %v1009 = vunpack.c.h.b16 %v263
    %v1010 = vunpack.c.l.b16 %v264
    %v1011 = vunpack.c.h.b16 %v264
    %v1012 = vunpack.c.l.b16 %v265
    %v1013 = vunpack.c.h.b16 %v265
    %v1014 = vunpack.c.l.b16 %v266
    %v1015 = vunpack.c.h.b16 %v266
    %v1016 = vunpack.c.l.b16 %v267
    %v1017 = vunpack.c.h.b16 %v267
    %v1018 = vunpack.c.l.b16 %v268
    %v1019 = vunpack.c.h.b16 %v268
    %v1020 = vunpack.c.l.b16 %v269
    %v1021 = vunpack.c.h.b16 %v269
    %v1022 = vunpack.c.l.b16 %v270
    %v1023 = vunpack.c.h.b16 %v270
    %v1024 = vunpack.c.l.b16 %v271
    %v1025 = vunpack.c.h.b16 %v271
    %v1026 = vunpack.c.l.b16 %v272
    %v1027 = vunpack.c.h.b16 %v272
    %v1028 = vunpack.c.l.b16 %v273
    %v1029 = vunpack.c.h.b16 %v273
    %v1030 = vunpack.c.l.b16 %v274
    %v1031 = vunpack.c.h.b16 %v274
    %v1032 = vunpack.c.l.b16 %v275
    %v1033 = vunpack.c.h.b16 %v275
    %v1034 = vunpack.c.l.b16 %v276
    %v1035 = vunpack.c.h.b16 %v276
    %v1036 = vunpack.c.l.b16 %v277
    %v1037 = vunpack.c.h.b16 %v277
    %v1038 = vunpack.c.l.b16 %v278
    %v1039 = vunpack.c.h.b16 %v278
    %v1040 = vunpack.c.l.b16 %v279
    %v1041 = vunpack.c.h.b16 %v279
    %v1042 = vunpack.c.l.b16 %v280
    %v1043 = vunpack.c.h.b16 %v280
    %v1044 = vunpack.c.l.b16 %v281
    %v1045 = vunpack.c.h.b16 %v281
    %v1046 = vunpack.c.l.b16 %v282
    %v1047 = vunpack.c.h.b16 %v282
    %v1048 = vunpack.c.l.b16 %v283
    %v1049 = vunpack.c.h.b16 %v283
    %v1050 = vunpack.c.l.b16 %v284
    %v1051 = vunpack.c.h.b16 %v284
    %v1052 = vunpack.c.l.b16 %v285
    %v1053 = vunpack.c.h.b16 %v285
    %v1054 = vunpack.c.l.b16 %v286
    %v1055 = vunpack.c.h.b16 %v286
    %v1056 = vunpack.c.l.b16 %v287
    %v1057 = vunpack.c.h.b16 %v287
    %v1058 = vunpack.c.l.b16 %v288
    %v1059 = vunpack.c.h.b16 %v288
    %v1060 = vunpack.c.l.b16 %v289
    %v1061 = vunpack.c.h.b16 %v289
    %v1062 = vunpack.c.l.b16 %v290
    %v1063 = vunpack.c.h.b16 %v290
    %v1064 = vunpack.c.l.b16 %v291
    %v1065 = vunpack.c.h.b16 %v291
    %v1066 = vunpack.c.l.b16 %v292
    %v1067 = vunpack.c.h.b16 %v292
    %v1068 = vunpack.c.l.b16 %v293
    %v1069 = vunpack.c.h.b16 %v293
    %v1070 = vunpack.c.l.b16 %v294
    %v1071 = vunpack.c.h.b16 %v294
    %v1072 = vunpack.c.l.b16 %v295
    %v1073 = vunpack.c.h.b16 %v295
    %v1074 = vunpack.c.l.b16 %v296
    %v1075 = vunpack.c.h.b16 %v296
    %v1076 = vunpack.c.l.b16 %v297
    %v1077 = vunpack.c.h.b16 %v297
    %v1078 = vunpack.c.l.b16 %v298
    %v1079 = vunpack.c.h.b16 %v298
    %v1080 = vunpack.c.l.b16 %v299
    %v1081 = vunpack.c.h.b16 %v299
    %v1082 = vunpack.c.l.b16 %v300
    %v1083 = vunpack.c.h.b16 %v300
    %v1084 = vunpack.c.l.b16 %v301
    %v1085 = vunpack.c.h.b16 %v301
    %v1086 = vunpack.c.l.b16 %v302
    %v1087 = vunpack.c.h.b16 %v302
    %v1088 = vunpack.c.l.b16 %v303
    %v1089 = vunpack.c.h.b16 %v303
    %v1090 = vunpack.c.l.b16 %v304
    %v1091 = vunpack.c.h.b16 %v304
    %v1092 = vunpack.c.l.b16 %v305
    %v1093 = vunpack.c.h.b16 %v305
    %v1094 = vunpack.c.l.b16 %v306
    %v1095 = vunpack.c.h.b16 %v306
    %v1096 = vunpack.c.l.b16 %v307
    %v1097 = vunpack.c.h.b16 %v307
    %v1098 = vunpack.c.l.b16 %v308
    %v1099 = vunpack.c.h.b16 %v308
    %v1100 = vunpack.c.l.b16 %v309
    %v1101 = vunpack.c.h.b16 %v309
    %v1102 = vunpack.c.l.b16 %v310
    %v1103 = vunpack.c.h.b16 %v310
    %v1104 = vunpack.c.l.b16 %v311
    %v1105 = vunpack.c.h.b16 %v311
    %v1106 = vunpack.c.l.b16 %v312
    %v1107 = vunpack.c.h.b16 %v312
    %v1108 = vunpack.c.l.b16 %v313
    %v1109 = vunpack.c.h.b16 %v313
    %v1110 = vunpack.c.l.b16 %v314
    %v1111 = vunpack.c.h.b16 %v314
    %v1112 = vunpack.c.l.b16 %v315
    %v1113 = vunpack.c.h.b16 %v315
    %v1114 = vunpack.c.l.b16 %v316
    %v1115 = vunpack.c.h.b16 %v316
    %v1116 = vunpack.c.l.b16 %v317
    %v1117 = vunpack.c.h.b16 %v317
    %v1118 = vunpack.c.l.b16 %v318
    %v1119 = vunpack.c.h.b16 %v318
    %v1120 = vunpack.c.l.b16 %v319
    %v1121 = vunpack.c.h.b16 %v319
    %v1122 = vunpack.c.l.b16 %v320
    %v1123 = vunpack.c.h.b16 %v320
    %v1124 = vunpack.c.l.b16 %v321
    %v1125 = vunpack.c.h.b16 %v321
    %v1126 = vunpack.c.l.b16 %v322
    %v1127 = vunpack.c.h.b16 %v322
    %v1128 = vunpack.c.l.b16 %v323
    %v1129 = vunpack.c.h.b16 %v323
    %v1130 = vunpack.c.l.b16 %v324
    %v1131 = vunpack.c.h.b16 %v324
    %v1132 = vunpack.c.l.b16 %v325
    %v1133 = vunpack.c.h.b16 %v325
    %v1134 = vunpack.c.l.b16 %v326
    %v1135 = vunpack.c.h.b16 %v326
    %v1136 = vunpack.c.l.b16 %v327
    %v1137 = vunpack.c.h.b16 %v327
    %v1138 = vunpack.c.l.b16 %v328
    %v1139 = vunpack.c.h.b16 %v328
    %v1140 = vunpack.c.l.b16 %v329
    %v1141 = vunpack.c.h.b16 %v329
    %v1142 = vunpack.c.l.b16 %v330
    %v1143 = vunpack.c.h.b16 %v330
    %v1144 = vunpack.c.l.b16 %v331
    %v1145 = vunpack.c.h.b16 %v331
    %v1146 = vunpack.c.l.b16 %v332
    %v1147 = vunpack.c.h.b16 %v332
    %v1148 = vunpack.c.l.b16 %v333
    %v1149 = vunpack.c.h.b16 %v333
    %v1150 = vunpack.c.l.b16 %v334
    %v1151 = vunpack.c.h.b16 %v334
    %v1152 = vunpack.c.l.b16 %v335
    %v1153 = vunpack.c.h.b16 %v335
    %v1154 = vunpack.c.l.b16 %v336
    %v1155 = vunpack.c.h.b16 %v336
    %v1156 = vunpack.c.l.b16 %v337
    %v1157 = vunpack.c.h.b16 %v337
    %v1158 = vunpack.c.l.b16 %v338
    %v1159 = vunpack.c.h.b16 %v338
    %v1160 = vunpack.c.l.b16 %v339
    %v1161 = vunpack.c.h.b16 %v339
    %v1162 = vunpack.c.l.b16 %v340
    %v1163 = vunpack.c.h.b16 %v340
    %v1164 = vunpack.c.l.b16 %v341
    %v1165 = vunpack.c.h.b16 %v341
    %v1166 = vunpack.c.l.b16 %v342
    %v1167 = vunpack.c.h.b16 %v342
    %v1168 = vunpack.c.l.b16 %v343
    %v1169 = vunpack.c.h.b16 %v343
    %v1170 = vunpack.c.l.b16 %v344
    %v1171 = vunpack.c.h.b16 %v344
    %v1172 = vunpack.c.l.b16 %v345
    %v1173 = vunpack.c.h.b16 %v345
    %v1174 = vunpack.c.l.b16 %v346
    %v1175 = vunpack.c.h.b16 %v346
    %v1176 = vunpack.c.l.b16 %v347
    %v1177 = vunpack.c.h.b16 %v347
    %v1178 = vunpack.c.l.b16 %v348
    %v1179 = vunpack.c.h.b16 %v348
    %v1180 = vunpack.c.l.b16 %v349
    %v1181 = vunpack.c.h.b16 %v349
    %v1182 = vunpack.c.l.b16 %v350
    %v1183 = vunpack.c.h.b16 %v350
    %v1184 = vunpack.c.l.b16 %v351
    %v1185 = vunpack.c.h.b16 %v351
    %v1186 = vunpack.c.l.b16 %v352
    %v1187 = vunpack.c.h.b16 %v352
    %v1188 = vunpack.c.l.b16 %v353
    %v1189 = vunpack.c.h.b16 %v353
    %v1190 = vunpack.c.l.b16 %v354
    %v1191 = vunpack.c.h.b16 %v354
    %v1192 = vunpack.c.l.b16 %v355
    %v1193 = vunpack.c.h.b16 %v355
    %v1194 = vunpack.c.l.b16 %v356
    %v1195 = vunpack.c.h.b16 %v356
    %v1196 = vunpack.c.l.b16 %v357
    %v1197 = vunpack.c.h.b16 %v357
    %v1198 = vunpack.c.l.b16 %v358
    %v1199 = vunpack.c.h.b16 %v358
    %v1200 = vunpack.c.l.b16 %v359
    %v1201 = vunpack.c.h.b16 %v359
    %v1202 = vunpack.c.l.b16 %v360
    %v1203 = vunpack.c.h.b16 %v360
    %v1204 = vunpack.c.l.b16 %v361
    %v1205 = vunpack.c.h.b16 %v361
    %v1206 = vunpack.c.l.b16 %v362
    %v1207 = vunpack.c.h.b16 %v362
    %v1208 = vunpack.c.l.b16 %v363
    %v1209 = vunpack.c.h.b16 %v363
    %v1210 = vunpack.c.l.b16 %v364
    %v1211 = vunpack.c.h.b16 %v364
    %v1212 = vunpack.c.l.b16 %v365
    %v1213 = vunpack.c.h.b16 %v365
    %v1214 = vunpack.c.l.b16 %v366
    %v1215 = vunpack.c.h.b16 %v366
    %v1216 = vunpack.c.l.b16 %v367
    %v1217 = vunpack.c.h.b16 %v367
    %v1218 = vunpack.c.l.b16 %v368
    %v1219 = vunpack.c.h.b16 %v368
    %v1220 = vunpack.c.l.b16 %v369
    %v1221 = vunpack.c.h.b16 %v369
    %v1222 = vunpack.c.l.b16 %v370
    %v1223 = vunpack.c.h.b16 %v370
    %v1224 = vunpack.c.l.b16 %v371
    %v1225 = vunpack.c.h.b16 %v371
    %v1226 = vunpack.c.l.b16 %v372
    %v1227 = vunpack.c.h.b16 %v372
    %v1228 = vunpack.c.l.b16 %v373
    %v1229 = vunpack.c.h.b16 %v373
    %v1230 = vunpack.c.l.b16 %v374
    %v1231 = vunpack.c.h.b16 %v374
    %v1232 = vunpack.c.l.b16 %v375
    %v1233 = vunpack.c.h.b16 %v375
    %v1234 = vunpack.c.l.b16 %v376
    %v1235 = vunpack.c.h.b16 %v376
    %v1236 = vunpack.c.l.b16 %v377
    %v1237 = vunpack.c.h.b16 %v377
    %v1238 = vunpack.c.l.b16 %v378
    %v1239 = vunpack.c.h.b16 %v378
    %v1240 = vunpack.c.l.b16 %v379
    %v1241 = vunpack.c.h.b16 %v379
    %v1242 = vunpack.c.l.b16 %v380
    %v1243 = vunpack.c.h.b16 %v380
    %v1244 = vunpack.c.l.b16 %v381
    %v1245 = vunpack.c.h.b16 %v381
    %v1246 = vunpack.c.l.b16 %v382
    %v1247 = vunpack.c.h.b16 %v382
    %v1248 = vunpack.c.l.b16 %v383
    %v1249 = vunpack.c.h.b16 %v383
    %v1250 = vunpack.c.l.b16 %v384
    %v1251 = vunpack.c.h.b16 %v384
    %v1252 = vunpack.c.l.b16 %v385
    %v1253 = vunpack.c.h.b16 %v385
    %v1254 = vunpack.c.l.b16 %v386
    %v1255 = vunpack.c.h.b16 %v386
    %v1256 = vunpack.c.l.b16 %v387
    %v1257 = vunpack.c.h.b16 %v387
    %v1258 = vunpack.c.l.b16 %v388
    %v1259 = vunpack.c.h.b16 %v388
    %v1260 = vunpack.c.l.b16 %v389
    %v1261 = vunpack.c.h.b16 %v389
    %v1262 = vunpack.c.l.b16 %v390
    %v1263 = vunpack.c.h.b16 %v390
    %v1264 = vunpack.c.l.b16 %v391
    %v1265 = vunpack.c.h.b16 %v391
    %v1266 = vunpack.c.l.b16 %v392
    %v1267 = vunpack.c.h.b16 %v392
    %v1268 = vunpack.c.l.b16 %v393
    %v1269 = vunpack.c.h.b16 %v393
    %v1270 = vunpack.c.l.b16 %v394
    %v1271 = vunpack.c.h.b16 %v394
    %v1272 = vunpack.c.l.b16 %v395
    %v1273 = vunpack.c.h.b16 %v395
    %v1274 = vunpack.c.l.b16 %v396
    %v1275 = vunpack.c.h.b16 %v396
    %v1276 = vunpack.c.l.b16 %v397
    %v1277 = vunpack.c.h.b16 %v397
    %v1278 = vunpack.c.l.b16 %v398
    %v1279 = vunpack.c.h.b16 %v398
    %v1280 = vunpack.c.l.b16 %v399
    %v1281 = vunpack.c.h.b16 %v399
    %v1282 = vunpack.c.l.b16 %v400
    %v1283 = vunpack.c.h.b16 %v400
    %v1284 = vunpack.c.l.b16 %v401
    %v1285 = vunpack.c.h.b16 %v401
    %v1286 = vunpack.c.l.b16 %v402
    %v1287 = vunpack.c.h.b16 %v402
    %v1288 = vunpack.c.l.b16 %v403
    %v1289 = vunpack.c.h.b16 %v403
    %v1290 = vunpack.c.l.b16 %v404
    %v1291 = vunpack.c.h.b16 %v404
    %v1292 = vunpack.c.l.b16 %v405
    %v1293 = vunpack.c.h.b16 %v405
    %v1294 = vunpack.c.l.b16 %v406
    %v1295 = vunpack.c.h.b16 %v406
    %v1296 = vunpack.c.l.b16 %v407
    %v1297 = vunpack.c.h.b16 %v407
    %v1298 = vunpack.c.l.b16 %v408
    %v1299 = vunpack.c.h.b16 %v408
    %v1300 = vunpack.c.l.b16 %v409
    %v1301 = vunpack.c.h.b16 %v409
    %v1302 = vunpack.c.l.b16 %v410
    %v1303 = vunpack.c.h.b16 %v410
    %v1304 = vunpack.c.l.b16 %v411
    %v1305 = vunpack.c.h.b16 %v411
    %v1306 = vunpack.c.l.b16 %v412
    %v1307 = vunpack.c.h.b16 %v412
    %v1308 = vunpack.c.l.b16 %v413
    %v1309 = vunpack.c.h.b16 %v413
    %v1310 = vpack.c.b16 %v740, %v734
    %v1311 = vpack.c.b16 %v741, %v735
    %v1312 = vpack.c.b16 %v742, %v736
    %v1313 = vpack.c.b16 %v743, %v737
    %v1314 = vpack.c.b16 %v744, %v738
    %v1315 = vpack.c.b16 %v745, %v739
    %v1316 = vpack.c.b16 %v752, %v746
    %v1317 = vpack.c.b16 %v753, %v747
    %v1318 = vpack.c.b16 %v754, %v748
    %v1319 = vpack.c.b16 %v755, %v749
    %v1320 = vpack.c.b16 %v756, %v750
    %v1321 = vpack.c.b16 %v757, %v751
    %v1322 = vpack.c.b16 %v764, %v758
    %v1323 = vpack.c.b16 %v765, %v759
    %v1324 = vpack.c.b16 %v766, %v760
    %v1325 = vpack.c.b16 %v767, %v761
    %v1326 = vpack.c.b16 %v768, %v762
    %v1327 = vpack.c.b16 %v769, %v763
    %v1328 = vpack.c.b16 %v776, %v770
    %v1329 = vpack.c.b16 %v777, %v771
    %v1330 = vpack.c.b16 %v778, %v772
    %v1331 = vpack.c.b16 %v779, %v773
    %v1332 = vpack.c.b16 %v780, %v774
    %v1333 = vpack.c.b16 %v781, %v775
    %v1334 = vpack.c.b16 %v788, %v782
    %v1335 = vpack.c.b16 %v789, %v783
    %v1336 = vpack.c.b16 %v790, %v784
    %v1337 = vpack.c.b16 %v791, %v785
    %v1338 = vpack.c.b16 %v792, %v786
    %v1339 = vpack.c.b16 %v793, %v787
    %v1340 = vpack.c.b16 %v800, %v794
    %v1341 = vpack.c.b16 %v801, %v795
    %v1342 = vpack.c.b16 %v802, %v796
    %v1343 = vpack.c.b16 %v803, %v797
    %v1344 = vpack.c.b16 %v804, %v798
    %v1345 = vpack.c.b16 %v805, %v799
    %v1346 = vpack.c.b16 %v812, %v806
    %v1347 = vpack.c.b16 %v813, %v807
    %v1348 = vpack.c.b16 %v814, %v808
    %v1349 = vpack.c.b16 %v815, %v809
    %v1350 = vpack.c.b16 %v816, %v810
    %v1351 = vpack.c.b16 %v817, %v811
    %v1352 = vpack.c.b16 %v824, %v818
    %v1353 = vpack.c.b16 %v825, %v819
    %v1354 = vpack.c.b16 %v826, %v820
    %v1355 = vpack.c.b16 %v827, %v821
    %v1356 = vpack.c.b16 %v828, %v822
    %v1357 = vpack.c.b16 %v829, %v823
    %v1358 = vpack.c.b16 %v836, %v830
    %v1359 = vpack.c.b16 %v837, %v831
    %v1360 = vpack.c.b16 %v838, %v832
    %v1361 = vpack.c.b16 %v839, %v833
    %v1362 = vpack.c.b16 %v840, %v834
    %v1363 = vpack.c.b16 %v841, %v835
    %v1364 = vpack.c.b16 %v848, %v842
    %v1365 = vpack.c.b16 %v849, %v843
    %v1366 = vpack.c.b16 %v850, %v844
    %v1367 = vpack.c.b16 %v851, %v845
    %v1368 = vpack.c.b16 %v852, %v846
    %v1369 = vpack.c.b16 %v853, %v847
    %v1370 = vpack.c.b16 %v860, %v854
    %v1371 = vpack.c.b16 %v861, %v855
    %v1372 = vpack.c.b16 %v862, %v856
    %v1373 = vpack.c.b16 %v863, %v857
    %v1374 = vpack.c.b16 %v864, %v858
    %v1375 = vpack.c.b16 %v865, %v859
    %v1376 = vpack.c.b16 %v872, %v866
    %v1377 = vpack.c.b16 %v873, %v867
    %v1378 = vpack.c.b16 %v874, %v868
    %v1379 = vpack.c.b16 %v875, %v869
    %v1380 = vpack.c.b16 %v876, %v870
    %v1381 = vpack.c.b16 %v877, %v871
    %v1382 = vpack.c.b16 %v884, %v878
    %v1383 = vpack.c.b16 %v885, %v879
    %v1384 = vpack.c.b16 %v886, %v880
    %v1385 = vpack.c.b16 %v887, %v881
    %v1386 = vpack.c.b16 %v888, %v882
    %v1387 = vpack.c.b16 %v889, %v883
    %v1388 = vpack.c.b16 %v896, %v890
    %v1389 = vpack.c.b16 %v897, %v891
    %v1390 = vpack.c.b16 %v898, %v892
    %v1391 = vpack.c.b16 %v899, %v893
    %v1392 = vpack.c.b16 %v900, %v894
    %v1393 = vpack.c.b16 %v901, %v895
    %v1394 = vpack.c.b16 %v908, %v902
    %v1395 = vpack.c.b16 %v909, %v903
    %v1396 = vpack.c.b16 %v910, %v904
    %v1397 = vpack.c.b16 %v911, %v905
    %v1398 = vpack.c.b16 %v912, %v906
    %v1399 = vpack.c.b16 %v913, %v907
    %v1400 = vpack.c.b16 %v920, %v914
    %v1401 = vpack.c.b16 %v921, %v915
    %v1402 = vpack.c.b16 %v922, %v916
    %v1403 = vpack.c.b16 %v923, %v917
    %v1404 = vpack.c.b16 %v924, %v918
    %v1405 = vpack.c.b16 %v925, %v919
    %v1406 = vpack.c.b16 %v932, %v926
    %v1407 = vpack.c.b16 %v933, %v927
    %v1408 = vpack.c.b16 %v934, %v928
    %v1409 = vpack.c.b16 %v935, %v929
    %v1410 = vpack.c.b16 %v936, %v930
    %v1411 = vpack.c.b16 %v937, %v931
    %v1412 = vpack.c.b16 %v944, %v938
    %v1413 = vpack.c.b16 %v945, %v939
    %v1414 = vpack.c.b16 %v946, %v940
    %v1415 = vpack.c.b16 %v947, %v941
    %v1416 = vpack.c.b16 %v948, %v942
    %v1417 = vpack.c.b16 %v949, %v943
    %v1418 = vpack.c.b16 %v956, %v950
    %v1419 = vpack.c.b16 %v957, %v951
    %v1420 = vpack.c.b16 %v958, %v952
    %v1421 = vpack.c.b16 %v959, %v953
    %v1422 = vpack.c.b16 %v960, %v954
    %v1423 = vpack.c.b16 %v961, %v955
    %v1424 = vpack.c.b16 %v968, %v962
    %v1425 = vpack.c.b16 %v969, %v963
    %v1426 = vpack.c.b16 %v970, %v964
    %v1427 = vpack.c.b16 %v971, %v965
    %v1428 = vpack.c.b16 %v972, %v966
    %v1429 = vpack.c.b16 %v973, %v967
    %v1430 = vpack.c.b16 %v980, %v974
    %v1431 = vpack.c.b16 %v981, %v975
    %v1432 = vpack.c.b16 %v982, %v976
    %v1433 = vpack.c.b16 %v983, %v977
    %v1434 = vpack.c.b16 %v984, %v978
    %v1435 = vpack.c.b16 %v985, %v979
    %v1436 = vpack.c.b16 %v992, %v986
    %v1437 = vpack.c.b16 %v993, %v987
    %v1438 = vpack.c.b16 %v994, %v988
    %v1439 = vpack.c.b16 %v995, %v989
    %v1440 = vpack.c.b16 %v996, %v990
    %v1441 = vpack.c.b16 %v997, %v991
    %v1442 = vpack.c.b16 %v1004, %v998
    %v1443 = vpack.c.b16 %v1005, %v999
    %v1444 = vpack.c.b16 %v1006, %v1000
    %v1445 = vpack.c.b16 %v1007, %v1001
    %v1446 = vpack.c.b16 %v1008, %v1002
    %v1447 = vpack.c.b16 %v1009, %v1003
    %v1448 = vpack.c.b16 %v1016, %v1010
    %v1449 = vpack.c.b16 %v1017, %v1011
    %v1450 = vpack.c.b16 %v1018, %v1012
    %v1451 = vpack.c.b16 %v1019, %v1013
    %v1452 = vpack.c.b16 %v1020, %v1014
    %v1453 = vpack.c.b16 %v1021, %v1015
    %v1454 = vpack.c.b16 %v1028, %v1022
    %v1455 = vpack.c.b16 %v1029, %v1023
    %v1456 = vpack.c.b16 %v1030, %v1024
    %v1457 = vpack.c.b16 %v1031, %v1025
    %v1458 = vpack.c.b16 %v1032, %v1026
    %v1459 = vpack.c.b16 %v1033, %v1027
    %v1460 = vpack.c.b16 %v1040, %v1034
    %v1461 = vpack.c.b16 %v1041, %v1035
    %v1462 = vpack.c.b16 %v1042, %v1036
    %v1463 = vpack.c.b16 %v1043, %v1037
    %v1464 = vpack.c.b16 %v1044, %v1038
    %v1465 = vpack.c.b16 %v1045, %v1039
    %v1466 = vpack.c.b16 %v1052, %v1046
    %v1467 = vpack.c.b16 %v1053, %v1047
    %v1468 = vpack.c.b16 %v1054, %v1048
    %v1469 = vpack.c.b16 %v1055, %v1049
    %v1470 = vpack.c.b16 %v1056, %v1050
    %v1471 = vpack.c.b16 %v1057, %v1051
    %v1472 = vpack.c.b16 %v1064, %v1058
    %v1473 = vpack.c.b16 %v1065, %v1059
    %v1474 = vpack.c.b16 %v1066, %v1060
    %v1475 = vpack.c.b16 %v1067, %v1061
    %v1476 = vpack.c.b16 %v1068, %v1062
    %v1477 = vpack.c.b16 %v1069, %v1063
    %v1478 = vpack.c.b16 %v1076, %v1070
    %v1479 = vpack.c.b16 %v1077, %v1071
    %v1480 = vpack.c.b16 %v1078, %v1072
    %v1481 = vpack.c.b16 %v1079, %v1073
    %v1482 = vpack.c.b16 %v1080, %v1074
    %v1483 = vpack.c.b16 %v1081, %v1075
    %v1484 = vpack.c.b16 %v1088, %v1082
    %v1485 = vpack.c.b16 %v1089, %v1083
    %v1486 = vpack.c.b16 %v1090, %v1084
    %v1487 = vpack.c.b16 %v1091, %v1085
    %v1488 = vpack.c.b16 %v1092, %v1086
    %v1489 = vpack.c.b16 %v1093, %v1087
    %v1490 = vpack.c.b16 %v1100, %v1094
    %v1491 = vpack.c.b16 %v1101, %v1095
    %v1492 = vpack.c.b16 %v1102, %v1096
    %v1493 = vpack.c.b16 %v1103, %v1097
    %v1494 = vpack.c.b16 %v1104, %v1098
    %v1495 = vpack.c.b16 %v1105, %v1099
    %v1496 = vpack.c.b16 %v1112, %v1106
    %v1497 = vpack.c.b16 %v1113, %v1107
    %v1498 = vpack.c.b16 %v1114, %v1108
    %v1499 = vpack.c.b16 %v1115, %v1109
    %v1500 = vpack.c.b16 %v1116, %v1110
    %v1501 = vpack.c.b16 %v1117, %v1111
    %v1502 = vpack.c.b16 %v1124, %v1118
    %v1503 = vpack.c.b16 %v1125, %v1119
    %v1504 = vpack.c.b16 %v1126, %v1120
    %v1505 = vpack.c.b16 %v1127, %v1121
    %v1506 = vpack.c.b16 %v1128, %v1122
    %v1507 = vpack.c.b16 %v1129, %v1123
    %v1508 = vpack.c.b16 %v1136, %v1130
    %v1509 = vpack.c.b16 %v1137, %v1131
    %v1510 = vpack.c.b16 %v1138, %v1132
    %v1511 = vpack.c.b16 %v1139, %v1133
    %v1512 = vpack.c.b16 %v1140, %v1134
    %v1513 = vpack.c.b16 %v1141, %v1135
    %v1514 = vpack.c.b16 %v1148, %v1142
    %v1515 = vpack.c.b16 %v1149, %v1143
    %v1516 = vpack.c.b16 %v1150, %v1144
    %v1517 = vpack.c.b16 %v1151, %v1145
    %v1518 = vpack.c.b16 %v1152, %v1146
    %v1519 = vpack.c.b16 %v1153, %v1147
    %v1520 = vpack.c.b16 %v1160, %v1154
    %v1521 = vpack.c.b16 %v1161, %v1155
    %v1522 = vpack.c.b16 %v1162, %v1156
    %v1523 = vpack.c.b16 %v1163, %v1157
    %v1524 = vpack.c.b16 %v1164, %v1158
    %v1525 = vpack.c.b16 %v1165, %v1159
    %v1526 = vpack.c.b16 %v1172, %v1166
    %v1527 = vpack.c.b16 %v1173, %v1167
    %v1528 = vpack.c.b16 %v1174, %v1168
    %v1529 = vpack.c.b16 %v1175, %v1169
    %v1530 = vpack.c.b16 %v1176, %v1170
    %v1531 = vpack.c.b16 %v1177, %v1171
    %v1532 = vpack.c.b16 %v1184, %v1178
    %v1533 = vpack.c.b16 %v1185, %v1179
    %v1534 = vpack.c.b16 %v1186, %v1180
    %v1535 = vpack.c.b16 %v1187, %v1181
    %v1536 = vpack.c.b16 %v1188, %v1182
    %v1537 = vpack.c.b16 %v1189, %v1183
    %v1538 = vpack.c.b16 %v1196, %v1190
    %v1539 = vpack.c.b16 %v1197, %v1191
    %v1540 = vpack.c.b16 %v1198, %v1192
    %v1541 = vpack.c.b16 %v1199, %v1193
    %v1542 = vpack.c.b16 %v1200, %v1194
    %v1543 = vpack.c.b16 %v1201, %v1195
    %v1544 = vpack.c.b16 %v1208, %v1202
    %v1545 = vpack.c.b16 %v1209, %v1203
    %v1546 = vpack.c.b16 %v1210, %v1204
    %v1547 = vpack.c.b16 %v1211, %v1205
    %v1548 = vpack.c.b16 %v1212, %v1206
    %v1549 = vpack.c.b16 %v1213, %v1207
    %v1550 = vpack.c.b16 %v1220, %v1214
    %v1551 = vpack.c.b16 %v1221, %v1215
    %v1552 = vpack.c.b16 %v1222, %v1216
    %v1553 = vpack.c.b16 %v1223, %v1217
    %v1554 = vpack.c.b16 %v1224, %v1218
    %v1555 = vpack.c.b16 %v1225, %v1219
    %v1556 = vpack.c.b16 %v1232, %v1226
    %v1557 = vpack.c.b16 %v1233, %v1227
    %v1558 = vpack.c.b16 %v1234, %v1228
    %v1559 = vpack.c.b16 %v1235, %v1229
    %v1560 = vpack.c.b16 %v1236, %v1230
    %v1561 = vpack.c.b16 %v1237, %v1231
    %v1562 = vpack.c.b16 %v1244, %v1238
    %v1563 = vpack.c.b16 %v1245, %v1239
    %v1564 = vpack.c.b16 %v1246, %v1240
    %v1565 = vpack.c.b16 %v1247, %v1241
    %v1566 = vpack.c.b16 %v1248, %v1242
    %v1567 = vpack.c.b16 %v1249, %v1243
    %v1568 = vpack.c.b16 %v1256, %v1250
    %v1569 = vpack.c.b16 %v1257, %v1251
    %v1570 = vpack.c.b16 %v1258, %v1252
    %v1571 = vpack.c.b16 %v1259, %v1253
    %v1572 = vpack.c.b16 %v1260, %v1254
    %v1573 = vpack.c.b16 %v1261, %v1255
    %v1574 = vpack.c.b16 %v1268, %v1262
    %v1575 = vpack.c.b16 %v1269, %v1263
    %v1576 = vpack.c.b16 %v1270, %v1264
    %v1577 = vpack.c.b16 %v1271, %v1265
    %v1578 = vpack.c.b16 %v1272, %v1266
    %v1579 = vpack.c.b16 %v1273, %v1267
    %v1580 = vpack.c.b16 %v1280, %v1274
    %v1581 = vpack.c.b16 %v1281, %v1275
    %v1582 = vpack.c.b16 %v1282, %v1276
    %v1583 = vpack.c.b16 %v1283, %v1277
    %v1584 = vpack.c.b16 %v1284, %v1278
    %v1585 = vpack.c.b16 %v1285, %v1279
    %v1586 = vpack.c.b16 %v1292, %v1286
    %v1587 = vpack.c.b16 %v1293, %v1287
    %v1588 = vpack.c.b16 %v1294, %v1288
    %v1589 = vpack.c.b16 %v1295, %v1289
    %v1590 = vpack.c.b16 %v1296, %v1290
    %v1591 = vpack.c.b16 %v1297, %v1291
    %v1592 = vpack.c.b16 %v1304, %v1298
    %v1593 = vpack.c.b16 %v1305, %v1299
    %v1594 = vpack.c.b16 %v1306, %v1300
    %v1595 = vpack.c.b16 %v1307, %v1301
    %v1596 = vpack.c.b16 %v1308, %v1302
    %v1597 = vpack.c.b16 %v1309, %v1303
    %1886 = vmatprep.subr.bf16.mxu0 %v1353
    %1887 = vmatpush1.bf16.msra.mxu0 %v1352
    %1888 = vmatprep.subr.bf16.mxu0 %v1347
    %1889 = vmatpush1.bf16.msra.mxu0 %v1346
    %1890 = vmatprep.subr.bf16.mxu0 %v1341
    %1891 = vmatpush1.bf16.msra.mxu0 %v1340
    %1892 = vmatprep.subr.bf16.mxu0 %v1335
    %1893 = vmatpush1.bf16.msra.mxu0 %v1334
    %1894 = vmatprep.subr.bf16.mxu0 %v1329
    %1895 = vmatpush1.bf16.msra.mxu0 %v1328
    %1896 = vmatprep.subr.bf16.mxu0 %v1323
    %1897 = vmatpush1.bf16.msra.mxu0 %v1322
    %1898 = vmatprep.subr.bf16.mxu0 %v1317
    %1899 = vmatpush1.bf16.msra.mxu0 %v1316
    %1900 = vmatprep.subr.bf16.mxu0 %v1311
    %1901 = vmatpush1.bf16.msra.mxu0 %v1310
    %1902 = vmatprep.subr.bf16.mxu0 %v1401
    %1903 = vmatpush2.bf16.msra.mxu0 %v1400
    %1904 = vmatprep.subr.bf16.mxu0 %v1395
    %1905 = vmatpush2.bf16.msra.mxu0 %v1394
    %1906 = vmatprep.subr.bf16.mxu0 %v1389
    %1907 = vmatpush2.bf16.msra.mxu0 %v1388
    %1908 = vmatprep.subr.bf16.mxu0 %v1383
    %1909 = vmatpush2.bf16.msra.mxu0 %v1382
    %1910 = vmatprep.subr.bf16.mxu0 %v1377
    %1911 = vmatpush2.bf16.msra.mxu0 %v1376
    %1912 = vmatprep.subr.bf16.mxu0 %v1371
    %1913 = vmatpush2.bf16.msra.mxu0 %v1370
    %1914 = vmatprep.subr.bf16.mxu0 %v1365
    %1915 = vmatpush2.bf16.msra.mxu0 %v1364
    %1916 = vmatprep.subr.bf16.mxu0 %v1359
    %1917 = vmatpush2.bf16.msra.mxu0 %v1358
    %1918 = vmatprep.mubr.bf16.mxu0 %v121
    %1919 = vmatmul.mubr.bf16.gmra.mxu0 %v120
    %v1920 = vpop.f32.mrf.mxu0
    %v1921 = vadd.f32 %v419, %v1920
    %v1922 = vpop.f32.mrf.mxu0
    %v1923 = vadd.f32 %v423, %v1922
    %v1924 = vpop.f32.mrf.mxu0
    %v1925 = vpop.f32.mrf.mxu0
    %1926 = vdwg.mxu0
    %1927 = vmatprep.subr.bf16.mxu0 %v1449
    %1928 = vmatpush1.bf16.msra.mxu0 %v1448
    %1929 = vmatprep.subr.bf16.mxu0 %v1443
    %1930 = vmatpush1.bf16.msra.mxu0 %v1442
    %1931 = vmatprep.subr.bf16.mxu0 %v1437
    %1932 = vmatpush1.bf16.msra.mxu0 %v1436
    %1933 = vmatprep.subr.bf16.mxu0 %v1431
    %1934 = vmatpush1.bf16.msra.mxu0 %v1430
    %1935 = vmatprep.subr.bf16.mxu0 %v1425
    %1936 = vmatpush1.bf16.msra.mxu0 %v1424
    %1937 = vmatprep.subr.bf16.mxu0 %v1419
    %1938 = vmatpush1.bf16.msra.mxu0 %v1418
    %1939 = vmatprep.subr.bf16.mxu0 %v1413
    %1940 = vmatpush1.bf16.msra.mxu0 %v1412
    %1941 = vmatprep.subr.bf16.mxu0 %v1407
    %1942 = vmatpush1.bf16.msra.mxu0 %v1406
    %1943 = vmatprep.subr.bf16.mxu0 %v1497
    %1944 = vmatpush2.bf16.msra.mxu0 %v1496
    %1945 = vmatprep.subr.bf16.mxu0 %v1491
    %1946 = vmatpush2.bf16.msra.mxu0 %v1490
    %1947 = vmatprep.subr.bf16.mxu0 %v1485
    %1948 = vmatpush2.bf16.msra.mxu0 %v1484
    %1949 = vmatprep.subr.bf16.mxu0 %v1479
    %1950 = vmatpush2.bf16.msra.mxu0 %v1478
    %1951 = vmatprep.subr.bf16.mxu0 %v1473
    %1952 = vmatpush2.bf16.msra.mxu0 %v1472
    %1953 = vmatprep.subr.bf16.mxu0 %v1467
    %1954 = vmatpush2.bf16.msra.mxu0 %v1466
    %1955 = vmatprep.subr.bf16.mxu0 %v1461
    %1956 = vmatpush2.bf16.msra.mxu0 %v1460
    %1957 = vmatprep.subr.bf16.mxu0 %v1455
    %1958 = vmatpush2.bf16.msra.mxu0 %v1454
    %1959 = vmatprep.mubr.bf16.mxu0 %v123
    %1960 = vmatmul.mubr.bf16.gmra.mxu0 %v122
    %v1961 = vpop.f32.mrf.mxu0
    %v1962 = vadd.f32 %v1921, %v1961
    %v1963 = vpop.f32.mrf.mxu0
    %v1964 = vadd.f32 %v1923, %v1963
    %v1965 = vpop.f32.mrf.mxu0
    %v1966 = vpop.f32.mrf.mxu0
    %1967 = vdwg.mxu0
    %1968 = vmatprep.subr.bf16.mxu0 %v1545
    %1969 = vmatpush1.bf16.msra.mxu0 %v1544
    %1970 = vmatprep.subr.bf16.mxu0 %v1539
    %1971 = vmatpush1.bf16.msra.mxu0 %v1538
    %1972 = vmatprep.subr.bf16.mxu0 %v1533
    %1973 = vmatpush1.bf16.msra.mxu0 %v1532
    %1974 = vmatprep.subr.bf16.mxu0 %v1527
    %1975 = vmatpush1.bf16.msra.mxu0 %v1526
    %1976 = vmatprep.subr.bf16.mxu0 %v1521
    %1977 = vmatpush1.bf16.msra.mxu0 %v1520
    %1978 = vmatprep.subr.bf16.mxu0 %v1515
    %1979 = vmatpush1.bf16.msra.mxu0 %v1514
    %1980 = vmatprep.subr.bf16.mxu0 %v1509
    %1981 = vmatpush1.bf16.msra.mxu0 %v1508
    %1982 = vmatprep.subr.bf16.mxu0 %v1503
    %1983 = vmatpush1.bf16.msra.mxu0 %v1502
    %1984 = vmatprep.subr.bf16.mxu0 %v1593
    %1985 = vmatpush2.bf16.msra.mxu0 %v1592
    %1986 = vmatprep.subr.bf16.mxu0 %v1587
    %1987 = vmatpush2.bf16.msra.mxu0 %v1586
    %1988 = vmatprep.subr.bf16.mxu0 %v1581
    %1989 = vmatpush2.bf16.msra.mxu0 %v1580
    %1990 = vmatprep.subr.bf16.mxu0 %v1575
    %1991 = vmatpush2.bf16.msra.mxu0 %v1574
    %1992 = vmatprep.subr.bf16.mxu0 %v1569
    %1993 = vmatpush2.bf16.msra.mxu0 %v1568
    %1994 = vmatprep.subr.bf16.mxu0 %v1563
    %1995 = vmatpush2.bf16.msra.mxu0 %v1562
    %1996 = vmatprep.subr.bf16.mxu0 %v1557
    %1997 = vmatpush2.bf16.msra.mxu0 %v1556
    %1998 = vmatprep.subr.bf16.mxu0 %v1551
    %1999 = vmatpush2.bf16.msra.mxu0 %v1550
    %2000 = vmatprep.mubr.bf16.mxu0 %v125
    %2001 = vmatmul.mubr.bf16.gmra.mxu0 %v124
    %v2002 = vpop.f32.mrf.mxu0
    %v2003 = vadd.f32 %v1962, %v2002
    %v2004 = vpop.f32.mrf.mxu0
    %v2005 = vadd.f32 %v1964, %v2004
    %v2006 = vpop.f32.mrf.mxu0
    %v2007 = vpop.f32.mrf.mxu0
    %2008 = vdwg.mxu0
    %2009 = vmatprep.subr.bf16.mxu0 %v1355
    %2010 = vmatpush1.bf16.msra.mxu0 %v1354
    %2011 = vmatprep.subr.bf16.mxu0 %v1349
    %2012 = vmatpush1.bf16.msra.mxu0 %v1348
    %2013 = vmatprep.subr.bf16.mxu0 %v1343
    %2014 = vmatpush1.bf16.msra.mxu0 %v1342
    %2015 = vmatprep.subr.bf16.mxu0 %v1337
    %2016 = vmatpush1.bf16.msra.mxu0 %v1336
    %2017 = vmatprep.subr.bf16.mxu0 %v1331
    %2018 = vmatpush1.bf16.msra.mxu0 %v1330
    %2019 = vmatprep.subr.bf16.mxu0 %v1325
    %2020 = vmatpush1.bf16.msra.mxu0 %v1324
    %2021 = vmatprep.subr.bf16.mxu0 %v1319
    %2022 = vmatpush1.bf16.msra.mxu0 %v1318
    %2023 = vmatprep.subr.bf16.mxu0 %v1313
    %2024 = vmatpush1.bf16.msra.mxu0 %v1312
    %2025 = vmatprep.subr.bf16.mxu0 %v1403
    %2026 = vmatpush2.bf16.msra.mxu0 %v1402
    %2027 = vmatprep.subr.bf16.mxu0 %v1397
    %2028 = vmatpush2.bf16.msra.mxu0 %v1396
    %2029 = vmatprep.subr.bf16.mxu0 %v1391
    %2030 = vmatpush2.bf16.msra.mxu0 %v1390
    %2031 = vmatprep.subr.bf16.mxu0 %v1385
    %2032 = vmatpush2.bf16.msra.mxu0 %v1384
    %2033 = vmatprep.subr.bf16.mxu0 %v1379
    %2034 = vmatpush2.bf16.msra.mxu0 %v1378
    %2035 = vmatprep.subr.bf16.mxu0 %v1373
    %2036 = vmatpush2.bf16.msra.mxu0 %v1372
    %2037 = vmatprep.subr.bf16.mxu0 %v1367
    %2038 = vmatpush2.bf16.msra.mxu0 %v1366
    %2039 = vmatprep.subr.bf16.mxu0 %v1361
    %2040 = vmatpush2.bf16.msra.mxu0 %v1360
    %2041 = vmatprep.mubr.bf16.mxu0 %v121
    %2042 = vmatmul.mubr.bf16.gmra.mxu0 %v120
    %v2043 = vpop.f32.mrf.mxu0
    %v2044 = vadd.f32 %v427, %v2043
    %v2045 = vpop.f32.mrf.mxu0
    %v2046 = vadd.f32 %v431, %v2045
    %v2047 = vpop.f32.mrf.mxu0
    %v2048 = vpop.f32.mrf.mxu0
    %2049 = vdwg.mxu0
    %2050 = vmatprep.subr.bf16.mxu0 %v1451
    %2051 = vmatpush1.bf16.msra.mxu0 %v1450
    %2052 = vmatprep.subr.bf16.mxu0 %v1445
    %2053 = vmatpush1.bf16.msra.mxu0 %v1444
    %2054 = vmatprep.subr.bf16.mxu0 %v1439
    %2055 = vmatpush1.bf16.msra.mxu0 %v1438
    %2056 = vmatprep.subr.bf16.mxu0 %v1433
    %2057 = vmatpush1.bf16.msra.mxu0 %v1432
    %2058 = vmatprep.subr.bf16.mxu0 %v1427
    %2059 = vmatpush1.bf16.msra.mxu0 %v1426
    %2060 = vmatprep.subr.bf16.mxu0 %v1421
    %2061 = vmatpush1.bf16.msra.mxu0 %v1420
    %2062 = vmatprep.subr.bf16.mxu0 %v1415
    %2063 = vmatpush1.bf16.msra.mxu0 %v1414
    %2064 = vmatprep.subr.bf16.mxu0 %v1409
    %2065 = vmatpush1.bf16.msra.mxu0 %v1408
    %2066 = vmatprep.subr.bf16.mxu0 %v1499
    %2067 = vmatpush2.bf16.msra.mxu0 %v1498
    %2068 = vmatprep.subr.bf16.mxu0 %v1493
    %2069 = vmatpush2.bf16.msra.mxu0 %v1492
    %2070 = vmatprep.subr.bf16.mxu0 %v1487
    %2071 = vmatpush2.bf16.msra.mxu0 %v1486
    %2072 = vmatprep.subr.bf16.mxu0 %v1481
    %2073 = vmatpush2.bf16.msra.mxu0 %v1480
    %2074 = vmatprep.subr.bf16.mxu0 %v1475
    %2075 = vmatpush2.bf16.msra.mxu0 %v1474
    %2076 = vmatprep.subr.bf16.mxu0 %v1469
    %2077 = vmatpush2.bf16.msra.mxu0 %v1468
    %2078 = vmatprep.subr.bf16.mxu0 %v1463
    %2079 = vmatpush2.bf16.msra.mxu0 %v1462
    %2080 = vmatprep.subr.bf16.mxu0 %v1457
    %2081 = vmatpush2.bf16.msra.mxu0 %v1456
    %2082 = vmatprep.mubr.bf16.mxu0 %v123
    %2083 = vmatmul.mubr.bf16.gmra.mxu0 %v122
    %v2084 = vpop.f32.mrf.mxu0
    %v2085 = vadd.f32 %v2044, %v2084
    %v2086 = vpop.f32.mrf.mxu0
    %v2087 = vadd.f32 %v2046, %v2086
    %v2088 = vpop.f32.mrf.mxu0
    %v2089 = vpop.f32.mrf.mxu0
    %2090 = vdwg.mxu0
    %2091 = vmatprep.subr.bf16.mxu0 %v1547
    %2092 = vmatpush1.bf16.msra.mxu0 %v1546
    %2093 = vmatprep.subr.bf16.mxu0 %v1541
    %2094 = vmatpush1.bf16.msra.mxu0 %v1540
    %2095 = vmatprep.subr.bf16.mxu0 %v1535
    %2096 = vmatpush1.bf16.msra.mxu0 %v1534
    %2097 = vmatprep.subr.bf16.mxu0 %v1529
    %2098 = vmatpush1.bf16.msra.mxu0 %v1528
    %2099 = vmatprep.subr.bf16.mxu0 %v1523
    %2100 = vmatpush1.bf16.msra.mxu0 %v1522
    %2101 = vmatprep.subr.bf16.mxu0 %v1517
    %2102 = vmatpush1.bf16.msra.mxu0 %v1516
    %2103 = vmatprep.subr.bf16.mxu0 %v1511
    %2104 = vmatpush1.bf16.msra.mxu0 %v1510
    %2105 = vmatprep.subr.bf16.mxu0 %v1505
    %2106 = vmatpush1.bf16.msra.mxu0 %v1504
    %2107 = vmatprep.subr.bf16.mxu0 %v1595
    %2108 = vmatpush2.bf16.msra.mxu0 %v1594
    %2109 = vmatprep.subr.bf16.mxu0 %v1589
    %2110 = vmatpush2.bf16.msra.mxu0 %v1588
    %2111 = vmatprep.subr.bf16.mxu0 %v1583
    %2112 = vmatpush2.bf16.msra.mxu0 %v1582
    %2113 = vmatprep.subr.bf16.mxu0 %v1577
    %2114 = vmatpush2.bf16.msra.mxu0 %v1576
    %2115 = vmatprep.subr.bf16.mxu0 %v1571
    %2116 = vmatpush2.bf16.msra.mxu0 %v1570
    %2117 = vmatprep.subr.bf16.mxu0 %v1565
    %2118 = vmatpush2.bf16.msra.mxu0 %v1564
    %2119 = vmatprep.subr.bf16.mxu0 %v1559
    %2120 = vmatpush2.bf16.msra.mxu0 %v1558
    %2121 = vmatprep.subr.bf16.mxu0 %v1553
    %2122 = vmatpush2.bf16.msra.mxu0 %v1552
    %2123 = vmatprep.mubr.bf16.mxu0 %v125
    %2124 = vmatmul.mubr.bf16.gmra.mxu0 %v124
    %v2125 = vpop.f32.mrf.mxu0
    %v2126 = vadd.f32 %v2085, %v2125
    %v2127 = vpop.f32.mrf.mxu0
    %v2128 = vadd.f32 %v2087, %v2127
    %v2129 = vpop.f32.mrf.mxu0
    %v2130 = vpop.f32.mrf.mxu0
    %2131 = vdwg.mxu0
    %2132 = vmatprep.subr.bf16.mxu0 %v1357
    %2133 = vmatpush1.bf16.msra.mxu0 %v1356
    %2134 = vmatprep.subr.bf16.mxu0 %v1351
    %2135 = vmatpush1.bf16.msra.mxu0 %v1350
    %2136 = vmatprep.subr.bf16.mxu0 %v1345
    %2137 = vmatpush1.bf16.msra.mxu0 %v1344
    %2138 = vmatprep.subr.bf16.mxu0 %v1339
    %2139 = vmatpush1.bf16.msra.mxu0 %v1338
    %2140 = vmatprep.subr.bf16.mxu0 %v1333
    %2141 = vmatpush1.bf16.msra.mxu0 %v1332
    %2142 = vmatprep.subr.bf16.mxu0 %v1327
    %2143 = vmatpush1.bf16.msra.mxu0 %v1326
    %2144 = vmatprep.subr.bf16.mxu0 %v1321
    %2145 = vmatpush1.bf16.msra.mxu0 %v1320
    %2146 = vmatprep.subr.bf16.mxu0 %v1315
    %2147 = vmatpush1.bf16.msra.mxu0 %v1314
    %2148 = vmatprep.subr.bf16.mxu0 %v1405
    %2149 = vmatpush2.bf16.msra.mxu0 %v1404
    %2150 = vmatprep.subr.bf16.mxu0 %v1399
    %2151 = vmatpush2.bf16.msra.mxu0 %v1398
    %2152 = vmatprep.subr.bf16.mxu0 %v1393
    %2153 = vmatpush2.bf16.msra.mxu0 %v1392
    %2154 = vmatprep.subr.bf16.mxu0 %v1387
    %2155 = vmatpush2.bf16.msra.mxu0 %v1386
    %2156 = vmatprep.subr.bf16.mxu0 %v1381
    %2157 = vmatpush2.bf16.msra.mxu0 %v1380
    %2158 = vmatprep.subr.bf16.mxu0 %v1375
    %2159 = vmatpush2.bf16.msra.mxu0 %v1374
    %2160 = vmatprep.subr.bf16.mxu0 %v1369
    %2161 = vmatpush2.bf16.msra.mxu0 %v1368
    %2162 = vmatprep.subr.bf16.mxu0 %v1363
    %2163 = vmatpush2.bf16.msra.mxu0 %v1362
    %2164 = vmatprep.mubr.bf16.mxu0 %v121
    %2165 = vmatmul.mubr.bf16.gmra.mxu0 %v120
    %v2166 = vpop.f32.mrf.mxu0
    %v2167 = vadd.f32 %v435, %v2166
    %v2168 = vpop.f32.mrf.mxu0
    %v2169 = vadd.f32 %v439, %v2168
    %v2170 = vpop.f32.mrf.mxu0
    %v2171 = vpop.f32.mrf.mxu0
    %2172 = vdwg.mxu0
    %2173 = vmatprep.subr.bf16.mxu0 %v1453
    %2174 = vmatpush1.bf16.msra.mxu0 %v1452
    %2175 = vmatprep.subr.bf16.mxu0 %v1447
    %2176 = vmatpush1.bf16.msra.mxu0 %v1446
    %2177 = vmatprep.subr.bf16.mxu0 %v1441
    %2178 = vmatpush1.bf16.msra.mxu0 %v1440
    %2179 = vmatprep.subr.bf16.mxu0 %v1435
    %2180 = vmatpush1.bf16.msra.mxu0 %v1434
    %2181 = vmatprep.subr.bf16.mxu0 %v1429
    %2182 = vmatpush1.bf16.msra.mxu0 %v1428
    %2183 = vmatprep.subr.bf16.mxu0 %v1423
    %2184 = vmatpush1.bf16.msra.mxu0 %v1422
    %2185 = vmatprep.subr.bf16.mxu0 %v1417
    %2186 = vmatpush1.bf16.msra.mxu0 %v1416
    %2187 = vmatprep.subr.bf16.mxu0 %v1411
    %2188 = vmatpush1.bf16.msra.mxu0 %v1410
    %2189 = vmatprep.subr.bf16.mxu0 %v1501
    %2190 = vmatpush2.bf16.msra.mxu0 %v1500
    %2191 = vmatprep.subr.bf16.mxu0 %v1495
    %2192 = vmatpush2.bf16.msra.mxu0 %v1494
    %2193 = vmatprep.subr.bf16.mxu0 %v1489
    %2194 = vmatpush2.bf16.msra.mxu0 %v1488
    %2195 = vmatprep.subr.bf16.mxu0 %v1483
    %2196 = vmatpush2.bf16.msra.mxu0 %v1482
    %2197 = vmatprep.subr.bf16.mxu0 %v1477
    %2198 = vmatpush2.bf16.msra.mxu0 %v1476
    %2199 = vmatprep.subr.bf16.mxu0 %v1471
    %2200 = vmatpush2.bf16.msra.mxu0 %v1470
    %2201 = vmatprep.subr.bf16.mxu0 %v1465
    %2202 = vmatpush2.bf16.msra.mxu0 %v1464
    %2203 = vmatprep.subr.bf16.mxu0 %v1459
    %2204 = vmatpush2.bf16.msra.mxu0 %v1458
    %2205 = vmatprep.mubr.bf16.mxu0 %v123
    %2206 = vmatmul.mubr.bf16.gmra.mxu0 %v122
    %v2207 = vpop.f32.mrf.mxu0
    %v2208 = vadd.f32 %v2167, %v2207
    %v2209 = vpop.f32.mrf.mxu0
    %v2210 = vadd.f32 %v2169, %v2209
    %v2211 = vpop.f32.mrf.mxu0
    %v2212 = vpop.f32.mrf.mxu0
    %2213 = vdwg.mxu0
    %2214 = vmatprep.subr.bf16.mxu0 %v1549
    %2215 = vmatpush1.bf16.msra.mxu0 %v1548
    %2216 = vmatprep.subr.bf16.mxu0 %v1543
    %2217 = vmatpush1.bf16.msra.mxu0 %v1542
    %2218 = vmatprep.subr.bf16.mxu0 %v1537
    %2219 = vmatpush1.bf16.msra.mxu0 %v1536
    %2220 = vmatprep.subr.bf16.mxu0 %v1531
    %2221 = vmatpush1.bf16.msra.mxu0 %v1530
    %2222 = vmatprep.subr.bf16.mxu0 %v1525
    %2223 = vmatpush1.bf16.msra.mxu0 %v1524
    %2224 = vmatprep.subr.bf16.mxu0 %v1519
    %2225 = vmatpush1.bf16.msra.mxu0 %v1518
    %2226 = vmatprep.subr.bf16.mxu0 %v1513
    %2227 = vmatpush1.bf16.msra.mxu0 %v1512
    %2228 = vmatprep.subr.bf16.mxu0 %v1507
    %2229 = vmatpush1.bf16.msra.mxu0 %v1506
    %2230 = vmatprep.subr.bf16.mxu0 %v1597
    %2231 = vmatpush2.bf16.msra.mxu0 %v1596
    %2232 = vmatprep.subr.bf16.mxu0 %v1591
    %2233 = vmatpush2.bf16.msra.mxu0 %v1590
    %2234 = vmatprep.subr.bf16.mxu0 %v1585
    %2235 = vmatpush2.bf16.msra.mxu0 %v1584
    %2236 = vmatprep.subr.bf16.mxu0 %v1579
    %2237 = vmatpush2.bf16.msra.mxu0 %v1578
    %2238 = vmatprep.subr.bf16.mxu0 %v1573
    %2239 = vmatpush2.bf16.msra.mxu0 %v1572
    %2240 = vmatprep.subr.bf16.mxu0 %v1567
    %2241 = vmatpush2.bf16.msra.mxu0 %v1566
    %2242 = vmatprep.subr.bf16.mxu0 %v1561
    %2243 = vmatpush2.bf16.msra.mxu0 %v1560
    %2244 = vmatprep.subr.bf16.mxu0 %v1555
    %2245 = vmatpush2.bf16.msra.mxu0 %v1554
    %2246 = vmatprep.mubr.bf16.mxu0 %v125
    %2247 = vmatmul.mubr.bf16.gmra.mxu0 %v124
    %v2248 = vpop.f32.mrf.mxu0
    %v2249 = vadd.f32 %v2208, %v2248
    %v2250 = vpop.f32.mrf.mxu0
    %v2251 = vadd.f32 %v2210, %v2250
    %v2252 = vpop.f32.mrf.mxu0
    %v2253 = vpop.f32.mrf.mxu0
    %2254 = vdwg.mxu0
    %vm2255 = vcmp.gt.f32.partialorder %v2003, 0.0
    %vm2256 = vcmp.gt.f32.partialorder %v2005, 0.0
    %vm2257 = vcmp.gt.f32.partialorder %v2126, 0.0
    %vm2258 = vcmp.gt.f32.partialorder %v2128, 0.0
    %vm2259 = vcmp.gt.f32.partialorder %v2249, 0.0
    %vm2260 = vcmp.gt.f32.partialorder %v2251, 0.0
    %v2261 = vmul.f32 %v2003, 0.01
    %v2262 = vmul.f32 %v2005, 0.01
    %v2263 = vmul.f32 %v2126, 0.01
    %v2264 = vmul.f32 %v2128, 0.01
    %v2265 = vmul.f32 %v2249, 0.01
    %v2266 = vmul.f32 %v2251, 0.01
    %v2267 = vsel %vm2255, %v2003, %v2261
    %v2268 = vsel %vm2256, %v2005, %v2262
    %v2269 = vsel %vm2257, %v2126, %v2263
    %v2270 = vsel %vm2258, %v2128, %v2264
    %v2271 = vsel %vm2259, %v2249, %v2265
    %v2272 = vsel %vm2260, %v2251, %v2266
    %v2273 = vpack.c.bf16 %v2267, %v2267
    %v2274 = vpack.c.bf16 %v2268, %v2268
    %v2275 = vpack.c.bf16 %v2269, %v2269
    %v2276 = vpack.c.bf16 %v2270, %v2270
    %v2277 = vpack.c.bf16 %v2271, %v2271
    %v2278 = vpack.c.bf16 %v2272, %v2272
    %v2279 = vld [vmem:[#allocation8] sm:$0xff]
    %v2280 = vld [vmem:[#allocation8 + $0x8] sm:$0xff]
    %v2281 = vld [vmem:[#allocation8 + $0x10] sm:$0xff]
    %v2282 = vld [vmem:[#allocation8 + $0x18] sm:$0xff]
    %v2283 = vld [vmem:[#allocation8 + $0x20] sm:$0xff]
    %v2284 = vld [vmem:[#allocation8 + $0x28] sm:$0xff]
    %v2285 = vld [vmem:[#allocation8 + $0x30] sm:$0xff]
    %v2286 = vld [vmem:[#allocation8 + $0x38] sm:$0xff]
    %v2287 = vld [vmem:[#allocation8 + $0x40] sm:$0xff]
    %v2288 = vld [vmem:[#allocation8 + $0x48] sm:$0xff]
    %v2289 = vld [vmem:[#allocation8 + $0x50] sm:$0xff]
    %v2290 = vld [vmem:[#allocation8 + $0x58] sm:$0xff]
    %v2291 = vld [vmem:[#allocation8 + $0x60] sm:$0xff]
    %v2292 = vld [vmem:[#allocation8 + $0x68] sm:$0xff]
    %v2293 = vld [vmem:[#allocation8 + $0x70] sm:$0xff]
    %v2294 = vld [vmem:[#allocation8 + $0x78] sm:$0xff]
    %v2295 = vld [vmem:[#allocation8 + $0x80] sm:$0xff]
    %v2296 = vld [vmem:[#allocation8 + $0x88] sm:$0xff]
    %v2297 = vld [vmem:[#allocation8 + $0x90] sm:$0xff]
    %v2298 = vld [vmem:[#allocation8 + $0x98] sm:$0xff]
    %v2299 = vld [vmem:[#allocation8 + $0xa0] sm:$0xff]
    %v2300 = vld [vmem:[#allocation8 + $0xa8] sm:$0xff]
    %v2301 = vld [vmem:[#allocation8 + $0xb0] sm:$0xff]
    %v2302 = vld [vmem:[#allocation8 + $0xb8] sm:$0xff]
    %v2303 = vld [vmem:[#allocation8 + $0xc0] sm:$0xff]
    %v2304 = vld [vmem:[#allocation8 + $0xc8] sm:$0xff]
    %v2305 = vld [vmem:[#allocation8 + $0xd0] sm:$0xff]
    %v2306 = vld [vmem:[#allocation8 + $0xd8] sm:$0xff]
    %v2307 = vld [vmem:[#allocation8 + $0xe0] sm:$0xff]
    %v2308 = vld [vmem:[#allocation8 + $0xe8] sm:$0xff]
    %v2309 = vld [vmem:[#allocation8 + $0xf0] sm:$0xff]
    %v2310 = vld [vmem:[#allocation8 + $0xf8] sm:$0xff]
    %v2311 = vld [vmem:[#allocation8 + $0x100] sm:$0xff]
    %v2312 = vld [vmem:[#allocation8 + $0x108] sm:$0xff]
    %v2313 = vld [vmem:[#allocation8 + $0x110] sm:$0xff]
    %v2314 = vld [vmem:[#allocation8 + $0x118] sm:$0xff]
    %v2315 = vld [vmem:[#allocation8 + $0x120] sm:$0xff]
    %v2316 = vld [vmem:[#allocation8 + $0x128] sm:$0xff]
    %v2317 = vld [vmem:[#allocation8 + $0x130] sm:$0xff]
    %v2318 = vld [vmem:[#allocation8 + $0x138] sm:$0xff]
    %v2319 = vld [vmem:[#allocation8 + $0x140] sm:$0xff]
    %v2320 = vld [vmem:[#allocation8 + $0x148] sm:$0xff]
    %v2321 = vld [vmem:[#allocation8 + $0x150] sm:$0xff]
    %v2322 = vld [vmem:[#allocation8 + $0x158] sm:$0xff]
    %v2323 = vld [vmem:[#allocation8 + $0x160] sm:$0xff]
    %v2324 = vld [vmem:[#allocation8 + $0x168] sm:$0xff]
    %v2325 = vld [vmem:[#allocation8 + $0x170] sm:$0xff]
    %v2326 = vld [vmem:[#allocation8 + $0x178] sm:$0xff]
    %v2327 = vld [vmem:[#allocation8 + $0x180] sm:$0xff]
    %v2328 = vld [vmem:[#allocation8 + $0x188] sm:$0xff]
    %v2329 = vld [vmem:[#allocation8 + $0x190] sm:$0xff]
    %v2330 = vld [vmem:[#allocation8 + $0x198] sm:$0xff]
    %v2331 = vld [vmem:[#allocation8 + $0x1a0] sm:$0xff]
    %v2332 = vld [vmem:[#allocation8 + $0x1a8] sm:$0xff]
    %v2333 = vld [vmem:[#allocation8 + $0x1b0] sm:$0xff]
    %v2334 = vld [vmem:[#allocation8 + $0x1b8] sm:$0xff]
    %v2335 = vld [vmem:[#allocation8 + $0x1c0] sm:$0xff]
    %v2336 = vld [vmem:[#allocation8 + $0x1c8] sm:$0xff]
    %v2337 = vld [vmem:[#allocation8 + $0x1d0] sm:$0xff]
    %v2338 = vld [vmem:[#allocation8 + $0x1d8] sm:$0xff]
    %v2339 = vld [vmem:[#allocation8 + $0x1e0] sm:$0xff]
    %v2340 = vld [vmem:[#allocation8 + $0x1e8] sm:$0xff]
    %v2341 = vld [vmem:[#allocation8 + $0x1f0] sm:$0xff]
    %v2342 = vld [vmem:[#allocation8 + $0x1f8] sm:$0xff]
    %v2343 = vld [vmem:[#allocation8 + $0x200] sm:$0xff]
    %v2344 = vld [vmem:[#allocation8 + $0x208] sm:$0xff]
    %v2345 = vld [vmem:[#allocation8 + $0x210] sm:$0xff]
    %v2346 = vld [vmem:[#allocation8 + $0x218] sm:$0xff]
    %v2347 = vld [vmem:[#allocation8 + $0x220] sm:$0xff]
    %v2348 = vld [vmem:[#allocation8 + $0x228] sm:$0xff]
    %v2349 = vld [vmem:[#allocation8 + $0x230] sm:$0xff]
    %v2350 = vld [vmem:[#allocation8 + $0x238] sm:$0xff]
    %v2351 = vld [vmem:[#allocation8 + $0x240] sm:$0xff]
    %v2352 = vld [vmem:[#allocation8 + $0x248] sm:$0xff]
    %v2353 = vld [vmem:[#allocation8 + $0x250] sm:$0xff]
    %v2354 = vld [vmem:[#allocation8 + $0x258] sm:$0xff]
    %v2355 = vld [vmem:[#allocation8 + $0x260] sm:$0xff]
    %v2356 = vld [vmem:[#allocation8 + $0x268] sm:$0xff]
    %v2357 = vld [vmem:[#allocation8 + $0x270] sm:$0xff]
    %v2358 = vld [vmem:[#allocation8 + $0x278] sm:$0xff]
    %v2359 = vld [vmem:[#allocation8 + $0x280] sm:$0xff]
    %v2360 = vld [vmem:[#allocation8 + $0x288] sm:$0xff]
    %v2361 = vld [vmem:[#allocation8 + $0x290] sm:$0xff]
    %v2362 = vld [vmem:[#allocation8 + $0x298] sm:$0xff]
    %v2363 = vld [vmem:[#allocation8 + $0x2a0] sm:$0xff]
    %v2364 = vld [vmem:[#allocation8 + $0x2a8] sm:$0xff]
    %v2365 = vld [vmem:[#allocation8 + $0x2b0] sm:$0xff]
    %v2366 = vld [vmem:[#allocation8 + $0x2b8] sm:$0xff]
    %v2367 = vld [vmem:[#allocation8 + $0x2c0] sm:$0xff]
    %v2368 = vld [vmem:[#allocation8 + $0x2c8] sm:$0xff]
    %v2369 = vld [vmem:[#allocation8 + $0x2d0] sm:$0xff]
    %v2370 = vld [vmem:[#allocation8 + $0x2d8] sm:$0xff]
    %v2371 = vld [vmem:[#allocation8 + $0x2e0] sm:$0xff]
    %v2372 = vld [vmem:[#allocation8 + $0x2e8] sm:$0xff]
    %v2373 = vld [vmem:[#allocation8 + $0x2f0] sm:$0xff]
    %v2374 = vld [vmem:[#allocation8 + $0x2f8] sm:$0xff]
    %v2375 = vld [vmem:[#allocation8 + $0x300] sm:$0xff]
    %v2376 = vld [vmem:[#allocation8 + $0x308] sm:$0xff]
    %v2377 = vld [vmem:[#allocation8 + $0x310] sm:$0xff]
    %v2378 = vld [vmem:[#allocation8 + $0x318] sm:$0xff]
    %v2379 = vld [vmem:[#allocation8 + $0x320] sm:$0xff]
    %v2380 = vld [vmem:[#allocation8 + $0x328] sm:$0xff]
    %v2381 = vld [vmem:[#allocation8 + $0x330] sm:$0xff]
    %v2382 = vld [vmem:[#allocation8 + $0x338] sm:$0xff]
    %v2383 = vld [vmem:[#allocation8 + $0x340] sm:$0xff]
    %v2384 = vld [vmem:[#allocation8 + $0x348] sm:$0xff]
    %v2385 = vld [vmem:[#allocation8 + $0x350] sm:$0xff]
    %v2386 = vld [vmem:[#allocation8 + $0x358] sm:$0xff]
    %v2387 = vld [vmem:[#allocation8 + $0x360] sm:$0xff]
    %v2388 = vld [vmem:[#allocation8 + $0x368] sm:$0xff]
    %v2389 = vld [vmem:[#allocation8 + $0x370] sm:$0xff]
    %v2390 = vld [vmem:[#allocation8 + $0x378] sm:$0xff]
    %v2391 = vld [vmem:[#allocation8 + $0x380] sm:$0xff]
    %v2392 = vld [vmem:[#allocation8 + $0x388] sm:$0xff]
    %v2393 = vld [vmem:[#allocation8 + $0x390] sm:$0xff]
    %v2394 = vld [vmem:[#allocation8 + $0x398] sm:$0xff]
    %v2395 = vld [vmem:[#allocation8 + $0x3a0] sm:$0xff]
    %v2396 = vld [vmem:[#allocation8 + $0x3a8] sm:$0xff]
    %v2397 = vld [vmem:[#allocation8 + $0x3b0] sm:$0xff]
    %v2398 = vld [vmem:[#allocation8 + $0x3b8] sm:$0xff]
    %v2399 = vld [vmem:[#allocation8 + $0x3c0] sm:$0xff]
    %v2400 = vld [vmem:[#allocation8 + $0x3c8] sm:$0xff]
    %v2401 = vld [vmem:[#allocation8 + $0x3d0] sm:$0xff]
    %v2402 = vld [vmem:[#allocation8 + $0x3d8] sm:$0xff]
    %v2403 = vld [vmem:[#allocation8 + $0x3e0] sm:$0xff]
    %v2404 = vld [vmem:[#allocation8 + $0x3e8] sm:$0xff]
    %v2405 = vld [vmem:[#allocation8 + $0x3f0] sm:$0xff]
    %v2406 = vld [vmem:[#allocation8 + $0x3f8] sm:$0xff]
    %v2407 = vld [vmem:[#allocation8 + $0x400] sm:$0xff]
    %v2408 = vld [vmem:[#allocation8 + $0x408] sm:$0xff]
    %v2409 = vld [vmem:[#allocation8 + $0x410] sm:$0xff]
    %v2410 = vld [vmem:[#allocation8 + $0x418] sm:$0xff]
    %v2411 = vld [vmem:[#allocation8 + $0x420] sm:$0xff]
    %v2412 = vld [vmem:[#allocation8 + $0x428] sm:$0xff]
    %v2413 = vld [vmem:[#allocation8 + $0x430] sm:$0xff]
    %v2414 = vld [vmem:[#allocation8 + $0x438] sm:$0xff]
    %v2415 = vld [vmem:[#allocation8 + $0x440] sm:$0xff]
    %v2416 = vld [vmem:[#allocation8 + $0x448] sm:$0xff]
    %v2417 = vld [vmem:[#allocation8 + $0x450] sm:$0xff]
    %v2418 = vld [vmem:[#allocation8 + $0x458] sm:$0xff]
    %v2419 = vld [vmem:[#allocation8 + $0x460] sm:$0xff]
    %v2420 = vld [vmem:[#allocation8 + $0x468] sm:$0xff]
    %v2421 = vld [vmem:[#allocation8 + $0x470] sm:$0xff]
    %v2422 = vld [vmem:[#allocation8 + $0x478] sm:$0xff]
    %v2423 = vld [vmem:[#allocation8 + $0x480] sm:$0xff]
    %v2424 = vld [vmem:[#allocation8 + $0x488] sm:$0xff]
    %v2425 = vld [vmem:[#allocation8 + $0x490] sm:$0xff]
    %v2426 = vld [vmem:[#allocation8 + $0x498] sm:$0xff]
    %v2427 = vld [vmem:[#allocation8 + $0x4a0] sm:$0xff]
    %v2428 = vld [vmem:[#allocation8 + $0x4a8] sm:$0xff]
    %v2429 = vld [vmem:[#allocation8 + $0x4b0] sm:$0xff]
    %v2430 = vld [vmem:[#allocation8 + $0x4b8] sm:$0xff]
    %v2431 = vld [vmem:[#allocation8 + $0x4c0] sm:$0xff]
    %v2432 = vld [vmem:[#allocation8 + $0x4c8] sm:$0xff]
    %v2433 = vld [vmem:[#allocation8 + $0x4d0] sm:$0xff]
    %v2434 = vld [vmem:[#allocation8 + $0x4d8] sm:$0xff]
    %v2435 = vld [vmem:[#allocation8 + $0x4e0] sm:$0xff]
    %v2436 = vld [vmem:[#allocation8 + $0x4e8] sm:$0xff]
    %v2437 = vld [vmem:[#allocation8 + $0x4f0] sm:$0xff]
    %v2438 = vld [vmem:[#allocation8 + $0x4f8] sm:$0xff]
    %v2439 = vld [vmem:[#allocation8 + $0x500] sm:$0xff]
    %v2440 = vld [vmem:[#allocation8 + $0x508] sm:$0xff]
    %v2441 = vld [vmem:[#allocation8 + $0x510] sm:$0xff]
    %v2442 = vld [vmem:[#allocation8 + $0x518] sm:$0xff]
    %v2443 = vld [vmem:[#allocation8 + $0x520] sm:$0xff]
    %v2444 = vld [vmem:[#allocation8 + $0x528] sm:$0xff]
    %v2445 = vld [vmem:[#allocation8 + $0x530] sm:$0xff]
    %v2446 = vld [vmem:[#allocation8 + $0x538] sm:$0xff]
    %v2447 = vld [vmem:[#allocation8 + $0x540] sm:$0xff]
    %v2448 = vld [vmem:[#allocation8 + $0x548] sm:$0xff]
    %v2449 = vld [vmem:[#allocation8 + $0x550] sm:$0xff]
    %v2450 = vld [vmem:[#allocation8 + $0x558] sm:$0xff]
    %v2451 = vld [vmem:[#allocation8 + $0x560] sm:$0xff]
    %v2452 = vld [vmem:[#allocation8 + $0x568] sm:$0xff]
    %v2453 = vld [vmem:[#allocation8 + $0x570] sm:$0xff]
    %v2454 = vld [vmem:[#allocation8 + $0x578] sm:$0xff]
    %v2455 = vld [vmem:[#allocation8 + $0x580] sm:$0xff]
    %v2456 = vld [vmem:[#allocation8 + $0x588] sm:$0xff]
    %v2457 = vld [vmem:[#allocation8 + $0x590] sm:$0xff]
    %v2458 = vld [vmem:[#allocation8 + $0x598] sm:$0xff]
    %v2459 = vld [vmem:[#allocation8 + $0x5a0] sm:$0xff]
    %v2460 = vld [vmem:[#allocation8 + $0x5a8] sm:$0xff]
    %v2461 = vld [vmem:[#allocation8 + $0x5b0] sm:$0xff]
    %v2462 = vld [vmem:[#allocation8 + $0x5b8] sm:$0xff]
    %v2463 = vld [vmem:[#allocation8 + $0x5c0] sm:$0xff]
    %v2464 = vld [vmem:[#allocation8 + $0x5c8] sm:$0xff]
    %v2465 = vld [vmem:[#allocation8 + $0x5d0] sm:$0xff]
    %v2466 = vld [vmem:[#allocation8 + $0x5d8] sm:$0xff]
    %v2467 = vld [vmem:[#allocation8 + $0x5e0] sm:$0xff]
    %v2468 = vld [vmem:[#allocation8 + $0x5e8] sm:$0xff]
    %v2469 = vld [vmem:[#allocation8 + $0x5f0] sm:$0xff]
    %v2470 = vld [vmem:[#allocation8 + $0x5f8] sm:$0xff]
    %v2471 = vld [vmem:[#allocation8 + $0x600] sm:$0xff]
    %v2472 = vld [vmem:[#allocation8 + $0x608] sm:$0xff]
    %v2473 = vld [vmem:[#allocation8 + $0x610] sm:$0xff]
    %v2474 = vld [vmem:[#allocation8 + $0x618] sm:$0xff]
    %v2475 = vld [vmem:[#allocation8 + $0x620] sm:$0xff]
    %v2476 = vld [vmem:[#allocation8 + $0x628] sm:$0xff]
    %v2477 = vld [vmem:[#allocation8 + $0x630] sm:$0xff]
    %v2478 = vld [vmem:[#allocation8 + $0x638] sm:$0xff]
    %v2479 = vld [vmem:[#allocation8 + $0x640] sm:$0xff]
    %v2480 = vld [vmem:[#allocation8 + $0x648] sm:$0xff]
    %v2481 = vld [vmem:[#allocation8 + $0x650] sm:$0xff]
    %v2482 = vld [vmem:[#allocation8 + $0x658] sm:$0xff]
    %v2483 = vld [vmem:[#allocation8 + $0x660] sm:$0xff]
    %v2484 = vld [vmem:[#allocation8 + $0x668] sm:$0xff]
    %v2485 = vld [vmem:[#allocation8 + $0x670] sm:$0xff]
    %v2486 = vld [vmem:[#allocation8 + $0x678] sm:$0xff]
    %v2487 = vld [vmem:[#allocation8 + $0x680] sm:$0xff]
    %v2488 = vld [vmem:[#allocation8 + $0x688] sm:$0xff]
    %v2489 = vld [vmem:[#allocation8 + $0x690] sm:$0xff]
    %v2490 = vld [vmem:[#allocation8 + $0x698] sm:$0xff]
    %v2491 = vld [vmem:[#allocation8 + $0x6a0] sm:$0xff]
    %v2492 = vld [vmem:[#allocation8 + $0x6a8] sm:$0xff]
    %v2493 = vld [vmem:[#allocation8 + $0x6b0] sm:$0xff]
    %v2494 = vld [vmem:[#allocation8 + $0x6b8] sm:$0xff]
    %v2495 = vld [vmem:[#allocation8 + $0x6c0] sm:$0xff]
    %v2496 = vld [vmem:[#allocation8 + $0x6c8] sm:$0xff]
    %v2497 = vld [vmem:[#allocation8 + $0x6d0] sm:$0xff]
    %v2498 = vld [vmem:[#allocation8 + $0x6d8] sm:$0xff]
    %v2499 = vld [vmem:[#allocation8 + $0x6e0] sm:$0xff]
    %v2500 = vld [vmem:[#allocation8 + $0x6e8] sm:$0xff]
    %v2501 = vld [vmem:[#allocation8 + $0x6f0] sm:$0xff]
    %v2502 = vld [vmem:[#allocation8 + $0x6f8] sm:$0xff]
    %v2503 = vld [vmem:[#allocation8 + $0x700] sm:$0xff]
    %v2504 = vld [vmem:[#allocation8 + $0x708] sm:$0xff]
    %v2505 = vld [vmem:[#allocation8 + $0x710] sm:$0xff]
    %v2506 = vld [vmem:[#allocation8 + $0x718] sm:$0xff]
    %v2507 = vld [vmem:[#allocation8 + $0x720] sm:$0xff]
    %v2508 = vld [vmem:[#allocation8 + $0x728] sm:$0xff]
    %v2509 = vld [vmem:[#allocation8 + $0x730] sm:$0xff]
    %v2510 = vld [vmem:[#allocation8 + $0x738] sm:$0xff]
    %v2511 = vld [vmem:[#allocation8 + $0x740] sm:$0xff]
    %v2512 = vld [vmem:[#allocation8 + $0x748] sm:$0xff]
    %v2513 = vld [vmem:[#allocation8 + $0x750] sm:$0xff]
    %v2514 = vld [vmem:[#allocation8 + $0x758] sm:$0xff]
    %v2515 = vld [vmem:[#allocation8 + $0x760] sm:$0xff]
    %v2516 = vld [vmem:[#allocation8 + $0x768] sm:$0xff]
    %v2517 = vld [vmem:[#allocation8 + $0x770] sm:$0xff]
    %v2518 = vld [vmem:[#allocation8 + $0x778] sm:$0xff]
    %v2519 = vld [vmem:[#allocation8 + $0x780] sm:$0xff]
    %v2520 = vld [vmem:[#allocation8 + $0x788] sm:$0xff]
    %v2521 = vld [vmem:[#allocation8 + $0x790] sm:$0xff]
    %v2522 = vld [vmem:[#allocation8 + $0x798] sm:$0xff]
    %v2523 = vld [vmem:[#allocation8 + $0x7a0] sm:$0xff]
    %v2524 = vld [vmem:[#allocation8 + $0x7a8] sm:$0xff]
    %v2525 = vld [vmem:[#allocation8 + $0x7b0] sm:$0xff]
    %v2526 = vld [vmem:[#allocation8 + $0x7b8] sm:$0xff]
    %v2527 = vld [vmem:[#allocation8 + $0x7c0] sm:$0xff]
    %v2528 = vld [vmem:[#allocation8 + $0x7c8] sm:$0xff]
    %v2529 = vld [vmem:[#allocation8 + $0x7d0] sm:$0xff]
    %v2530 = vld [vmem:[#allocation8 + $0x7d8] sm:$0xff]
    %v2531 = vld [vmem:[#allocation8 + $0x7e0] sm:$0xff]
    %v2532 = vld [vmem:[#allocation8 + $0x7e8] sm:$0xff]
    %v2533 = vld [vmem:[#allocation8 + $0x7f0] sm:$0xff]
    %v2534 = vld [vmem:[#allocation8 + $0x7f8] sm:$0xff]
    %v2535 = vld [vmem:[#allocation8 + $0x800] sm:$0xff]
    %v2536 = vld [vmem:[#allocation8 + $0x808] sm:$0xff]
    %v2537 = vld [vmem:[#allocation8 + $0x810] sm:$0xff]
    %v2538 = vld [vmem:[#allocation8 + $0x818] sm:$0xff]
    %v2539 = vld [vmem:[#allocation8 + $0x820] sm:$0xff]
    %v2540 = vld [vmem:[#allocation8 + $0x828] sm:$0xff]
    %v2541 = vld [vmem:[#allocation8 + $0x830] sm:$0xff]
    %v2542 = vld [vmem:[#allocation8 + $0x838] sm:$0xff]
    %v2543 = vld [vmem:[#allocation8 + $0x840] sm:$0xff]
    %v2544 = vld [vmem:[#allocation8 + $0x848] sm:$0xff]
    %v2545 = vld [vmem:[#allocation8 + $0x850] sm:$0xff]
    %v2546 = vld [vmem:[#allocation8 + $0x858] sm:$0xff]
    %v2547 = vld [vmem:[#allocation8 + $0x860] sm:$0xff]
    %v2548 = vld [vmem:[#allocation8 + $0x868] sm:$0xff]
    %v2549 = vld [vmem:[#allocation8 + $0x870] sm:$0xff]
    %v2550 = vld [vmem:[#allocation8 + $0x878] sm:$0xff]
    %v2551 = vld [vmem:[#allocation8 + $0x880] sm:$0xff]
    %v2552 = vld [vmem:[#allocation8 + $0x888] sm:$0xff]
    %v2553 = vld [vmem:[#allocation8 + $0x890] sm:$0xff]
    %v2554 = vld [vmem:[#allocation8 + $0x898] sm:$0xff]
    %v2555 = vld [vmem:[#allocation8 + $0x8a0] sm:$0xff]
    %v2556 = vld [vmem:[#allocation8 + $0x8a8] sm:$0xff]
    %v2557 = vld [vmem:[#allocation8 + $0x8b0] sm:$0xff]
    %v2558 = vld [vmem:[#allocation8 + $0x8b8] sm:$0xff]
    %v2559 = vld [vmem:[#allocation8 + $0x8c0] sm:$0xff]
    %v2560 = vld [vmem:[#allocation8 + $0x8c8] sm:$0xff]
    %v2561 = vld [vmem:[#allocation8 + $0x8d0] sm:$0xff]
    %v2562 = vld [vmem:[#allocation8 + $0x8d8] sm:$0xff]
    %v2563 = vld [vmem:[#allocation8 + $0x8e0] sm:$0xff]
    %v2564 = vld [vmem:[#allocation8 + $0x8e8] sm:$0xff]
    %v2565 = vld [vmem:[#allocation8 + $0x8f0] sm:$0xff]
    %v2566 = vld [vmem:[#allocation8 + $0x8f8] sm:$0xff]
    %v2567 = vld [vmem:[#allocation10] sm:$0x3f]
    %v2569 = vlaneseq
    %v2570 = vshrl.u32 %v2569, 7
    %v2571 = vsub.s32 0, %v2570
    %v2572 = vrot.slane %v2567, %v2571
    %v2573 = vlaneseq
    %v2574 = vshrl.u32 %v2573, 7
    %v2575 = vsub.s32 1, %v2574
    %v2576 = vrot.slane %v2567, %v2575
    %v2577 = vlaneseq
    %v2578 = vshrl.u32 %v2577, 7
    %v2579 = vsub.s32 2, %v2578
    %v2580 = vrot.slane %v2567, %v2579
    %v2581 = vlaneseq
    %v2582 = vshrl.u32 %v2581, 7
    %v2583 = vsub.s32 3, %v2582
    %v2584 = vrot.slane %v2567, %v2583
    %v2585 = vlaneseq
    %v2586 = vshrl.u32 %v2585, 7
    %v2587 = vsub.s32 4, %v2586
    %v2588 = vrot.slane %v2567, %v2587
    %v2589 = vlaneseq
    %v2590 = vshrl.u32 %v2589, 7
    %v2591 = vsub.s32 5, %v2590
    %v2592 = vrot.slane %v2567, %v2591
    %v2887 = vunpack.c.l.b16 %v2279
    %v2888 = vunpack.c.h.b16 %v2279
    %v2889 = vunpack.c.l.b16 %v2280
    %v2890 = vunpack.c.h.b16 %v2280
    %v2891 = vunpack.c.l.b16 %v2281
    %v2892 = vunpack.c.h.b16 %v2281
    %v2893 = vunpack.c.l.b16 %v2282
    %v2894 = vunpack.c.h.b16 %v2282
    %v2895 = vunpack.c.l.b16 %v2283
    %v2896 = vunpack.c.h.b16 %v2283
    %v2897 = vunpack.c.l.b16 %v2284
    %v2898 = vunpack.c.h.b16 %v2284
    %v2899 = vunpack.c.l.b16 %v2285
    %v2900 = vunpack.c.h.b16 %v2285
    %v2901 = vunpack.c.l.b16 %v2286
    %v2902 = vunpack.c.h.b16 %v2286
    %v2903 = vunpack.c.l.b16 %v2287
    %v2904 = vunpack.c.h.b16 %v2287
    %v2905 = vunpack.c.l.b16 %v2288
    %v2906 = vunpack.c.h.b16 %v2288
    %v2907 = vunpack.c.l.b16 %v2289
    %v2908 = vunpack.c.h.b16 %v2289
    %v2909 = vunpack.c.l.b16 %v2290
    %v2910 = vunpack.c.h.b16 %v2290
    %v2911 = vunpack.c.l.b16 %v2291
    %v2912 = vunpack.c.h.b16 %v2291
    %v2913 = vunpack.c.l.b16 %v2292
    %v2914 = vunpack.c.h.b16 %v2292
    %v2915 = vunpack.c.l.b16 %v2293
    %v2916 = vunpack.c.h.b16 %v2293
    %v2917 = vunpack.c.l.b16 %v2294
    %v2918 = vunpack.c.h.b16 %v2294
    %v2919 = vunpack.c.l.b16 %v2295
    %v2920 = vunpack.c.h.b16 %v2295
    %v2921 = vunpack.c.l.b16 %v2296
    %v2922 = vunpack.c.h.b16 %v2296
    %v2923 = vunpack.c.l.b16 %v2297
    %v2924 = vunpack.c.h.b16 %v2297
    %v2925 = vunpack.c.l.b16 %v2298
    %v2926 = vunpack.c.h.b16 %v2298
    %v2927 = vunpack.c.l.b16 %v2299
    %v2928 = vunpack.c.h.b16 %v2299
    %v2929 = vunpack.c.l.b16 %v2300
    %v2930 = vunpack.c.h.b16 %v2300
    %v2931 = vunpack.c.l.b16 %v2301
    %v2932 = vunpack.c.h.b16 %v2301
    %v2933 = vunpack.c.l.b16 %v2302
    %v2934 = vunpack.c.h.b16 %v2302
    %v2935 = vunpack.c.l.b16 %v2303
    %v2936 = vunpack.c.h.b16 %v2303
    %v2937 = vunpack.c.l.b16 %v2304
    %v2938 = vunpack.c.h.b16 %v2304
    %v2939 = vunpack.c.l.b16 %v2305
    %v2940 = vunpack.c.h.b16 %v2305
    %v2941 = vunpack.c.l.b16 %v2306
    %v2942 = vunpack.c.h.b16 %v2306
    %v2943 = vunpack.c.l.b16 %v2307
    %v2944 = vunpack.c.h.b16 %v2307
    %v2945 = vunpack.c.l.b16 %v2308
    %v2946 = vunpack.c.h.b16 %v2308
    %v2947 = vunpack.c.l.b16 %v2309
    %v2948 = vunpack.c.h.b16 %v2309
    %v2949 = vunpack.c.l.b16 %v2310
    %v2950 = vunpack.c.h.b16 %v2310
    %v2951 = vunpack.c.l.b16 %v2311
    %v2952 = vunpack.c.h.b16 %v2311
    %v2953 = vunpack.c.l.b16 %v2312
    %v2954 = vunpack.c.h.b16 %v2312
    %v2955 = vunpack.c.l.b16 %v2313
    %v2956 = vunpack.c.h.b16 %v2313
    %v2957 = vunpack.c.l.b16 %v2314
    %v2958 = vunpack.c.h.b16 %v2314
    %v2959 = vunpack.c.l.b16 %v2315
    %v2960 = vunpack.c.h.b16 %v2315
    %v2961 = vunpack.c.l.b16 %v2316
    %v2962 = vunpack.c.h.b16 %v2316
    %v2963 = vunpack.c.l.b16 %v2317
    %v2964 = vunpack.c.h.b16 %v2317
    %v2965 = vunpack.c.l.b16 %v2318
    %v2966 = vunpack.c.h.b16 %v2318
    %v2967 = vunpack.c.l.b16 %v2319
    %v2968 = vunpack.c.h.b16 %v2319
    %v2969 = vunpack.c.l.b16 %v2320
    %v2970 = vunpack.c.h.b16 %v2320
    %v2971 = vunpack.c.l.b16 %v2321
    %v2972 = vunpack.c.h.b16 %v2321
    %v2973 = vunpack.c.l.b16 %v2322
    %v2974 = vunpack.c.h.b16 %v2322
    %v2975 = vunpack.c.l.b16 %v2323
    %v2976 = vunpack.c.h.b16 %v2323
    %v2977 = vunpack.c.l.b16 %v2324
    %v2978 = vunpack.c.h.b16 %v2324
    %v2979 = vunpack.c.l.b16 %v2325
    %v2980 = vunpack.c.h.b16 %v2325
    %v2981 = vunpack.c.l.b16 %v2326
    %v2982 = vunpack.c.h.b16 %v2326
    %v2983 = vunpack.c.l.b16 %v2327
    %v2984 = vunpack.c.h.b16 %v2327
    %v2985 = vunpack.c.l.b16 %v2328
    %v2986 = vunpack.c.h.b16 %v2328
    %v2987 = vunpack.c.l.b16 %v2329
    %v2988 = vunpack.c.h.b16 %v2329
    %v2989 = vunpack.c.l.b16 %v2330
    %v2990 = vunpack.c.h.b16 %v2330
    %v2991 = vunpack.c.l.b16 %v2331
    %v2992 = vunpack.c.h.b16 %v2331
    %v2993 = vunpack.c.l.b16 %v2332
    %v2994 = vunpack.c.h.b16 %v2332
    %v2995 = vunpack.c.l.b16 %v2333
    %v2996 = vunpack.c.h.b16 %v2333
    %v2997 = vunpack.c.l.b16 %v2334
    %v2998 = vunpack.c.h.b16 %v2334
    %v2999 = vunpack.c.l.b16 %v2335
    %v3000 = vunpack.c.h.b16 %v2335
    %v3001 = vunpack.c.l.b16 %v2336
    %v3002 = vunpack.c.h.b16 %v2336
    %v3003 = vunpack.c.l.b16 %v2337
    %v3004 = vunpack.c.h.b16 %v2337
    %v3005 = vunpack.c.l.b16 %v2338
    %v3006 = vunpack.c.h.b16 %v2338
    %v3007 = vunpack.c.l.b16 %v2339
    %v3008 = vunpack.c.h.b16 %v2339
    %v3009 = vunpack.c.l.b16 %v2340
    %v3010 = vunpack.c.h.b16 %v2340
    %v3011 = vunpack.c.l.b16 %v2341
    %v3012 = vunpack.c.h.b16 %v2341
    %v3013 = vunpack.c.l.b16 %v2342
    %v3014 = vunpack.c.h.b16 %v2342
    %v3015 = vunpack.c.l.b16 %v2343
    %v3016 = vunpack.c.h.b16 %v2343
    %v3017 = vunpack.c.l.b16 %v2344
    %v3018 = vunpack.c.h.b16 %v2344
    %v3019 = vunpack.c.l.b16 %v2345
    %v3020 = vunpack.c.h.b16 %v2345
    %v3021 = vunpack.c.l.b16 %v2346
    %v3022 = vunpack.c.h.b16 %v2346
    %v3023 = vunpack.c.l.b16 %v2347
    %v3024 = vunpack.c.h.b16 %v2347
    %v3025 = vunpack.c.l.b16 %v2348
    %v3026 = vunpack.c.h.b16 %v2348
    %v3027 = vunpack.c.l.b16 %v2349
    %v3028 = vunpack.c.h.b16 %v2349
    %v3029 = vunpack.c.l.b16 %v2350
    %v3030 = vunpack.c.h.b16 %v2350
    %v3031 = vunpack.c.l.b16 %v2351
    %v3032 = vunpack.c.h.b16 %v2351
    %v3033 = vunpack.c.l.b16 %v2352
    %v3034 = vunpack.c.h.b16 %v2352
    %v3035 = vunpack.c.l.b16 %v2353
    %v3036 = vunpack.c.h.b16 %v2353
    %v3037 = vunpack.c.l.b16 %v2354
    %v3038 = vunpack.c.h.b16 %v2354
    %v3039 = vunpack.c.l.b16 %v2355
    %v3040 = vunpack.c.h.b16 %v2355
    %v3041 = vunpack.c.l.b16 %v2356
    %v3042 = vunpack.c.h.b16 %v2356
    %v3043 = vunpack.c.l.b16 %v2357
    %v3044 = vunpack.c.h.b16 %v2357
    %v3045 = vunpack.c.l.b16 %v2358
    %v3046 = vunpack.c.h.b16 %v2358
    %v3047 = vunpack.c.l.b16 %v2359
    %v3048 = vunpack.c.h.b16 %v2359
    %v3049 = vunpack.c.l.b16 %v2360
    %v3050 = vunpack.c.h.b16 %v2360
    %v3051 = vunpack.c.l.b16 %v2361
    %v3052 = vunpack.c.h.b16 %v2361
    %v3053 = vunpack.c.l.b16 %v2362
    %v3054 = vunpack.c.h.b16 %v2362
    %v3055 = vunpack.c.l.b16 %v2363
    %v3056 = vunpack.c.h.b16 %v2363
    %v3057 = vunpack.c.l.b16 %v2364
    %v3058 = vunpack.c.h.b16 %v2364
    %v3059 = vunpack.c.l.b16 %v2365
    %v3060 = vunpack.c.h.b16 %v2365
    %v3061 = vunpack.c.l.b16 %v2366
    %v3062 = vunpack.c.h.b16 %v2366
    %v3063 = vunpack.c.l.b16 %v2367
    %v3064 = vunpack.c.h.b16 %v2367
    %v3065 = vunpack.c.l.b16 %v2368
    %v3066 = vunpack.c.h.b16 %v2368
    %v3067 = vunpack.c.l.b16 %v2369
    %v3068 = vunpack.c.h.b16 %v2369
    %v3069 = vunpack.c.l.b16 %v2370
    %v3070 = vunpack.c.h.b16 %v2370
    %v3071 = vunpack.c.l.b16 %v2371
    %v3072 = vunpack.c.h.b16 %v2371
    %v3073 = vunpack.c.l.b16 %v2372
    %v3074 = vunpack.c.h.b16 %v2372
    %v3075 = vunpack.c.l.b16 %v2373
    %v3076 = vunpack.c.h.b16 %v2373
    %v3077 = vunpack.c.l.b16 %v2374
    %v3078 = vunpack.c.h.b16 %v2374
    %v3079 = vunpack.c.l.b16 %v2375
    %v3080 = vunpack.c.h.b16 %v2375
    %v3081 = vunpack.c.l.b16 %v2376
    %v3082 = vunpack.c.h.b16 %v2376
    %v3083 = vunpack.c.l.b16 %v2377
    %v3084 = vunpack.c.h.b16 %v2377
    %v3085 = vunpack.c.l.b16 %v2378
    %v3086 = vunpack.c.h.b16 %v2378
    %v3087 = vunpack.c.l.b16 %v2379
    %v3088 = vunpack.c.h.b16 %v2379
    %v3089 = vunpack.c.l.b16 %v2380
    %v3090 = vunpack.c.h.b16 %v2380
    %v3091 = vunpack.c.l.b16 %v2381
    %v3092 = vunpack.c.h.b16 %v2381
    %v3093 = vunpack.c.l.b16 %v2382
    %v3094 = vunpack.c.h.b16 %v2382
    %v3095 = vunpack.c.l.b16 %v2383
    %v3096 = vunpack.c.h.b16 %v2383
    %v3097 = vunpack.c.l.b16 %v2384
    %v3098 = vunpack.c.h.b16 %v2384
    %v3099 = vunpack.c.l.b16 %v2385
    %v3100 = vunpack.c.h.b16 %v2385
    %v3101 = vunpack.c.l.b16 %v2386
    %v3102 = vunpack.c.h.b16 %v2386
    %v3103 = vunpack.c.l.b16 %v2387
    %v3104 = vunpack.c.h.b16 %v2387
    %v3105 = vunpack.c.l.b16 %v2388
    %v3106 = vunpack.c.h.b16 %v2388
    %v3107 = vunpack.c.l.b16 %v2389
    %v3108 = vunpack.c.h.b16 %v2389
    %v3109 = vunpack.c.l.b16 %v2390
    %v3110 = vunpack.c.h.b16 %v2390
    %v3111 = vunpack.c.l.b16 %v2391
    %v3112 = vunpack.c.h.b16 %v2391
    %v3113 = vunpack.c.l.b16 %v2392
    %v3114 = vunpack.c.h.b16 %v2392
    %v3115 = vunpack.c.l.b16 %v2393
    %v3116 = vunpack.c.h.b16 %v2393
    %v3117 = vunpack.c.l.b16 %v2394
    %v3118 = vunpack.c.h.b16 %v2394
    %v3119 = vunpack.c.l.b16 %v2395
    %v3120 = vunpack.c.h.b16 %v2395
    %v3121 = vunpack.c.l.b16 %v2396
    %v3122 = vunpack.c.h.b16 %v2396
    %v3123 = vunpack.c.l.b16 %v2397
    %v3124 = vunpack.c.h.b16 %v2397
    %v3125 = vunpack.c.l.b16 %v2398
    %v3126 = vunpack.c.h.b16 %v2398
    %v3127 = vunpack.c.l.b16 %v2399
    %v3128 = vunpack.c.h.b16 %v2399
    %v3129 = vunpack.c.l.b16 %v2400
    %v3130 = vunpack.c.h.b16 %v2400
    %v3131 = vunpack.c.l.b16 %v2401
    %v3132 = vunpack.c.h.b16 %v2401
    %v3133 = vunpack.c.l.b16 %v2402
    %v3134 = vunpack.c.h.b16 %v2402
    %v3135 = vunpack.c.l.b16 %v2403
    %v3136 = vunpack.c.h.b16 %v2403
    %v3137 = vunpack.c.l.b16 %v2404
    %v3138 = vunpack.c.h.b16 %v2404
    %v3139 = vunpack.c.l.b16 %v2405
    %v3140 = vunpack.c.h.b16 %v2405
    %v3141 = vunpack.c.l.b16 %v2406
    %v3142 = vunpack.c.h.b16 %v2406
    %v3143 = vunpack.c.l.b16 %v2407
    %v3144 = vunpack.c.h.b16 %v2407
    %v3145 = vunpack.c.l.b16 %v2408
    %v3146 = vunpack.c.h.b16 %v2408
    %v3147 = vunpack.c.l.b16 %v2409
    %v3148 = vunpack.c.h.b16 %v2409
    %v3149 = vunpack.c.l.b16 %v2410
    %v3150 = vunpack.c.h.b16 %v2410
    %v3151 = vunpack.c.l.b16 %v2411
    %v3152 = vunpack.c.h.b16 %v2411
    %v3153 = vunpack.c.l.b16 %v2412
    %v3154 = vunpack.c.h.b16 %v2412
    %v3155 = vunpack.c.l.b16 %v2413
    %v3156 = vunpack.c.h.b16 %v2413
    %v3157 = vunpack.c.l.b16 %v2414
    %v3158 = vunpack.c.h.b16 %v2414
    %v3159 = vunpack.c.l.b16 %v2415
    %v3160 = vunpack.c.h.b16 %v2415
    %v3161 = vunpack.c.l.b16 %v2416
    %v3162 = vunpack.c.h.b16 %v2416
    %v3163 = vunpack.c.l.b16 %v2417
    %v3164 = vunpack.c.h.b16 %v2417
    %v3165 = vunpack.c.l.b16 %v2418
    %v3166 = vunpack.c.h.b16 %v2418
    %v3167 = vunpack.c.l.b16 %v2419
    %v3168 = vunpack.c.h.b16 %v2419
    %v3169 = vunpack.c.l.b16 %v2420
    %v3170 = vunpack.c.h.b16 %v2420
    %v3171 = vunpack.c.l.b16 %v2421
    %v3172 = vunpack.c.h.b16 %v2421
    %v3173 = vunpack.c.l.b16 %v2422
    %v3174 = vunpack.c.h.b16 %v2422
    %v3175 = vunpack.c.l.b16 %v2423
    %v3176 = vunpack.c.h.b16 %v2423
    %v3177 = vunpack.c.l.b16 %v2424
    %v3178 = vunpack.c.h.b16 %v2424
    %v3179 = vunpack.c.l.b16 %v2425
    %v3180 = vunpack.c.h.b16 %v2425
    %v3181 = vunpack.c.l.b16 %v2426
    %v3182 = vunpack.c.h.b16 %v2426
    %v3183 = vunpack.c.l.b16 %v2427
    %v3184 = vunpack.c.h.b16 %v2427
    %v3185 = vunpack.c.l.b16 %v2428
    %v3186 = vunpack.c.h.b16 %v2428
    %v3187 = vunpack.c.l.b16 %v2429
    %v3188 = vunpack.c.h.b16 %v2429
    %v3189 = vunpack.c.l.b16 %v2430
    %v3190 = vunpack.c.h.b16 %v2430
    %v3191 = vunpack.c.l.b16 %v2431
    %v3192 = vunpack.c.h.b16 %v2431
    %v3193 = vunpack.c.l.b16 %v2432
    %v3194 = vunpack.c.h.b16 %v2432
    %v3195 = vunpack.c.l.b16 %v2433
    %v3196 = vunpack.c.h.b16 %v2433
    %v3197 = vunpack.c.l.b16 %v2434
    %v3198 = vunpack.c.h.b16 %v2434
    %v3199 = vunpack.c.l.b16 %v2435
    %v3200 = vunpack.c.h.b16 %v2435
    %v3201 = vunpack.c.l.b16 %v2436
    %v3202 = vunpack.c.h.b16 %v2436
    %v3203 = vunpack.c.l.b16 %v2437
    %v3204 = vunpack.c.h.b16 %v2437
    %v3205 = vunpack.c.l.b16 %v2438
    %v3206 = vunpack.c.h.b16 %v2438
    %v3207 = vunpack.c.l.b16 %v2439
    %v3208 = vunpack.c.h.b16 %v2439
    %v3209 = vunpack.c.l.b16 %v2440
    %v3210 = vunpack.c.h.b16 %v2440
    %v3211 = vunpack.c.l.b16 %v2441
    %v3212 = vunpack.c.h.b16 %v2441
    %v3213 = vunpack.c.l.b16 %v2442
    %v3214 = vunpack.c.h.b16 %v2442
    %v3215 = vunpack.c.l.b16 %v2443
    %v3216 = vunpack.c.h.b16 %v2443
    %v3217 = vunpack.c.l.b16 %v2444
    %v3218 = vunpack.c.h.b16 %v2444
    %v3219 = vunpack.c.l.b16 %v2445
    %v3220 = vunpack.c.h.b16 %v2445
    %v3221 = vunpack.c.l.b16 %v2446
    %v3222 = vunpack.c.h.b16 %v2446
    %v3223 = vunpack.c.l.b16 %v2447
    %v3224 = vunpack.c.h.b16 %v2447
    %v3225 = vunpack.c.l.b16 %v2448
    %v3226 = vunpack.c.h.b16 %v2448
    %v3227 = vunpack.c.l.b16 %v2449
    %v3228 = vunpack.c.h.b16 %v2449
    %v3229 = vunpack.c.l.b16 %v2450
    %v3230 = vunpack.c.h.b16 %v2450
    %v3231 = vunpack.c.l.b16 %v2451
    %v3232 = vunpack.c.h.b16 %v2451
    %v3233 = vunpack.c.l.b16 %v2452
    %v3234 = vunpack.c.h.b16 %v2452
    %v3235 = vunpack.c.l.b16 %v2453
    %v3236 = vunpack.c.h.b16 %v2453
    %v3237 = vunpack.c.l.b16 %v2454
    %v3238 = vunpack.c.h.b16 %v2454
    %v3239 = vunpack.c.l.b16 %v2455
    %v3240 = vunpack.c.h.b16 %v2455
    %v3241 = vunpack.c.l.b16 %v2456
    %v3242 = vunpack.c.h.b16 %v2456
    %v3243 = vunpack.c.l.b16 %v2457
    %v3244 = vunpack.c.h.b16 %v2457
    %v3245 = vunpack.c.l.b16 %v2458
    %v3246 = vunpack.c.h.b16 %v2458
    %v3247 = vunpack.c.l.b16 %v2459
    %v3248 = vunpack.c.h.b16 %v2459
    %v3249 = vunpack.c.l.b16 %v2460
    %v3250 = vunpack.c.h.b16 %v2460
    %v3251 = vunpack.c.l.b16 %v2461
    %v3252 = vunpack.c.h.b16 %v2461
    %v3253 = vunpack.c.l.b16 %v2462
    %v3254 = vunpack.c.h.b16 %v2462
    %v3255 = vunpack.c.l.b16 %v2463
    %v3256 = vunpack.c.h.b16 %v2463
    %v3257 = vunpack.c.l.b16 %v2464
    %v3258 = vunpack.c.h.b16 %v2464
    %v3259 = vunpack.c.l.b16 %v2465
    %v3260 = vunpack.c.h.b16 %v2465
    %v3261 = vunpack.c.l.b16 %v2466
    %v3262 = vunpack.c.h.b16 %v2466
    %v3263 = vunpack.c.l.b16 %v2467
    %v3264 = vunpack.c.h.b16 %v2467
    %v3265 = vunpack.c.l.b16 %v2468
    %v3266 = vunpack.c.h.b16 %v2468
    %v3267 = vunpack.c.l.b16 %v2469
    %v3268 = vunpack.c.h.b16 %v2469
    %v3269 = vunpack.c.l.b16 %v2470
    %v3270 = vunpack.c.h.b16 %v2470
    %v3271 = vunpack.c.l.b16 %v2471
    %v3272 = vunpack.c.h.b16 %v2471
    %v3273 = vunpack.c.l.b16 %v2472
    %v3274 = vunpack.c.h.b16 %v2472
    %v3275 = vunpack.c.l.b16 %v2473
    %v3276 = vunpack.c.h.b16 %v2473
    %v3277 = vunpack.c.l.b16 %v2474
    %v3278 = vunpack.c.h.b16 %v2474
    %v3279 = vunpack.c.l.b16 %v2475
    %v3280 = vunpack.c.h.b16 %v2475
    %v3281 = vunpack.c.l.b16 %v2476
    %v3282 = vunpack.c.h.b16 %v2476
    %v3283 = vunpack.c.l.b16 %v2477
    %v3284 = vunpack.c.h.b16 %v2477
    %v3285 = vunpack.c.l.b16 %v2478
    %v3286 = vunpack.c.h.b16 %v2478
    %v3287 = vunpack.c.l.b16 %v2479
    %v3288 = vunpack.c.h.b16 %v2479
    %v3289 = vunpack.c.l.b16 %v2480
    %v3290 = vunpack.c.h.b16 %v2480
    %v3291 = vunpack.c.l.b16 %v2481
    %v3292 = vunpack.c.h.b16 %v2481
    %v3293 = vunpack.c.l.b16 %v2482
    %v3294 = vunpack.c.h.b16 %v2482
    %v3295 = vunpack.c.l.b16 %v2483
    %v3296 = vunpack.c.h.b16 %v2483
    %v3297 = vunpack.c.l.b16 %v2484
    %v3298 = vunpack.c.h.b16 %v2484
    %v3299 = vunpack.c.l.b16 %v2485
    %v3300 = vunpack.c.h.b16 %v2485
    %v3301 = vunpack.c.l.b16 %v2486
    %v3302 = vunpack.c.h.b16 %v2486
    %v3303 = vunpack.c.l.b16 %v2487
    %v3304 = vunpack.c.h.b16 %v2487
    %v3305 = vunpack.c.l.b16 %v2488
    %v3306 = vunpack.c.h.b16 %v2488
    %v3307 = vunpack.c.l.b16 %v2489
    %v3308 = vunpack.c.h.b16 %v2489
    %v3309 = vunpack.c.l.b16 %v2490
    %v3310 = vunpack.c.h.b16 %v2490
    %v3311 = vunpack.c.l.b16 %v2491
    %v3312 = vunpack.c.h.b16 %v2491
    %v3313 = vunpack.c.l.b16 %v2492
    %v3314 = vunpack.c.h.b16 %v2492
    %v3315 = vunpack.c.l.b16 %v2493
    %v3316 = vunpack.c.h.b16 %v2493
    %v3317 = vunpack.c.l.b16 %v2494
    %v3318 = vunpack.c.h.b16 %v2494
    %v3319 = vunpack.c.l.b16 %v2495
    %v3320 = vunpack.c.h.b16 %v2495
    %v3321 = vunpack.c.l.b16 %v2496
    %v3322 = vunpack.c.h.b16 %v2496
    %v3323 = vunpack.c.l.b16 %v2497
    %v3324 = vunpack.c.h.b16 %v2497
    %v3325 = vunpack.c.l.b16 %v2498
    %v3326 = vunpack.c.h.b16 %v2498
    %v3327 = vunpack.c.l.b16 %v2499
    %v3328 = vunpack.c.h.b16 %v2499
    %v3329 = vunpack.c.l.b16 %v2500
    %v3330 = vunpack.c.h.b16 %v2500
    %v3331 = vunpack.c.l.b16 %v2501
    %v3332 = vunpack.c.h.b16 %v2501
    %v3333 = vunpack.c.l.b16 %v2502
    %v3334 = vunpack.c.h.b16 %v2502
    %v3335 = vunpack.c.l.b16 %v2503
    %v3336 = vunpack.c.h.b16 %v2503
    %v3337 = vunpack.c.l.b16 %v2504
    %v3338 = vunpack.c.h.b16 %v2504
    %v3339 = vunpack.c.l.b16 %v2505
    %v3340 = vunpack.c.h.b16 %v2505
    %v3341 = vunpack.c.l.b16 %v2506
    %v3342 = vunpack.c.h.b16 %v2506
    %v3343 = vunpack.c.l.b16 %v2507
    %v3344 = vunpack.c.h.b16 %v2507
    %v3345 = vunpack.c.l.b16 %v2508
    %v3346 = vunpack.c.h.b16 %v2508
    %v3347 = vunpack.c.l.b16 %v2509
    %v3348 = vunpack.c.h.b16 %v2509
    %v3349 = vunpack.c.l.b16 %v2510
    %v3350 = vunpack.c.h.b16 %v2510
    %v3351 = vunpack.c.l.b16 %v2511
    %v3352 = vunpack.c.h.b16 %v2511
    %v3353 = vunpack.c.l.b16 %v2512
    %v3354 = vunpack.c.h.b16 %v2512
    %v3355 = vunpack.c.l.b16 %v2513
    %v3356 = vunpack.c.h.b16 %v2513
    %v3357 = vunpack.c.l.b16 %v2514
    %v3358 = vunpack.c.h.b16 %v2514
    %v3359 = vunpack.c.l.b16 %v2515
    %v3360 = vunpack.c.h.b16 %v2515
    %v3361 = vunpack.c.l.b16 %v2516
    %v3362 = vunpack.c.h.b16 %v2516
    %v3363 = vunpack.c.l.b16 %v2517
    %v3364 = vunpack.c.h.b16 %v2517
    %v3365 = vunpack.c.l.b16 %v2518
    %v3366 = vunpack.c.h.b16 %v2518
    %v3367 = vunpack.c.l.b16 %v2519
    %v3368 = vunpack.c.h.b16 %v2519
    %v3369 = vunpack.c.l.b16 %v2520
    %v3370 = vunpack.c.h.b16 %v2520
    %v3371 = vunpack.c.l.b16 %v2521
    %v3372 = vunpack.c.h.b16 %v2521
    %v3373 = vunpack.c.l.b16 %v2522
    %v3374 = vunpack.c.h.b16 %v2522
    %v3375 = vunpack.c.l.b16 %v2523
    %v3376 = vunpack.c.h.b16 %v2523
    %v3377 = vunpack.c.l.b16 %v2524
    %v3378 = vunpack.c.h.b16 %v2524
    %v3379 = vunpack.c.l.b16 %v2525
    %v3380 = vunpack.c.h.b16 %v2525
    %v3381 = vunpack.c.l.b16 %v2526
    %v3382 = vunpack.c.h.b16 %v2526
    %v3383 = vunpack.c.l.b16 %v2527
    %v3384 = vunpack.c.h.b16 %v2527
    %v3385 = vunpack.c.l.b16 %v2528
    %v3386 = vunpack.c.h.b16 %v2528
    %v3387 = vunpack.c.l.b16 %v2529
    %v3388 = vunpack.c.h.b16 %v2529
    %v3389 = vunpack.c.l.b16 %v2530
    %v3390 = vunpack.c.h.b16 %v2530
    %v3391 = vunpack.c.l.b16 %v2531
    %v3392 = vunpack.c.h.b16 %v2531
    %v3393 = vunpack.c.l.b16 %v2532
    %v3394 = vunpack.c.h.b16 %v2532
    %v3395 = vunpack.c.l.b16 %v2533
    %v3396 = vunpack.c.h.b16 %v2533
    %v3397 = vunpack.c.l.b16 %v2534
    %v3398 = vunpack.c.h.b16 %v2534
    %v3399 = vunpack.c.l.b16 %v2535
    %v3400 = vunpack.c.h.b16 %v2535
    %v3401 = vunpack.c.l.b16 %v2536
    %v3402 = vunpack.c.h.b16 %v2536
    %v3403 = vunpack.c.l.b16 %v2537
    %v3404 = vunpack.c.h.b16 %v2537
    %v3405 = vunpack.c.l.b16 %v2538
    %v3406 = vunpack.c.h.b16 %v2538
    %v3407 = vunpack.c.l.b16 %v2539
    %v3408 = vunpack.c.h.b16 %v2539
    %v3409 = vunpack.c.l.b16 %v2540
    %v3410 = vunpack.c.h.b16 %v2540
    %v3411 = vunpack.c.l.b16 %v2541
    %v3412 = vunpack.c.h.b16 %v2541
    %v3413 = vunpack.c.l.b16 %v2542
    %v3414 = vunpack.c.h.b16 %v2542
    %v3415 = vunpack.c.l.b16 %v2543
    %v3416 = vunpack.c.h.b16 %v2543
    %v3417 = vunpack.c.l.b16 %v2544
    %v3418 = vunpack.c.h.b16 %v2544
    %v3419 = vunpack.c.l.b16 %v2545
    %v3420 = vunpack.c.h.b16 %v2545
    %v3421 = vunpack.c.l.b16 %v2546
    %v3422 = vunpack.c.h.b16 %v2546
    %v3423 = vunpack.c.l.b16 %v2547
    %v3424 = vunpack.c.h.b16 %v2547
    %v3425 = vunpack.c.l.b16 %v2548
    %v3426 = vunpack.c.h.b16 %v2548
    %v3427 = vunpack.c.l.b16 %v2549
    %v3428 = vunpack.c.h.b16 %v2549
    %v3429 = vunpack.c.l.b16 %v2550
    %v3430 = vunpack.c.h.b16 %v2550
    %v3431 = vunpack.c.l.b16 %v2551
    %v3432 = vunpack.c.h.b16 %v2551
    %v3433 = vunpack.c.l.b16 %v2552
    %v3434 = vunpack.c.h.b16 %v2552
    %v3435 = vunpack.c.l.b16 %v2553
    %v3436 = vunpack.c.h.b16 %v2553
    %v3437 = vunpack.c.l.b16 %v2554
    %v3438 = vunpack.c.h.b16 %v2554
    %v3439 = vunpack.c.l.b16 %v2555
    %v3440 = vunpack.c.h.b16 %v2555
    %v3441 = vunpack.c.l.b16 %v2556
    %v3442 = vunpack.c.h.b16 %v2556
    %v3443 = vunpack.c.l.b16 %v2557
    %v3444 = vunpack.c.h.b16 %v2557
    %v3445 = vunpack.c.l.b16 %v2558
    %v3446 = vunpack.c.h.b16 %v2558
    %v3447 = vunpack.c.l.b16 %v2559
    %v3448 = vunpack.c.h.b16 %v2559
    %v3449 = vunpack.c.l.b16 %v2560
    %v3450 = vunpack.c.h.b16 %v2560
    %v3451 = vunpack.c.l.b16 %v2561
    %v3452 = vunpack.c.h.b16 %v2561
    %v3453 = vunpack.c.l.b16 %v2562
    %v3454 = vunpack.c.h.b16 %v2562
    %v3455 = vunpack.c.l.b16 %v2563
    %v3456 = vunpack.c.h.b16 %v2563
    %v3457 = vunpack.c.l.b16 %v2564
    %v3458 = vunpack.c.h.b16 %v2564
    %v3459 = vunpack.c.l.b16 %v2565
    %v3460 = vunpack.c.h.b16 %v2565
    %v3461 = vunpack.c.l.b16 %v2566
    %v3462 = vunpack.c.h.b16 %v2566
    %v3463 = vpack.c.b16 %v2893, %v2887
    %v3464 = vpack.c.b16 %v2894, %v2888
    %v3465 = vpack.c.b16 %v2895, %v2889
    %v3466 = vpack.c.b16 %v2896, %v2890
    %v3467 = vpack.c.b16 %v2897, %v2891
    %v3468 = vpack.c.b16 %v2898, %v2892
    %v3469 = vpack.c.b16 %v2905, %v2899
    %v3470 = vpack.c.b16 %v2906, %v2900
    %v3471 = vpack.c.b16 %v2907, %v2901
    %v3472 = vpack.c.b16 %v2908, %v2902
    %v3473 = vpack.c.b16 %v2909, %v2903
    %v3474 = vpack.c.b16 %v2910, %v2904
    %v3475 = vpack.c.b16 %v2917, %v2911
    %v3476 = vpack.c.b16 %v2918, %v2912
    %v3477 = vpack.c.b16 %v2919, %v2913
    %v3478 = vpack.c.b16 %v2920, %v2914
    %v3479 = vpack.c.b16 %v2921, %v2915
    %v3480 = vpack.c.b16 %v2922, %v2916
    %v3481 = vpack.c.b16 %v2929, %v2923
    %v3482 = vpack.c.b16 %v2930, %v2924
    %v3483 = vpack.c.b16 %v2931, %v2925
    %v3484 = vpack.c.b16 %v2932, %v2926
    %v3485 = vpack.c.b16 %v2933, %v2927
    %v3486 = vpack.c.b16 %v2934, %v2928
    %v3487 = vpack.c.b16 %v2941, %v2935
    %v3488 = vpack.c.b16 %v2942, %v2936
    %v3489 = vpack.c.b16 %v2943, %v2937
    %v3490 = vpack.c.b16 %v2944, %v2938
    %v3491 = vpack.c.b16 %v2945, %v2939
    %v3492 = vpack.c.b16 %v2946, %v2940
    %v3493 = vpack.c.b16 %v2953, %v2947
    %v3494 = vpack.c.b16 %v2954, %v2948
    %v3495 = vpack.c.b16 %v2955, %v2949
    %v3496 = vpack.c.b16 %v2956, %v2950
    %v3497 = vpack.c.b16 %v2957, %v2951
    %v3498 = vpack.c.b16 %v2958, %v2952
    %v3499 = vpack.c.b16 %v2965, %v2959
    %v3500 = vpack.c.b16 %v2966, %v2960
    %v3501 = vpack.c.b16 %v2967, %v2961
    %v3502 = vpack.c.b16 %v2968, %v2962
    %v3503 = vpack.c.b16 %v2969, %v2963
    %v3504 = vpack.c.b16 %v2970, %v2964
    %v3505 = vpack.c.b16 %v2977, %v2971
    %v3506 = vpack.c.b16 %v2978, %v2972
    %v3507 = vpack.c.b16 %v2979, %v2973
    %v3508 = vpack.c.b16 %v2980, %v2974
    %v3509 = vpack.c.b16 %v2981, %v2975
    %v3510 = vpack.c.b16 %v2982, %v2976
    %v3511 = vpack.c.b16 %v2989, %v2983
    %v3512 = vpack.c.b16 %v2990, %v2984
    %v3513 = vpack.c.b16 %v2991, %v2985
    %v3514 = vpack.c.b16 %v2992, %v2986
    %v3515 = vpack.c.b16 %v2993, %v2987
    %v3516 = vpack.c.b16 %v2994, %v2988
    %v3517 = vpack.c.b16 %v3001, %v2995
    %v3518 = vpack.c.b16 %v3002, %v2996
    %v3519 = vpack.c.b16 %v3003, %v2997
    %v3520 = vpack.c.b16 %v3004, %v2998
    %v3521 = vpack.c.b16 %v3005, %v2999
    %v3522 = vpack.c.b16 %v3006, %v3000
    %v3523 = vpack.c.b16 %v3013, %v3007
    %v3524 = vpack.c.b16 %v3014, %v3008
    %v3525 = vpack.c.b16 %v3015, %v3009
    %v3526 = vpack.c.b16 %v3016, %v3010
    %v3527 = vpack.c.b16 %v3017, %v3011
    %v3528 = vpack.c.b16 %v3018, %v3012
    %v3529 = vpack.c.b16 %v3025, %v3019
    %v3530 = vpack.c.b16 %v3026, %v3020
    %v3531 = vpack.c.b16 %v3027, %v3021
    %v3532 = vpack.c.b16 %v3028, %v3022
    %v3533 = vpack.c.b16 %v3029, %v3023
    %v3534 = vpack.c.b16 %v3030, %v3024
    %v3535 = vpack.c.b16 %v3037, %v3031
    %v3536 = vpack.c.b16 %v3038, %v3032
    %v3537 = vpack.c.b16 %v3039, %v3033
    %v3538 = vpack.c.b16 %v3040, %v3034
    %v3539 = vpack.c.b16 %v3041, %v3035
    %v3540 = vpack.c.b16 %v3042, %v3036
    %v3541 = vpack.c.b16 %v3049, %v3043
    %v3542 = vpack.c.b16 %v3050, %v3044
    %v3543 = vpack.c.b16 %v3051, %v3045
    %v3544 = vpack.c.b16 %v3052, %v3046
    %v3545 = vpack.c.b16 %v3053, %v3047
    %v3546 = vpack.c.b16 %v3054, %v3048
    %v3547 = vpack.c.b16 %v3061, %v3055
    %v3548 = vpack.c.b16 %v3062, %v3056
    %v3549 = vpack.c.b16 %v3063, %v3057
    %v3550 = vpack.c.b16 %v3064, %v3058
    %v3551 = vpack.c.b16 %v3065, %v3059
    %v3552 = vpack.c.b16 %v3066, %v3060
    %v3553 = vpack.c.b16 %v3073, %v3067
    %v3554 = vpack.c.b16 %v3074, %v3068
    %v3555 = vpack.c.b16 %v3075, %v3069
    %v3556 = vpack.c.b16 %v3076, %v3070
    %v3557 = vpack.c.b16 %v3077, %v3071
    %v3558 = vpack.c.b16 %v3078, %v3072
    %v3559 = vpack.c.b16 %v3085, %v3079
    %v3560 = vpack.c.b16 %v3086, %v3080
    %v3561 = vpack.c.b16 %v3087, %v3081
    %v3562 = vpack.c.b16 %v3088, %v3082
    %v3563 = vpack.c.b16 %v3089, %v3083
    %v3564 = vpack.c.b16 %v3090, %v3084
    %v3565 = vpack.c.b16 %v3097, %v3091
    %v3566 = vpack.c.b16 %v3098, %v3092
    %v3567 = vpack.c.b16 %v3099, %v3093
    %v3568 = vpack.c.b16 %v3100, %v3094
    %v3569 = vpack.c.b16 %v3101, %v3095
    %v3570 = vpack.c.b16 %v3102, %v3096
    %v3571 = vpack.c.b16 %v3109, %v3103
    %v3572 = vpack.c.b16 %v3110, %v3104
    %v3573 = vpack.c.b16 %v3111, %v3105
    %v3574 = vpack.c.b16 %v3112, %v3106
    %v3575 = vpack.c.b16 %v3113, %v3107
    %v3576 = vpack.c.b16 %v3114, %v3108
    %v3577 = vpack.c.b16 %v3121, %v3115
    %v3578 = vpack.c.b16 %v3122, %v3116
    %v3579 = vpack.c.b16 %v3123, %v3117
    %v3580 = vpack.c.b16 %v3124, %v3118
    %v3581 = vpack.c.b16 %v3125, %v3119
    %v3582 = vpack.c.b16 %v3126, %v3120
    %v3583 = vpack.c.b16 %v3133, %v3127
    %v3584 = vpack.c.b16 %v3134, %v3128
    %v3585 = vpack.c.b16 %v3135, %v3129
    %v3586 = vpack.c.b16 %v3136, %v3130
    %v3587 = vpack.c.b16 %v3137, %v3131
    %v3588 = vpack.c.b16 %v3138, %v3132
    %v3589 = vpack.c.b16 %v3145, %v3139
    %v3590 = vpack.c.b16 %v3146, %v3140
    %v3591 = vpack.c.b16 %v3147, %v3141
    %v3592 = vpack.c.b16 %v3148, %v3142
    %v3593 = vpack.c.b16 %v3149, %v3143
    %v3594 = vpack.c.b16 %v3150, %v3144
    %v3595 = vpack.c.b16 %v3157, %v3151
    %v3596 = vpack.c.b16 %v3158, %v3152
    %v3597 = vpack.c.b16 %v3159, %v3153
    %v3598 = vpack.c.b16 %v3160, %v3154
    %v3599 = vpack.c.b16 %v3161, %v3155
    %v3600 = vpack.c.b16 %v3162, %v3156
    %v3601 = vpack.c.b16 %v3169, %v3163
    %v3602 = vpack.c.b16 %v3170, %v3164
    %v3603 = vpack.c.b16 %v3171, %v3165
    %v3604 = vpack.c.b16 %v3172, %v3166
    %v3605 = vpack.c.b16 %v3173, %v3167
    %v3606 = vpack.c.b16 %v3174, %v3168
    %v3607 = vpack.c.b16 %v3181, %v3175
    %v3608 = vpack.c.b16 %v3182, %v3176
    %v3609 = vpack.c.b16 %v3183, %v3177
    %v3610 = vpack.c.b16 %v3184, %v3178
    %v3611 = vpack.c.b16 %v3185, %v3179
    %v3612 = vpack.c.b16 %v3186, %v3180
    %v3613 = vpack.c.b16 %v3193, %v3187
    %v3614 = vpack.c.b16 %v3194, %v3188
    %v3615 = vpack.c.b16 %v3195, %v3189
    %v3616 = vpack.c.b16 %v3196, %v3190
    %v3617 = vpack.c.b16 %v3197, %v3191
    %v3618 = vpack.c.b16 %v3198, %v3192
    %v3619 = vpack.c.b16 %v3205, %v3199
    %v3620 = vpack.c.b16 %v3206, %v3200
    %v3621 = vpack.c.b16 %v3207, %v3201
    %v3622 = vpack.c.b16 %v3208, %v3202
    %v3623 = vpack.c.b16 %v3209, %v3203
    %v3624 = vpack.c.b16 %v3210, %v3204
    %v3625 = vpack.c.b16 %v3217, %v3211
    %v3626 = vpack.c.b16 %v3218, %v3212
    %v3627 = vpack.c.b16 %v3219, %v3213
    %v3628 = vpack.c.b16 %v3220, %v3214
    %v3629 = vpack.c.b16 %v3221, %v3215
    %v3630 = vpack.c.b16 %v3222, %v3216
    %v3631 = vpack.c.b16 %v3229, %v3223
    %v3632 = vpack.c.b16 %v3230, %v3224
    %v3633 = vpack.c.b16 %v3231, %v3225
    %v3634 = vpack.c.b16 %v3232, %v3226
    %v3635 = vpack.c.b16 %v3233, %v3227
    %v3636 = vpack.c.b16 %v3234, %v3228
    %v3637 = vpack.c.b16 %v3241, %v3235
    %v3638 = vpack.c.b16 %v3242, %v3236
    %v3639 = vpack.c.b16 %v3243, %v3237
    %v3640 = vpack.c.b16 %v3244, %v3238
    %v3641 = vpack.c.b16 %v3245, %v3239
    %v3642 = vpack.c.b16 %v3246, %v3240
    %v3643 = vpack.c.b16 %v3253, %v3247
    %v3644 = vpack.c.b16 %v3254, %v3248
    %v3645 = vpack.c.b16 %v3255, %v3249
    %v3646 = vpack.c.b16 %v3256, %v3250
    %v3647 = vpack.c.b16 %v3257, %v3251
    %v3648 = vpack.c.b16 %v3258, %v3252
    %v3649 = vpack.c.b16 %v3265, %v3259
    %v3650 = vpack.c.b16 %v3266, %v3260
    %v3651 = vpack.c.b16 %v3267, %v3261
    %v3652 = vpack.c.b16 %v3268, %v3262
    %v3653 = vpack.c.b16 %v3269, %v3263
    %v3654 = vpack.c.b16 %v3270, %v3264
    %v3655 = vpack.c.b16 %v3277, %v3271
    %v3656 = vpack.c.b16 %v3278, %v3272
    %v3657 = vpack.c.b16 %v3279, %v3273
    %v3658 = vpack.c.b16 %v3280, %v3274
    %v3659 = vpack.c.b16 %v3281, %v3275
    %v3660 = vpack.c.b16 %v3282, %v3276
    %v3661 = vpack.c.b16 %v3289, %v3283
    %v3662 = vpack.c.b16 %v3290, %v3284
    %v3663 = vpack.c.b16 %v3291, %v3285
    %v3664 = vpack.c.b16 %v3292, %v3286
    %v3665 = vpack.c.b16 %v3293, %v3287
    %v3666 = vpack.c.b16 %v3294, %v3288
    %v3667 = vpack.c.b16 %v3301, %v3295
    %v3668 = vpack.c.b16 %v3302, %v3296
    %v3669 = vpack.c.b16 %v3303, %v3297
    %v3670 = vpack.c.b16 %v3304, %v3298
    %v3671 = vpack.c.b16 %v3305, %v3299
    %v3672 = vpack.c.b16 %v3306, %v3300
    %v3673 = vpack.c.b16 %v3313, %v3307
    %v3674 = vpack.c.b16 %v3314, %v3308
    %v3675 = vpack.c.b16 %v3315, %v3309
    %v3676 = vpack.c.b16 %v3316, %v3310
    %v3677 = vpack.c.b16 %v3317, %v3311
    %v3678 = vpack.c.b16 %v3318, %v3312
    %v3679 = vpack.c.b16 %v3325, %v3319
    %v3680 = vpack.c.b16 %v3326, %v3320
    %v3681 = vpack.c.b16 %v3327, %v3321
    %v3682 = vpack.c.b16 %v3328, %v3322
    %v3683 = vpack.c.b16 %v3329, %v3323
    %v3684 = vpack.c.b16 %v3330, %v3324
    %v3685 = vpack.c.b16 %v3337, %v3331
    %v3686 = vpack.c.b16 %v3338, %v3332
    %v3687 = vpack.c.b16 %v3339, %v3333
    %v3688 = vpack.c.b16 %v3340, %v3334
    %v3689 = vpack.c.b16 %v3341, %v3335
    %v3690 = vpack.c.b16 %v3342, %v3336
    %v3691 = vpack.c.b16 %v3349, %v3343
    %v3692 = vpack.c.b16 %v3350, %v3344
    %v3693 = vpack.c.b16 %v3351, %v3345
    %v3694 = vpack.c.b16 %v3352, %v3346
    %v3695 = vpack.c.b16 %v3353, %v3347
    %v3696 = vpack.c.b16 %v3354, %v3348
    %v3697 = vpack.c.b16 %v3361, %v3355
    %v3698 = vpack.c.b16 %v3362, %v3356
    %v3699 = vpack.c.b16 %v3363, %v3357
    %v3700 = vpack.c.b16 %v3364, %v3358
    %v3701 = vpack.c.b16 %v3365, %v3359
    %v3702 = vpack.c.b16 %v3366, %v3360
    %v3703 = vpack.c.b16 %v3373, %v3367
    %v3704 = vpack.c.b16 %v3374, %v3368
    %v3705 = vpack.c.b16 %v3375, %v3369
    %v3706 = vpack.c.b16 %v3376, %v3370
    %v3707 = vpack.c.b16 %v3377, %v3371
    %v3708 = vpack.c.b16 %v3378, %v3372
    %v3709 = vpack.c.b16 %v3385, %v3379
    %v3710 = vpack.c.b16 %v3386, %v3380
    %v3711 = vpack.c.b16 %v3387, %v3381
    %v3712 = vpack.c.b16 %v3388, %v3382
    %v3713 = vpack.c.b16 %v3389, %v3383
    %v3714 = vpack.c.b16 %v3390, %v3384
    %v3715 = vpack.c.b16 %v3397, %v3391
    %v3716 = vpack.c.b16 %v3398, %v3392
    %v3717 = vpack.c.b16 %v3399, %v3393
    %v3718 = vpack.c.b16 %v3400, %v3394
    %v3719 = vpack.c.b16 %v3401, %v3395
    %v3720 = vpack.c.b16 %v3402, %v3396
    %v3721 = vpack.c.b16 %v3409, %v3403
    %v3722 = vpack.c.b16 %v3410, %v3404
    %v3723 = vpack.c.b16 %v3411, %v3405
    %v3724 = vpack.c.b16 %v3412, %v3406
    %v3725 = vpack.c.b16 %v3413, %v3407
    %v3726 = vpack.c.b16 %v3414, %v3408
    %v3727 = vpack.c.b16 %v3421, %v3415
    %v3728 = vpack.c.b16 %v3422, %v3416
    %v3729 = vpack.c.b16 %v3423, %v3417
    %v3730 = vpack.c.b16 %v3424, %v3418
    %v3731 = vpack.c.b16 %v3425, %v3419
    %v3732 = vpack.c.b16 %v3426, %v3420
    %v3733 = vpack.c.b16 %v3433, %v3427
    %v3734 = vpack.c.b16 %v3434, %v3428
    %v3735 = vpack.c.b16 %v3435, %v3429
    %v3736 = vpack.c.b16 %v3436, %v3430
    %v3737 = vpack.c.b16 %v3437, %v3431
    %v3738 = vpack.c.b16 %v3438, %v3432
    %v3739 = vpack.c.b16 %v3445, %v3439
    %v3740 = vpack.c.b16 %v3446, %v3440
    %v3741 = vpack.c.b16 %v3447, %v3441
    %v3742 = vpack.c.b16 %v3448, %v3442
    %v3743 = vpack.c.b16 %v3449, %v3443
    %v3744 = vpack.c.b16 %v3450, %v3444
    %v3745 = vpack.c.b16 %v3457, %v3451
    %v3746 = vpack.c.b16 %v3458, %v3452
    %v3747 = vpack.c.b16 %v3459, %v3453
    %v3748 = vpack.c.b16 %v3460, %v3454
    %v3749 = vpack.c.b16 %v3461, %v3455
    %v3750 = vpack.c.b16 %v3462, %v3456
    %4039 = vmatprep.subr.bf16.mxu0 %v3506
    %4040 = vmatpush1.bf16.msra.mxu0 %v3505
    %4041 = vmatprep.subr.bf16.mxu0 %v3500
    %4042 = vmatpush1.bf16.msra.mxu0 %v3499
    %4043 = vmatprep.subr.bf16.mxu0 %v3494
    %4044 = vmatpush1.bf16.msra.mxu0 %v3493
    %4045 = vmatprep.subr.bf16.mxu0 %v3488
    %4046 = vmatpush1.bf16.msra.mxu0 %v3487
    %4047 = vmatprep.subr.bf16.mxu0 %v3482
    %4048 = vmatpush1.bf16.msra.mxu0 %v3481
    %4049 = vmatprep.subr.bf16.mxu0 %v3476
    %4050 = vmatpush1.bf16.msra.mxu0 %v3475
    %4051 = vmatprep.subr.bf16.mxu0 %v3470
    %4052 = vmatpush1.bf16.msra.mxu0 %v3469
    %4053 = vmatprep.subr.bf16.mxu0 %v3464
    %4054 = vmatpush1.bf16.msra.mxu0 %v3463
    %4055 = vmatprep.subr.bf16.mxu0 %v3554
    %4056 = vmatpush2.bf16.msra.mxu0 %v3553
    %4057 = vmatprep.subr.bf16.mxu0 %v3548
    %4058 = vmatpush2.bf16.msra.mxu0 %v3547
    %4059 = vmatprep.subr.bf16.mxu0 %v3542
    %4060 = vmatpush2.bf16.msra.mxu0 %v3541
    %4061 = vmatprep.subr.bf16.mxu0 %v3536
    %4062 = vmatpush2.bf16.msra.mxu0 %v3535
    %4063 = vmatprep.subr.bf16.mxu0 %v3530
    %4064 = vmatpush2.bf16.msra.mxu0 %v3529
    %4065 = vmatprep.subr.bf16.mxu0 %v3524
    %4066 = vmatpush2.bf16.msra.mxu0 %v3523
    %4067 = vmatprep.subr.bf16.mxu0 %v3518
    %4068 = vmatpush2.bf16.msra.mxu0 %v3517
    %4069 = vmatprep.subr.bf16.mxu0 %v3512
    %4070 = vmatpush2.bf16.msra.mxu0 %v3511
    %4071 = vmatprep.mubr.bf16.mxu0 %v2274
    %4072 = vmatmul.mubr.bf16.gmra.mxu0 %v2273
    %v4073 = vpop.f32.mrf.mxu0
    %v4074 = vadd.f32 %v2572, %v4073
    %v4075 = vpop.f32.mrf.mxu0
    %v4076 = vadd.f32 %v2576, %v4075
    %v4077 = vpop.f32.mrf.mxu0
    %v4078 = vpop.f32.mrf.mxu0
    %4079 = vdwg.mxu0
    %4080 = vmatprep.subr.bf16.mxu0 %v3602
    %4081 = vmatpush1.bf16.msra.mxu0 %v3601
    %4082 = vmatprep.subr.bf16.mxu0 %v3596
    %4083 = vmatpush1.bf16.msra.mxu0 %v3595
    %4084 = vmatprep.subr.bf16.mxu0 %v3590
    %4085 = vmatpush1.bf16.msra.mxu0 %v3589
    %4086 = vmatprep.subr.bf16.mxu0 %v3584
    %4087 = vmatpush1.bf16.msra.mxu0 %v3583
    %4088 = vmatprep.subr.bf16.mxu0 %v3578
    %4089 = vmatpush1.bf16.msra.mxu0 %v3577
    %4090 = vmatprep.subr.bf16.mxu0 %v3572
    %4091 = vmatpush1.bf16.msra.mxu0 %v3571
    %4092 = vmatprep.subr.bf16.mxu0 %v3566
    %4093 = vmatpush1.bf16.msra.mxu0 %v3565
    %4094 = vmatprep.subr.bf16.mxu0 %v3560
    %4095 = vmatpush1.bf16.msra.mxu0 %v3559
    %4096 = vmatprep.subr.bf16.mxu0 %v3650
    %4097 = vmatpush2.bf16.msra.mxu0 %v3649
    %4098 = vmatprep.subr.bf16.mxu0 %v3644
    %4099 = vmatpush2.bf16.msra.mxu0 %v3643
    %4100 = vmatprep.subr.bf16.mxu0 %v3638
    %4101 = vmatpush2.bf16.msra.mxu0 %v3637
    %4102 = vmatprep.subr.bf16.mxu0 %v3632
    %4103 = vmatpush2.bf16.msra.mxu0 %v3631
    %4104 = vmatprep.subr.bf16.mxu0 %v3626
    %4105 = vmatpush2.bf16.msra.mxu0 %v3625
    %4106 = vmatprep.subr.bf16.mxu0 %v3620
    %4107 = vmatpush2.bf16.msra.mxu0 %v3619
    %4108 = vmatprep.subr.bf16.mxu0 %v3614
    %4109 = vmatpush2.bf16.msra.mxu0 %v3613
    %4110 = vmatprep.subr.bf16.mxu0 %v3608
    %4111 = vmatpush2.bf16.msra.mxu0 %v3607
    %4112 = vmatprep.mubr.bf16.mxu0 %v2276
    %4113 = vmatmul.mubr.bf16.gmra.mxu0 %v2275
    %v4114 = vpop.f32.mrf.mxu0
    %v4115 = vadd.f32 %v4074, %v4114
    %v4116 = vpop.f32.mrf.mxu0
    %v4117 = vadd.f32 %v4076, %v4116
    %v4118 = vpop.f32.mrf.mxu0
    %v4119 = vpop.f32.mrf.mxu0
    %4120 = vdwg.mxu0
    %4121 = vmatprep.subr.bf16.mxu0 %v3698
    %4122 = vmatpush1.bf16.msra.mxu0 %v3697
    %4123 = vmatprep.subr.bf16.mxu0 %v3692
    %4124 = vmatpush1.bf16.msra.mxu0 %v3691
    %4125 = vmatprep.subr.bf16.mxu0 %v3686
    %4126 = vmatpush1.bf16.msra.mxu0 %v3685
    %4127 = vmatprep.subr.bf16.mxu0 %v3680
    %4128 = vmatpush1.bf16.msra.mxu0 %v3679
    %4129 = vmatprep.subr.bf16.mxu0 %v3674
    %4130 = vmatpush1.bf16.msra.mxu0 %v3673
    %4131 = vmatprep.subr.bf16.mxu0 %v3668
    %4132 = vmatpush1.bf16.msra.mxu0 %v3667
    %4133 = vmatprep.subr.bf16.mxu0 %v3662
    %4134 = vmatpush1.bf16.msra.mxu0 %v3661
    %4135 = vmatprep.subr.bf16.mxu0 %v3656
    %4136 = vmatpush1.bf16.msra.mxu0 %v3655
    %4137 = vmatprep.subr.bf16.mxu0 %v3746
    %4138 = vmatpush2.bf16.msra.mxu0 %v3745
    %4139 = vmatprep.subr.bf16.mxu0 %v3740
    %4140 = vmatpush2.bf16.msra.mxu0 %v3739
    %4141 = vmatprep.subr.bf16.mxu0 %v3734
    %4142 = vmatpush2.bf16.msra.mxu0 %v3733
    %4143 = vmatprep.subr.bf16.mxu0 %v3728
    %4144 = vmatpush2.bf16.msra.mxu0 %v3727
    %4145 = vmatprep.subr.bf16.mxu0 %v3722
    %4146 = vmatpush2.bf16.msra.mxu0 %v3721
    %4147 = vmatprep.subr.bf16.mxu0 %v3716
    %4148 = vmatpush2.bf16.msra.mxu0 %v3715
    %4149 = vmatprep.subr.bf16.mxu0 %v3710
    %4150 = vmatpush2.bf16.msra.mxu0 %v3709
    %4151 = vmatprep.subr.bf16.mxu0 %v3704
    %4152 = vmatpush2.bf16.msra.mxu0 %v3703
    %4153 = vmatprep.mubr.bf16.mxu0 %v2278
    %4154 = vmatmul.mubr.bf16.gmra.mxu0 %v2277
    %v4155 = vpop.f32.mrf.mxu0
    %v4156 = vadd.f32 %v4115, %v4155
    %v4157 = vpop.f32.mrf.mxu0
    %v4158 = vadd.f32 %v4117, %v4157
    %v4159 = vpop.f32.mrf.mxu0
    %v4160 = vpop.f32.mrf.mxu0
    %4161 = vdwg.mxu0
    %4162 = vmatprep.subr.bf16.mxu0 %v3508
    %4163 = vmatpush1.bf16.msra.mxu0 %v3507
    %4164 = vmatprep.subr.bf16.mxu0 %v3502
    %4165 = vmatpush1.bf16.msra.mxu0 %v3501
    %4166 = vmatprep.subr.bf16.mxu0 %v3496
    %4167 = vmatpush1.bf16.msra.mxu0 %v3495
    %4168 = vmatprep.subr.bf16.mxu0 %v3490
    %4169 = vmatpush1.bf16.msra.mxu0 %v3489
    %4170 = vmatprep.subr.bf16.mxu0 %v3484
    %4171 = vmatpush1.bf16.msra.mxu0 %v3483
    %4172 = vmatprep.subr.bf16.mxu0 %v3478
    %4173 = vmatpush1.bf16.msra.mxu0 %v3477
    %4174 = vmatprep.subr.bf16.mxu0 %v3472
    %4175 = vmatpush1.bf16.msra.mxu0 %v3471
    %4176 = vmatprep.subr.bf16.mxu0 %v3466
    %4177 = vmatpush1.bf16.msra.mxu0 %v3465
    %4178 = vmatprep.subr.bf16.mxu0 %v3556
    %4179 = vmatpush2.bf16.msra.mxu0 %v3555
    %4180 = vmatprep.subr.bf16.mxu0 %v3550
    %4181 = vmatpush2.bf16.msra.mxu0 %v3549
    %4182 = vmatprep.subr.bf16.mxu0 %v3544
    %4183 = vmatpush2.bf16.msra.mxu0 %v3543
    %4184 = vmatprep.subr.bf16.mxu0 %v3538
    %4185 = vmatpush2.bf16.msra.mxu0 %v3537
    %4186 = vmatprep.subr.bf16.mxu0 %v3532
    %4187 = vmatpush2.bf16.msra.mxu0 %v3531
    %4188 = vmatprep.subr.bf16.mxu0 %v3526
    %4189 = vmatpush2.bf16.msra.mxu0 %v3525
    %4190 = vmatprep.subr.bf16.mxu0 %v3520
    %4191 = vmatpush2.bf16.msra.mxu0 %v3519
    %4192 = vmatprep.subr.bf16.mxu0 %v3514
    %4193 = vmatpush2.bf16.msra.mxu0 %v3513
    %4194 = vmatprep.mubr.bf16.mxu0 %v2274
    %4195 = vmatmul.mubr.bf16.gmra.mxu0 %v2273
    %v4196 = vpop.f32.mrf.mxu0
    %v4197 = vadd.f32 %v2580, %v4196
    %v4198 = vpop.f32.mrf.mxu0
    %v4199 = vadd.f32 %v2584, %v4198
    %v4200 = vpop.f32.mrf.mxu0
    %v4201 = vpop.f32.mrf.mxu0
    %4202 = vdwg.mxu0
    %4203 = vmatprep.subr.bf16.mxu0 %v3604
    %4204 = vmatpush1.bf16.msra.mxu0 %v3603
    %4205 = vmatprep.subr.bf16.mxu0 %v3598
    %4206 = vmatpush1.bf16.msra.mxu0 %v3597
    %4207 = vmatprep.subr.bf16.mxu0 %v3592
    %4208 = vmatpush1.bf16.msra.mxu0 %v3591
    %4209 = vmatprep.subr.bf16.mxu0 %v3586
    %4210 = vmatpush1.bf16.msra.mxu0 %v3585
    %4211 = vmatprep.subr.bf16.mxu0 %v3580
    %4212 = vmatpush1.bf16.msra.mxu0 %v3579
    %4213 = vmatprep.subr.bf16.mxu0 %v3574
    %4214 = vmatpush1.bf16.msra.mxu0 %v3573
    %4215 = vmatprep.subr.bf16.mxu0 %v3568
    %4216 = vmatpush1.bf16.msra.mxu0 %v3567
    %4217 = vmatprep.subr.bf16.mxu0 %v3562
    %4218 = vmatpush1.bf16.msra.mxu0 %v3561
    %4219 = vmatprep.subr.bf16.mxu0 %v3652
    %4220 = vmatpush2.bf16.msra.mxu0 %v3651
    %4221 = vmatprep.subr.bf16.mxu0 %v3646
    %4222 = vmatpush2.bf16.msra.mxu0 %v3645
    %4223 = vmatprep.subr.bf16.mxu0 %v3640
    %4224 = vmatpush2.bf16.msra.mxu0 %v3639
    %4225 = vmatprep.subr.bf16.mxu0 %v3634
    %4226 = vmatpush2.bf16.msra.mxu0 %v3633
    %4227 = vmatprep.subr.bf16.mxu0 %v3628
    %4228 = vmatpush2.bf16.msra.mxu0 %v3627
    %4229 = vmatprep.subr.bf16.mxu0 %v3622
    %4230 = vmatpush2.bf16.msra.mxu0 %v3621
    %4231 = vmatprep.subr.bf16.mxu0 %v3616
    %4232 = vmatpush2.bf16.msra.mxu0 %v3615
    %4233 = vmatprep.subr.bf16.mxu0 %v3610
    %4234 = vmatpush2.bf16.msra.mxu0 %v3609
    %4235 = vmatprep.mubr.bf16.mxu0 %v2276
    %4236 = vmatmul.mubr.bf16.gmra.mxu0 %v2275
    %v4237 = vpop.f32.mrf.mxu0
    %v4238 = vadd.f32 %v4197, %v4237
    %v4239 = vpop.f32.mrf.mxu0
    %v4240 = vadd.f32 %v4199, %v4239
    %v4241 = vpop.f32.mrf.mxu0
    %v4242 = vpop.f32.mrf.mxu0
    %4243 = vdwg.mxu0
    %4244 = vmatprep.subr.bf16.mxu0 %v3700
    %4245 = vmatpush1.bf16.msra.mxu0 %v3699
    %4246 = vmatprep.subr.bf16.mxu0 %v3694
    %4247 = vmatpush1.bf16.msra.mxu0 %v3693
    %4248 = vmatprep.subr.bf16.mxu0 %v3688
    %4249 = vmatpush1.bf16.msra.mxu0 %v3687
    %4250 = vmatprep.subr.bf16.mxu0 %v3682
    %4251 = vmatpush1.bf16.msra.mxu0 %v3681
    %4252 = vmatprep.subr.bf16.mxu0 %v3676
    %4253 = vmatpush1.bf16.msra.mxu0 %v3675
    %4254 = vmatprep.subr.bf16.mxu0 %v3670
    %4255 = vmatpush1.bf16.msra.mxu0 %v3669
    %4256 = vmatprep.subr.bf16.mxu0 %v3664
    %4257 = vmatpush1.bf16.msra.mxu0 %v3663
    %4258 = vmatprep.subr.bf16.mxu0 %v3658
    %4259 = vmatpush1.bf16.msra.mxu0 %v3657
    %4260 = vmatprep.subr.bf16.mxu0 %v3748
    %4261 = vmatpush2.bf16.msra.mxu0 %v3747
    %4262 = vmatprep.subr.bf16.mxu0 %v3742
    %4263 = vmatpush2.bf16.msra.mxu0 %v3741
    %4264 = vmatprep.subr.bf16.mxu0 %v3736
    %4265 = vmatpush2.bf16.msra.mxu0 %v3735
    %4266 = vmatprep.subr.bf16.mxu0 %v3730
    %4267 = vmatpush2.bf16.msra.mxu0 %v3729
    %4268 = vmatprep.subr.bf16.mxu0 %v3724
    %4269 = vmatpush2.bf16.msra.mxu0 %v3723
    %4270 = vmatprep.subr.bf16.mxu0 %v3718
    %4271 = vmatpush2.bf16.msra.mxu0 %v3717
    %4272 = vmatprep.subr.bf16.mxu0 %v3712
    %4273 = vmatpush2.bf16.msra.mxu0 %v3711
    %4274 = vmatprep.subr.bf16.mxu0 %v3706
    %4275 = vmatpush2.bf16.msra.mxu0 %v3705
    %4276 = vmatprep.mubr.bf16.mxu0 %v2278
    %4277 = vmatmul.mubr.bf16.gmra.mxu0 %v2277
    %v4278 = vpop.f32.mrf.mxu0
    %v4279 = vadd.f32 %v4238, %v4278
    %v4280 = vpop.f32.mrf.mxu0
    %v4281 = vadd.f32 %v4240, %v4280
    %v4282 = vpop.f32.mrf.mxu0
    %v4283 = vpop.f32.mrf.mxu0
    %4284 = vdwg.mxu0
    %4285 = vmatprep.subr.bf16.mxu0 %v3510
    %4286 = vmatpush1.bf16.msra.mxu0 %v3509
    %4287 = vmatprep.subr.bf16.mxu0 %v3504
    %4288 = vmatpush1.bf16.msra.mxu0 %v3503
    %4289 = vmatprep.subr.bf16.mxu0 %v3498
    %4290 = vmatpush1.bf16.msra.mxu0 %v3497
    %4291 = vmatprep.subr.bf16.mxu0 %v3492
    %4292 = vmatpush1.bf16.msra.mxu0 %v3491
    %4293 = vmatprep.subr.bf16.mxu0 %v3486
    %4294 = vmatpush1.bf16.msra.mxu0 %v3485
    %4295 = vmatprep.subr.bf16.mxu0 %v3480
    %4296 = vmatpush1.bf16.msra.mxu0 %v3479
    %4297 = vmatprep.subr.bf16.mxu0 %v3474
    %4298 = vmatpush1.bf16.msra.mxu0 %v3473
    %4299 = vmatprep.subr.bf16.mxu0 %v3468
    %4300 = vmatpush1.bf16.msra.mxu0 %v3467
    %4301 = vmatprep.subr.bf16.mxu0 %v3558
    %4302 = vmatpush2.bf16.msra.mxu0 %v3557
    %4303 = vmatprep.subr.bf16.mxu0 %v3552
    %4304 = vmatpush2.bf16.msra.mxu0 %v3551
    %4305 = vmatprep.subr.bf16.mxu0 %v3546
    %4306 = vmatpush2.bf16.msra.mxu0 %v3545
    %4307 = vmatprep.subr.bf16.mxu0 %v3540
    %4308 = vmatpush2.bf16.msra.mxu0 %v3539
    %4309 = vmatprep.subr.bf16.mxu0 %v3534
    %4310 = vmatpush2.bf16.msra.mxu0 %v3533
    %4311 = vmatprep.subr.bf16.mxu0 %v3528
    %4312 = vmatpush2.bf16.msra.mxu0 %v3527
    %4313 = vmatprep.subr.bf16.mxu0 %v3522
    %4314 = vmatpush2.bf16.msra.mxu0 %v3521
    %4315 = vmatprep.subr.bf16.mxu0 %v3516
    %4316 = vmatpush2.bf16.msra.mxu0 %v3515
    %4317 = vmatprep.mubr.bf16.mxu0 %v2274
    %4318 = vmatmul.mubr.bf16.gmra.mxu0 %v2273
    %v4319 = vpop.f32.mrf.mxu0
    %v4320 = vadd.f32 %v2588, %v4319
    %v4321 = vpop.f32.mrf.mxu0
    %v4322 = vadd.f32 %v2592, %v4321
    %v4323 = vpop.f32.mrf.mxu0
    %v4324 = vpop.f32.mrf.mxu0
    %4325 = vdwg.mxu0
    %4326 = vmatprep.subr.bf16.mxu0 %v3606
    %4327 = vmatpush1.bf16.msra.mxu0 %v3605
    %4328 = vmatprep.subr.bf16.mxu0 %v3600
    %4329 = vmatpush1.bf16.msra.mxu0 %v3599
    %4330 = vmatprep.subr.bf16.mxu0 %v3594
    %4331 = vmatpush1.bf16.msra.mxu0 %v3593
    %4332 = vmatprep.subr.bf16.mxu0 %v3588
    %4333 = vmatpush1.bf16.msra.mxu0 %v3587
    %4334 = vmatprep.subr.bf16.mxu0 %v3582
    %4335 = vmatpush1.bf16.msra.mxu0 %v3581
    %4336 = vmatprep.subr.bf16.mxu0 %v3576
    %4337 = vmatpush1.bf16.msra.mxu0 %v3575
    %4338 = vmatprep.subr.bf16.mxu0 %v3570
    %4339 = vmatpush1.bf16.msra.mxu0 %v3569
    %4340 = vmatprep.subr.bf16.mxu0 %v3564
    %4341 = vmatpush1.bf16.msra.mxu0 %v3563
    %4342 = vmatprep.subr.bf16.mxu0 %v3654
    %4343 = vmatpush2.bf16.msra.mxu0 %v3653
    %4344 = vmatprep.subr.bf16.mxu0 %v3648
    %4345 = vmatpush2.bf16.msra.mxu0 %v3647
    %4346 = vmatprep.subr.bf16.mxu0 %v3642
    %4347 = vmatpush2.bf16.msra.mxu0 %v3641
    %4348 = vmatprep.subr.bf16.mxu0 %v3636
    %4349 = vmatpush2.bf16.msra.mxu0 %v3635
    %4350 = vmatprep.subr.bf16.mxu0 %v3630
    %4351 = vmatpush2.bf16.msra.mxu0 %v3629
    %4352 = vmatprep.subr.bf16.mxu0 %v3624
    %4353 = vmatpush2.bf16.msra.mxu0 %v3623
    %4354 = vmatprep.subr.bf16.mxu0 %v3618
    %4355 = vmatpush2.bf16.msra.mxu0 %v3617
    %4356 = vmatprep.subr.bf16.mxu0 %v3612
    %4357 = vmatpush2.bf16.msra.mxu0 %v3611
    %4358 = vmatprep.mubr.bf16.mxu0 %v2276
    %4359 = vmatmul.mubr.bf16.gmra.mxu0 %v2275
    %v4360 = vpop.f32.mrf.mxu0
    %v4361 = vadd.f32 %v4320, %v4360
    %v4362 = vpop.f32.mrf.mxu0
    %v4363 = vadd.f32 %v4322, %v4362
    %v4364 = vpop.f32.mrf.mxu0
    %v4365 = vpop.f32.mrf.mxu0
    %4366 = vdwg.mxu0
    %4367 = vmatprep.subr.bf16.mxu0 %v3702
    %4368 = vmatpush1.bf16.msra.mxu0 %v3701
    %4369 = vmatprep.subr.bf16.mxu0 %v3696
    %4370 = vmatpush1.bf16.msra.mxu0 %v3695
    %4371 = vmatprep.subr.bf16.mxu0 %v3690
    %4372 = vmatpush1.bf16.msra.mxu0 %v3689
    %4373 = vmatprep.subr.bf16.mxu0 %v3684
    %4374 = vmatpush1.bf16.msra.mxu0 %v3683
    %4375 = vmatprep.subr.bf16.mxu0 %v3678
    %4376 = vmatpush1.bf16.msra.mxu0 %v3677
    %4377 = vmatprep.subr.bf16.mxu0 %v3672
    %4378 = vmatpush1.bf16.msra.mxu0 %v3671
    %4379 = vmatprep.subr.bf16.mxu0 %v3666
    %4380 = vmatpush1.bf16.msra.mxu0 %v3665
    %4381 = vmatprep.subr.bf16.mxu0 %v3660
    %4382 = vmatpush1.bf16.msra.mxu0 %v3659
    %4383 = vmatprep.subr.bf16.mxu0 %v3750
    %4384 = vmatpush2.bf16.msra.mxu0 %v3749
    %4385 = vmatprep.subr.bf16.mxu0 %v3744
    %4386 = vmatpush2.bf16.msra.mxu0 %v3743
    %4387 = vmatprep.subr.bf16.mxu0 %v3738
    %4388 = vmatpush2.bf16.msra.mxu0 %v3737
    %4389 = vmatprep.subr.bf16.mxu0 %v3732
    %4390 = vmatpush2.bf16.msra.mxu0 %v3731
    %4391 = vmatprep.subr.bf16.mxu0 %v3726
    %4392 = vmatpush2.bf16.msra.mxu0 %v3725
    %4393 = vmatprep.subr.bf16.mxu0 %v3720
    %4394 = vmatpush2.bf16.msra.mxu0 %v3719
    %4395 = vmatprep.subr.bf16.mxu0 %v3714
    %4396 = vmatpush2.bf16.msra.mxu0 %v3713
    %4397 = vmatprep.subr.bf16.mxu0 %v3708
    %4398 = vmatpush2.bf16.msra.mxu0 %v3707
    %4399 = vmatprep.mubr.bf16.mxu0 %v2278
    %4400 = vmatmul.mubr.bf16.gmra.mxu0 %v2277
    %v4401 = vpop.f32.mrf.mxu0
    %v4402 = vadd.f32 %v4361, %v4401
    %v4403 = vpop.f32.mrf.mxu0
    %v4404 = vadd.f32 %v4363, %v4403
    %v4405 = vpop.f32.mrf.mxu0
    %v4406 = vpop.f32.mrf.mxu0
    %4407 = vdwg.mxu0
    %vm4408 = vcmp.gt.f32.partialorder %v4156, 0.0
    %vm4409 = vcmp.gt.f32.partialorder %v4158, 0.0
    %vm4410 = vcmp.gt.f32.partialorder %v4279, 0.0
    %vm4411 = vcmp.gt.f32.partialorder %v4281, 0.0
    %vm4412 = vcmp.gt.f32.partialorder %v4402, 0.0
    %vm4413 = vcmp.gt.f32.partialorder %v4404, 0.0
    %v4414 = vmul.f32 %v4156, 0.01
    %v4415 = vmul.f32 %v4158, 0.01
    %v4416 = vmul.f32 %v4279, 0.01
    %v4417 = vmul.f32 %v4281, 0.01
    %v4418 = vmul.f32 %v4402, 0.01
    %v4419 = vmul.f32 %v4404, 0.01
    %v4420 = vsel %vm4408, %v4156, %v4414
    %v4421 = vsel %vm4409, %v4158, %v4415
    %v4422 = vsel %vm4410, %v4279, %v4416
    %v4423 = vsel %vm4411, %v4281, %v4417
    %v4424 = vsel %vm4412, %v4402, %v4418
    %v4425 = vsel %vm4413, %v4404, %v4419
    %v4426 = vpack.c.bf16 %v4420, %v4420
    %v4427 = vpack.c.bf16 %v4421, %v4421
    %v4428 = vpack.c.bf16 %v4422, %v4422
    %v4429 = vpack.c.bf16 %v4423, %v4423
    %v4430 = vpack.c.bf16 %v4424, %v4424
    %v4431 = vpack.c.bf16 %v4425, %v4425
    %v4432 = vld [vmem:[#allocation11] sm:$0xff]
    %v4433 = vld [vmem:[#allocation11 + $0x8] sm:$0xff]
    %v4434 = vld [vmem:[#allocation11 + $0x10] sm:$0xff]
    %v4435 = vld [vmem:[#allocation11 + $0x18] sm:$0xff]
    %v4436 = vld [vmem:[#allocation11 + $0x20] sm:$0xff]
    %v4437 = vld [vmem:[#allocation11 + $0x28] sm:$0xff]
    %v4438 = vld [vmem:[#allocation11 + $0x30] sm:$0xff]
    %v4439 = vld [vmem:[#allocation11 + $0x38] sm:$0xff]
    %v4440 = vld [vmem:[#allocation11 + $0x40] sm:$0xff]
    %v4441 = vld [vmem:[#allocation11 + $0x48] sm:$0xff]
    %v4442 = vld [vmem:[#allocation11 + $0x50] sm:$0xff]
    %v4443 = vld [vmem:[#allocation11 + $0x58] sm:$0xff]
    %v4444 = vld [vmem:[#allocation11 + $0x60] sm:$0xff]
    %v4445 = vld [vmem:[#allocation11 + $0x68] sm:$0xff]
    %v4446 = vld [vmem:[#allocation11 + $0x70] sm:$0xff]
    %v4447 = vld [vmem:[#allocation11 + $0x78] sm:$0xff]
    %v4448 = vld [vmem:[#allocation11 + $0x80] sm:$0xff]
    %v4449 = vld [vmem:[#allocation11 + $0x88] sm:$0xff]
    %v4450 = vld [vmem:[#allocation11 + $0x90] sm:$0xff]
    %v4451 = vld [vmem:[#allocation11 + $0x98] sm:$0xff]
    %v4452 = vld [vmem:[#allocation11 + $0xa0] sm:$0xff]
    %v4453 = vld [vmem:[#allocation11 + $0xa8] sm:$0xff]
    %v4454 = vld [vmem:[#allocation11 + $0xb0] sm:$0xff]
    %v4455 = vld [vmem:[#allocation11 + $0xb8] sm:$0xff]
    %v4456 = vld [vmem:[#allocation11 + $0xc0] sm:$0xff]
    %v4457 = vld [vmem:[#allocation11 + $0xc8] sm:$0xff]
    %v4458 = vld [vmem:[#allocation11 + $0xd0] sm:$0xff]
    %v4459 = vld [vmem:[#allocation11 + $0xd8] sm:$0xff]
    %v4460 = vld [vmem:[#allocation11 + $0xe0] sm:$0xff]
    %v4461 = vld [vmem:[#allocation11 + $0xe8] sm:$0xff]
    %v4462 = vld [vmem:[#allocation11 + $0xf0] sm:$0xff]
    %v4463 = vld [vmem:[#allocation11 + $0xf8] sm:$0xff]
    %v4464 = vld [vmem:[#allocation11 + $0x100] sm:$0xff]
    %v4465 = vld [vmem:[#allocation11 + $0x108] sm:$0xff]
    %v4466 = vld [vmem:[#allocation11 + $0x110] sm:$0xff]
    %v4467 = vld [vmem:[#allocation11 + $0x118] sm:$0xff]
    %v4468 = vld [vmem:[#allocation11 + $0x120] sm:$0xff]
    %v4469 = vld [vmem:[#allocation11 + $0x128] sm:$0xff]
    %v4470 = vld [vmem:[#allocation11 + $0x130] sm:$0xff]
    %v4471 = vld [vmem:[#allocation11 + $0x138] sm:$0xff]
    %v4472 = vld [vmem:[#allocation11 + $0x140] sm:$0xff]
    %v4473 = vld [vmem:[#allocation11 + $0x148] sm:$0xff]
    %v4474 = vld [vmem:[#allocation11 + $0x150] sm:$0xff]
    %v4475 = vld [vmem:[#allocation11 + $0x158] sm:$0xff]
    %v4476 = vld [vmem:[#allocation11 + $0x160] sm:$0xff]
    %v4477 = vld [vmem:[#allocation11 + $0x168] sm:$0xff]
    %v4478 = vld [vmem:[#allocation11 + $0x170] sm:$0xff]
    %v4479 = vld [vmem:[#allocation11 + $0x178] sm:$0xff]
    %v4480 = vld [vmem:[#allocation11 + $0x180] sm:$0xff]
    %v4481 = vld [vmem:[#allocation11 + $0x188] sm:$0xff]
    %v4482 = vld [vmem:[#allocation11 + $0x190] sm:$0xff]
    %v4483 = vld [vmem:[#allocation11 + $0x198] sm:$0xff]
    %v4484 = vld [vmem:[#allocation11 + $0x1a0] sm:$0xff]
    %v4485 = vld [vmem:[#allocation11 + $0x1a8] sm:$0xff]
    %v4486 = vld [vmem:[#allocation11 + $0x1b0] sm:$0xff]
    %v4487 = vld [vmem:[#allocation11 + $0x1b8] sm:$0xff]
    %v4488 = vld [vmem:[#allocation11 + $0x1c0] sm:$0xff]
    %v4489 = vld [vmem:[#allocation11 + $0x1c8] sm:$0xff]
    %v4490 = vld [vmem:[#allocation11 + $0x1d0] sm:$0xff]
    %v4491 = vld [vmem:[#allocation11 + $0x1d8] sm:$0xff]
    %v4492 = vld [vmem:[#allocation11 + $0x1e0] sm:$0xff]
    %v4493 = vld [vmem:[#allocation11 + $0x1e8] sm:$0xff]
    %v4494 = vld [vmem:[#allocation11 + $0x1f0] sm:$0xff]
    %v4495 = vld [vmem:[#allocation11 + $0x1f8] sm:$0xff]
    %v4496 = vld [vmem:[#allocation11 + $0x200] sm:$0xff]
    %v4497 = vld [vmem:[#allocation11 + $0x208] sm:$0xff]
    %v4498 = vld [vmem:[#allocation11 + $0x210] sm:$0xff]
    %v4499 = vld [vmem:[#allocation11 + $0x218] sm:$0xff]
    %v4500 = vld [vmem:[#allocation11 + $0x220] sm:$0xff]
    %v4501 = vld [vmem:[#allocation11 + $0x228] sm:$0xff]
    %v4502 = vld [vmem:[#allocation11 + $0x230] sm:$0xff]
    %v4503 = vld [vmem:[#allocation11 + $0x238] sm:$0xff]
    %v4504 = vld [vmem:[#allocation11 + $0x240] sm:$0xff]
    %v4505 = vld [vmem:[#allocation11 + $0x248] sm:$0xff]
    %v4506 = vld [vmem:[#allocation11 + $0x250] sm:$0xff]
    %v4507 = vld [vmem:[#allocation11 + $0x258] sm:$0xff]
    %v4508 = vld [vmem:[#allocation11 + $0x260] sm:$0xff]
    %v4509 = vld [vmem:[#allocation11 + $0x268] sm:$0xff]
    %v4510 = vld [vmem:[#allocation11 + $0x270] sm:$0xff]
    %v4511 = vld [vmem:[#allocation11 + $0x278] sm:$0xff]
    %v4512 = vld [vmem:[#allocation11 + $0x280] sm:$0xff]
    %v4513 = vld [vmem:[#allocation11 + $0x288] sm:$0xff]
    %v4514 = vld [vmem:[#allocation11 + $0x290] sm:$0xff]
    %v4515 = vld [vmem:[#allocation11 + $0x298] sm:$0xff]
    %v4516 = vld [vmem:[#allocation11 + $0x2a0] sm:$0xff]
    %v4517 = vld [vmem:[#allocation11 + $0x2a8] sm:$0xff]
    %v4518 = vld [vmem:[#allocation11 + $0x2b0] sm:$0xff]
    %v4519 = vld [vmem:[#allocation11 + $0x2b8] sm:$0xff]
    %v4520 = vld [vmem:[#allocation11 + $0x2c0] sm:$0xff]
    %v4521 = vld [vmem:[#allocation11 + $0x2c8] sm:$0xff]
    %v4522 = vld [vmem:[#allocation11 + $0x2d0] sm:$0xff]
    %v4523 = vld [vmem:[#allocation11 + $0x2d8] sm:$0xff]
    %v4524 = vld [vmem:[#allocation11 + $0x2e0] sm:$0xff]
    %v4525 = vld [vmem:[#allocation11 + $0x2e8] sm:$0xff]
    %v4526 = vld [vmem:[#allocation11 + $0x2f0] sm:$0xff]
    %v4527 = vld [vmem:[#allocation11 + $0x2f8] sm:$0xff]
    %v4528 = vld [vmem:[#allocation11 + $0x300] sm:$0xff]
    %v4529 = vld [vmem:[#allocation11 + $0x308] sm:$0xff]
    %v4530 = vld [vmem:[#allocation11 + $0x310] sm:$0xff]
    %v4531 = vld [vmem:[#allocation11 + $0x318] sm:$0xff]
    %v4532 = vld [vmem:[#allocation11 + $0x320] sm:$0xff]
    %v4533 = vld [vmem:[#allocation11 + $0x328] sm:$0xff]
    %v4534 = vld [vmem:[#allocation11 + $0x330] sm:$0xff]
    %v4535 = vld [vmem:[#allocation11 + $0x338] sm:$0xff]
    %v4536 = vld [vmem:[#allocation11 + $0x340] sm:$0xff]
    %v4537 = vld [vmem:[#allocation11 + $0x348] sm:$0xff]
    %v4538 = vld [vmem:[#allocation11 + $0x350] sm:$0xff]
    %v4539 = vld [vmem:[#allocation11 + $0x358] sm:$0xff]
    %v4540 = vld [vmem:[#allocation11 + $0x360] sm:$0xff]
    %v4541 = vld [vmem:[#allocation11 + $0x368] sm:$0xff]
    %v4542 = vld [vmem:[#allocation11 + $0x370] sm:$0xff]
    %v4543 = vld [vmem:[#allocation11 + $0x378] sm:$0xff]
    %v4544 = vld [vmem:[#allocation11 + $0x380] sm:$0xff]
    %v4545 = vld [vmem:[#allocation11 + $0x388] sm:$0xff]
    %v4546 = vld [vmem:[#allocation11 + $0x390] sm:$0xff]
    %v4547 = vld [vmem:[#allocation11 + $0x398] sm:$0xff]
    %v4548 = vld [vmem:[#allocation11 + $0x3a0] sm:$0xff]
    %v4549 = vld [vmem:[#allocation11 + $0x3a8] sm:$0xff]
    %v4550 = vld [vmem:[#allocation11 + $0x3b0] sm:$0xff]
    %v4551 = vld [vmem:[#allocation11 + $0x3b8] sm:$0xff]
    %v4552 = vld [vmem:[#allocation11 + $0x3c0] sm:$0xff]
    %v4553 = vld [vmem:[#allocation11 + $0x3c8] sm:$0xff]
    %v4554 = vld [vmem:[#allocation11 + $0x3d0] sm:$0xff]
    %v4555 = vld [vmem:[#allocation11 + $0x3d8] sm:$0xff]
    %v4556 = vld [vmem:[#allocation11 + $0x3e0] sm:$0xff]
    %v4557 = vld [vmem:[#allocation11 + $0x3e8] sm:$0xff]
    %v4558 = vld [vmem:[#allocation11 + $0x3f0] sm:$0xff]
    %v4559 = vld [vmem:[#allocation11 + $0x3f8] sm:$0xff]
    %v4560 = vld [vmem:[#allocation11 + $0x400] sm:$0xff]
    %v4561 = vld [vmem:[#allocation11 + $0x408] sm:$0xff]
    %v4562 = vld [vmem:[#allocation11 + $0x410] sm:$0xff]
    %v4563 = vld [vmem:[#allocation11 + $0x418] sm:$0xff]
    %v4564 = vld [vmem:[#allocation11 + $0x420] sm:$0xff]
    %v4565 = vld [vmem:[#allocation11 + $0x428] sm:$0xff]
    %v4566 = vld [vmem:[#allocation11 + $0x430] sm:$0xff]
    %v4567 = vld [vmem:[#allocation11 + $0x438] sm:$0xff]
    %v4568 = vld [vmem:[#allocation11 + $0x440] sm:$0xff]
    %v4569 = vld [vmem:[#allocation11 + $0x448] sm:$0xff]
    %v4570 = vld [vmem:[#allocation11 + $0x450] sm:$0xff]
    %v4571 = vld [vmem:[#allocation11 + $0x458] sm:$0xff]
    %v4572 = vld [vmem:[#allocation11 + $0x460] sm:$0xff]
    %v4573 = vld [vmem:[#allocation11 + $0x468] sm:$0xff]
    %v4574 = vld [vmem:[#allocation11 + $0x470] sm:$0xff]
    %v4575 = vld [vmem:[#allocation11 + $0x478] sm:$0xff]
    %v4576 = vld [vmem:[#allocation11 + $0x480] sm:$0xff]
    %v4577 = vld [vmem:[#allocation11 + $0x488] sm:$0xff]
    %v4578 = vld [vmem:[#allocation11 + $0x490] sm:$0xff]
    %v4579 = vld [vmem:[#allocation11 + $0x498] sm:$0xff]
    %v4580 = vld [vmem:[#allocation11 + $0x4a0] sm:$0xff]
    %v4581 = vld [vmem:[#allocation11 + $0x4a8] sm:$0xff]
    %v4582 = vld [vmem:[#allocation11 + $0x4b0] sm:$0xff]
    %v4583 = vld [vmem:[#allocation11 + $0x4b8] sm:$0xff]
    %v4584 = vld [vmem:[#allocation11 + $0x4c0] sm:$0xff]
    %v4585 = vld [vmem:[#allocation11 + $0x4c8] sm:$0xff]
    %v4586 = vld [vmem:[#allocation11 + $0x4d0] sm:$0xff]
    %v4587 = vld [vmem:[#allocation11 + $0x4d8] sm:$0xff]
    %v4588 = vld [vmem:[#allocation11 + $0x4e0] sm:$0xff]
    %v4589 = vld [vmem:[#allocation11 + $0x4e8] sm:$0xff]
    %v4590 = vld [vmem:[#allocation11 + $0x4f0] sm:$0xff]
    %v4591 = vld [vmem:[#allocation11 + $0x4f8] sm:$0xff]
    %v4592 = vld [vmem:[#allocation11 + $0x500] sm:$0xff]
    %v4593 = vld [vmem:[#allocation11 + $0x508] sm:$0xff]
    %v4594 = vld [vmem:[#allocation11 + $0x510] sm:$0xff]
    %v4595 = vld [vmem:[#allocation11 + $0x518] sm:$0xff]
    %v4596 = vld [vmem:[#allocation11 + $0x520] sm:$0xff]
    %v4597 = vld [vmem:[#allocation11 + $0x528] sm:$0xff]
    %v4598 = vld [vmem:[#allocation11 + $0x530] sm:$0xff]
    %v4599 = vld [vmem:[#allocation11 + $0x538] sm:$0xff]
    %v4600 = vld [vmem:[#allocation11 + $0x540] sm:$0xff]
    %v4601 = vld [vmem:[#allocation11 + $0x548] sm:$0xff]
    %v4602 = vld [vmem:[#allocation11 + $0x550] sm:$0xff]
    %v4603 = vld [vmem:[#allocation11 + $0x558] sm:$0xff]
    %v4604 = vld [vmem:[#allocation11 + $0x560] sm:$0xff]
    %v4605 = vld [vmem:[#allocation11 + $0x568] sm:$0xff]
    %v4606 = vld [vmem:[#allocation11 + $0x570] sm:$0xff]
    %v4607 = vld [vmem:[#allocation11 + $0x578] sm:$0xff]
    %v4608 = vld [vmem:[#allocation11 + $0x580] sm:$0xff]
    %v4609 = vld [vmem:[#allocation11 + $0x588] sm:$0xff]
    %v4610 = vld [vmem:[#allocation11 + $0x590] sm:$0xff]
    %v4611 = vld [vmem:[#allocation11 + $0x598] sm:$0xff]
    %v4612 = vld [vmem:[#allocation11 + $0x5a0] sm:$0xff]
    %v4613 = vld [vmem:[#allocation11 + $0x5a8] sm:$0xff]
    %v4614 = vld [vmem:[#allocation11 + $0x5b0] sm:$0xff]
    %v4615 = vld [vmem:[#allocation11 + $0x5b8] sm:$0xff]
    %v4616 = vld [vmem:[#allocation11 + $0x5c0] sm:$0xff]
    %v4617 = vld [vmem:[#allocation11 + $0x5c8] sm:$0xff]
    %v4618 = vld [vmem:[#allocation11 + $0x5d0] sm:$0xff]
    %v4619 = vld [vmem:[#allocation11 + $0x5d8] sm:$0xff]
    %v4620 = vld [vmem:[#allocation11 + $0x5e0] sm:$0xff]
    %v4621 = vld [vmem:[#allocation11 + $0x5e8] sm:$0xff]
    %v4622 = vld [vmem:[#allocation11 + $0x5f0] sm:$0xff]
    %v4623 = vld [vmem:[#allocation11 + $0x5f8] sm:$0xff]
    %v4624 = vld [vmem:[#allocation11 + $0x600] sm:$0xff]
    %v4625 = vld [vmem:[#allocation11 + $0x608] sm:$0xff]
    %v4626 = vld [vmem:[#allocation11 + $0x610] sm:$0xff]
    %v4627 = vld [vmem:[#allocation11 + $0x618] sm:$0xff]
    %v4628 = vld [vmem:[#allocation11 + $0x620] sm:$0xff]
    %v4629 = vld [vmem:[#allocation11 + $0x628] sm:$0xff]
    %v4630 = vld [vmem:[#allocation11 + $0x630] sm:$0xff]
    %v4631 = vld [vmem:[#allocation11 + $0x638] sm:$0xff]
    %v4632 = vld [vmem:[#allocation11 + $0x640] sm:$0xff]
    %v4633 = vld [vmem:[#allocation11 + $0x648] sm:$0xff]
    %v4634 = vld [vmem:[#allocation11 + $0x650] sm:$0xff]
    %v4635 = vld [vmem:[#allocation11 + $0x658] sm:$0xff]
    %v4636 = vld [vmem:[#allocation11 + $0x660] sm:$0xff]
    %v4637 = vld [vmem:[#allocation11 + $0x668] sm:$0xff]
    %v4638 = vld [vmem:[#allocation11 + $0x670] sm:$0xff]
    %v4639 = vld [vmem:[#allocation11 + $0x678] sm:$0xff]
    %v4640 = vld [vmem:[#allocation11 + $0x680] sm:$0xff]
    %v4641 = vld [vmem:[#allocation11 + $0x688] sm:$0xff]
    %v4642 = vld [vmem:[#allocation11 + $0x690] sm:$0xff]
    %v4643 = vld [vmem:[#allocation11 + $0x698] sm:$0xff]
    %v4644 = vld [vmem:[#allocation11 + $0x6a0] sm:$0xff]
    %v4645 = vld [vmem:[#allocation11 + $0x6a8] sm:$0xff]
    %v4646 = vld [vmem:[#allocation11 + $0x6b0] sm:$0xff]
    %v4647 = vld [vmem:[#allocation11 + $0x6b8] sm:$0xff]
    %v4648 = vld [vmem:[#allocation11 + $0x6c0] sm:$0xff]
    %v4649 = vld [vmem:[#allocation11 + $0x6c8] sm:$0xff]
    %v4650 = vld [vmem:[#allocation11 + $0x6d0] sm:$0xff]
    %v4651 = vld [vmem:[#allocation11 + $0x6d8] sm:$0xff]
    %v4652 = vld [vmem:[#allocation11 + $0x6e0] sm:$0xff]
    %v4653 = vld [vmem:[#allocation11 + $0x6e8] sm:$0xff]
    %v4654 = vld [vmem:[#allocation11 + $0x6f0] sm:$0xff]
    %v4655 = vld [vmem:[#allocation11 + $0x6f8] sm:$0xff]
    %v4656 = vld [vmem:[#allocation11 + $0x700] sm:$0xff]
    %v4657 = vld [vmem:[#allocation11 + $0x708] sm:$0xff]
    %v4658 = vld [vmem:[#allocation11 + $0x710] sm:$0xff]
    %v4659 = vld [vmem:[#allocation11 + $0x718] sm:$0xff]
    %v4660 = vld [vmem:[#allocation11 + $0x720] sm:$0xff]
    %v4661 = vld [vmem:[#allocation11 + $0x728] sm:$0xff]
    %v4662 = vld [vmem:[#allocation11 + $0x730] sm:$0xff]
    %v4663 = vld [vmem:[#allocation11 + $0x738] sm:$0xff]
    %v4664 = vld [vmem:[#allocation11 + $0x740] sm:$0xff]
    %v4665 = vld [vmem:[#allocation11 + $0x748] sm:$0xff]
    %v4666 = vld [vmem:[#allocation11 + $0x750] sm:$0xff]
    %v4667 = vld [vmem:[#allocation11 + $0x758] sm:$0xff]
    %v4668 = vld [vmem:[#allocation11 + $0x760] sm:$0xff]
    %v4669 = vld [vmem:[#allocation11 + $0x768] sm:$0xff]
    %v4670 = vld [vmem:[#allocation11 + $0x770] sm:$0xff]
    %v4671 = vld [vmem:[#allocation11 + $0x778] sm:$0xff]
    %v4672 = vld [vmem:[#allocation11 + $0x780] sm:$0xff]
    %v4673 = vld [vmem:[#allocation11 + $0x788] sm:$0xff]
    %v4674 = vld [vmem:[#allocation11 + $0x790] sm:$0xff]
    %v4675 = vld [vmem:[#allocation11 + $0x798] sm:$0xff]
    %v4676 = vld [vmem:[#allocation11 + $0x7a0] sm:$0xff]
    %v4677 = vld [vmem:[#allocation11 + $0x7a8] sm:$0xff]
    %v4678 = vld [vmem:[#allocation11 + $0x7b0] sm:$0xff]
    %v4679 = vld [vmem:[#allocation11 + $0x7b8] sm:$0xff]
    %v4680 = vld [vmem:[#allocation11 + $0x7c0] sm:$0xff]
    %v4681 = vld [vmem:[#allocation11 + $0x7c8] sm:$0xff]
    %v4682 = vld [vmem:[#allocation11 + $0x7d0] sm:$0xff]
    %v4683 = vld [vmem:[#allocation11 + $0x7d8] sm:$0xff]
    %v4684 = vld [vmem:[#allocation11 + $0x7e0] sm:$0xff]
    %v4685 = vld [vmem:[#allocation11 + $0x7e8] sm:$0xff]
    %v4686 = vld [vmem:[#allocation11 + $0x7f0] sm:$0xff]
    %v4687 = vld [vmem:[#allocation11 + $0x7f8] sm:$0xff]
    %v4688 = vld [vmem:[#allocation11 + $0x800] sm:$0xff]
    %v4689 = vld [vmem:[#allocation11 + $0x808] sm:$0xff]
    %v4690 = vld [vmem:[#allocation11 + $0x810] sm:$0xff]
    %v4691 = vld [vmem:[#allocation11 + $0x818] sm:$0xff]
    %v4692 = vld [vmem:[#allocation11 + $0x820] sm:$0xff]
    %v4693 = vld [vmem:[#allocation11 + $0x828] sm:$0xff]
    %v4694 = vld [vmem:[#allocation11 + $0x830] sm:$0xff]
    %v4695 = vld [vmem:[#allocation11 + $0x838] sm:$0xff]
    %v4696 = vld [vmem:[#allocation11 + $0x840] sm:$0xff]
    %v4697 = vld [vmem:[#allocation11 + $0x848] sm:$0xff]
    %v4698 = vld [vmem:[#allocation11 + $0x850] sm:$0xff]
    %v4699 = vld [vmem:[#allocation11 + $0x858] sm:$0xff]
    %v4700 = vld [vmem:[#allocation11 + $0x860] sm:$0xff]
    %v4701 = vld [vmem:[#allocation11 + $0x868] sm:$0xff]
    %v4702 = vld [vmem:[#allocation11 + $0x870] sm:$0xff]
    %v4703 = vld [vmem:[#allocation11 + $0x878] sm:$0xff]
    %v4704 = vld [vmem:[#allocation11 + $0x880] sm:$0xff]
    %v4705 = vld [vmem:[#allocation11 + $0x888] sm:$0xff]
    %v4706 = vld [vmem:[#allocation11 + $0x890] sm:$0xff]
    %v4707 = vld [vmem:[#allocation11 + $0x898] sm:$0xff]
    %v4708 = vld [vmem:[#allocation11 + $0x8a0] sm:$0xff]
    %v4709 = vld [vmem:[#allocation11 + $0x8a8] sm:$0xff]
    %v4710 = vld [vmem:[#allocation11 + $0x8b0] sm:$0xff]
    %v4711 = vld [vmem:[#allocation11 + $0x8b8] sm:$0xff]
    %v4712 = vld [vmem:[#allocation11 + $0x8c0] sm:$0xff]
    %v4713 = vld [vmem:[#allocation11 + $0x8c8] sm:$0xff]
    %v4714 = vld [vmem:[#allocation11 + $0x8d0] sm:$0xff]
    %v4715 = vld [vmem:[#allocation11 + $0x8d8] sm:$0xff]
    %v4716 = vld [vmem:[#allocation11 + $0x8e0] sm:$0xff]
    %v4717 = vld [vmem:[#allocation11 + $0x8e8] sm:$0xff]
    %v4718 = vld [vmem:[#allocation11 + $0x8f0] sm:$0xff]
    %v4719 = vld [vmem:[#allocation11 + $0x8f8] sm:$0xff]
    %v4720 = vld [vmem:[#allocation13] sm:$0x3f]
    %v4722 = vlaneseq
    %v4723 = vshrl.u32 %v4722, 7
    %v4724 = vsub.s32 0, %v4723
    %v4725 = vrot.slane %v4720, %v4724
    %v4726 = vlaneseq
    %v4727 = vshrl.u32 %v4726, 7
    %v4728 = vsub.s32 1, %v4727
    %v4729 = vrot.slane %v4720, %v4728
    %v4730 = vlaneseq
    %v4731 = vshrl.u32 %v4730, 7
    %v4732 = vsub.s32 2, %v4731
    %v4733 = vrot.slane %v4720, %v4732
    %v4734 = vlaneseq
    %v4735 = vshrl.u32 %v4734, 7
    %v4736 = vsub.s32 3, %v4735
    %v4737 = vrot.slane %v4720, %v4736
    %v4738 = vlaneseq
    %v4739 = vshrl.u32 %v4738, 7
    %v4740 = vsub.s32 4, %v4739
    %v4741 = vrot.slane %v4720, %v4740
    %v4742 = vlaneseq
    %v4743 = vshrl.u32 %v4742, 7
    %v4744 = vsub.s32 5, %v4743
    %v4745 = vrot.slane %v4720, %v4744
    %v5040 = vunpack.c.l.b16 %v4432
    %v5041 = vunpack.c.h.b16 %v4432
    %v5042 = vunpack.c.l.b16 %v4433
    %v5043 = vunpack.c.h.b16 %v4433
    %v5044 = vunpack.c.l.b16 %v4434
    %v5045 = vunpack.c.h.b16 %v4434
    %v5046 = vunpack.c.l.b16 %v4435
    %v5047 = vunpack.c.h.b16 %v4435
    %v5048 = vunpack.c.l.b16 %v4436
    %v5049 = vunpack.c.h.b16 %v4436
    %v5050 = vunpack.c.l.b16 %v4437
    %v5051 = vunpack.c.h.b16 %v4437
    %v5052 = vunpack.c.l.b16 %v4438
    %v5053 = vunpack.c.h.b16 %v4438
    %v5054 = vunpack.c.l.b16 %v4439
    %v5055 = vunpack.c.h.b16 %v4439
    %v5056 = vunpack.c.l.b16 %v4440
    %v5057 = vunpack.c.h.b16 %v4440
    %v5058 = vunpack.c.l.b16 %v4441
    %v5059 = vunpack.c.h.b16 %v4441
    %v5060 = vunpack.c.l.b16 %v4442
    %v5061 = vunpack.c.h.b16 %v4442
    %v5062 = vunpack.c.l.b16 %v4443
    %v5063 = vunpack.c.h.b16 %v4443
    %v5064 = vunpack.c.l.b16 %v4444
    %v5065 = vunpack.c.h.b16 %v4444
    %v5066 = vunpack.c.l.b16 %v4445
    %v5067 = vunpack.c.h.b16 %v4445
    %v5068 = vunpack.c.l.b16 %v4446
    %v5069 = vunpack.c.h.b16 %v4446
    %v5070 = vunpack.c.l.b16 %v4447
    %v5071 = vunpack.c.h.b16 %v4447
    %v5072 = vunpack.c.l.b16 %v4448
    %v5073 = vunpack.c.h.b16 %v4448
    %v5074 = vunpack.c.l.b16 %v4449
    %v5075 = vunpack.c.h.b16 %v4449
    %v5076 = vunpack.c.l.b16 %v4450
    %v5077 = vunpack.c.h.b16 %v4450
    %v5078 = vunpack.c.l.b16 %v4451
    %v5079 = vunpack.c.h.b16 %v4451
    %v5080 = vunpack.c.l.b16 %v4452
    %v5081 = vunpack.c.h.b16 %v4452
    %v5082 = vunpack.c.l.b16 %v4453
    %v5083 = vunpack.c.h.b16 %v4453
    %v5084 = vunpack.c.l.b16 %v4454
    %v5085 = vunpack.c.h.b16 %v4454
    %v5086 = vunpack.c.l.b16 %v4455
    %v5087 = vunpack.c.h.b16 %v4455
    %v5088 = vunpack.c.l.b16 %v4456
    %v5089 = vunpack.c.h.b16 %v4456
    %v5090 = vunpack.c.l.b16 %v4457
    %v5091 = vunpack.c.h.b16 %v4457
    %v5092 = vunpack.c.l.b16 %v4458
    %v5093 = vunpack.c.h.b16 %v4458
    %v5094 = vunpack.c.l.b16 %v4459
    %v5095 = vunpack.c.h.b16 %v4459
    %v5096 = vunpack.c.l.b16 %v4460
    %v5097 = vunpack.c.h.b16 %v4460
    %v5098 = vunpack.c.l.b16 %v4461
    %v5099 = vunpack.c.h.b16 %v4461
    %v5100 = vunpack.c.l.b16 %v4462
    %v5101 = vunpack.c.h.b16 %v4462
    %v5102 = vunpack.c.l.b16 %v4463
    %v5103 = vunpack.c.h.b16 %v4463
    %v5104 = vunpack.c.l.b16 %v4464
    %v5105 = vunpack.c.h.b16 %v4464
    %v5106 = vunpack.c.l.b16 %v4465
    %v5107 = vunpack.c.h.b16 %v4465
    %v5108 = vunpack.c.l.b16 %v4466
    %v5109 = vunpack.c.h.b16 %v4466
    %v5110 = vunpack.c.l.b16 %v4467
    %v5111 = vunpack.c.h.b16 %v4467
    %v5112 = vunpack.c.l.b16 %v4468
    %v5113 = vunpack.c.h.b16 %v4468
    %v5114 = vunpack.c.l.b16 %v4469
    %v5115 = vunpack.c.h.b16 %v4469
    %v5116 = vunpack.c.l.b16 %v4470
    %v5117 = vunpack.c.h.b16 %v4470
    %v5118 = vunpack.c.l.b16 %v4471
    %v5119 = vunpack.c.h.b16 %v4471
    %v5120 = vunpack.c.l.b16 %v4472
    %v5121 = vunpack.c.h.b16 %v4472
    %v5122 = vunpack.c.l.b16 %v4473
    %v5123 = vunpack.c.h.b16 %v4473
    %v5124 = vunpack.c.l.b16 %v4474
    %v5125 = vunpack.c.h.b16 %v4474
    %v5126 = vunpack.c.l.b16 %v4475
    %v5127 = vunpack.c.h.b16 %v4475
    %v5128 = vunpack.c.l.b16 %v4476
    %v5129 = vunpack.c.h.b16 %v4476
    %v5130 = vunpack.c.l.b16 %v4477
    %v5131 = vunpack.c.h.b16 %v4477
    %v5132 = vunpack.c.l.b16 %v4478
    %v5133 = vunpack.c.h.b16 %v4478
    %v5134 = vunpack.c.l.b16 %v4479
    %v5135 = vunpack.c.h.b16 %v4479
    %v5136 = vunpack.c.l.b16 %v4480
    %v5137 = vunpack.c.h.b16 %v4480
    %v5138 = vunpack.c.l.b16 %v4481
    %v5139 = vunpack.c.h.b16 %v4481
    %v5140 = vunpack.c.l.b16 %v4482
    %v5141 = vunpack.c.h.b16 %v4482
    %v5142 = vunpack.c.l.b16 %v4483
    %v5143 = vunpack.c.h.b16 %v4483
    %v5144 = vunpack.c.l.b16 %v4484
    %v5145 = vunpack.c.h.b16 %v4484
    %v5146 = vunpack.c.l.b16 %v4485
    %v5147 = vunpack.c.h.b16 %v4485
    %v5148 = vunpack.c.l.b16 %v4486
    %v5149 = vunpack.c.h.b16 %v4486
    %v5150 = vunpack.c.l.b16 %v4487
    %v5151 = vunpack.c.h.b16 %v4487
    %v5152 = vunpack.c.l.b16 %v4488
    %v5153 = vunpack.c.h.b16 %v4488
    %v5154 = vunpack.c.l.b16 %v4489
    %v5155 = vunpack.c.h.b16 %v4489
    %v5156 = vunpack.c.l.b16 %v4490
    %v5157 = vunpack.c.h.b16 %v4490
    %v5158 = vunpack.c.l.b16 %v4491
    %v5159 = vunpack.c.h.b16 %v4491
    %v5160 = vunpack.c.l.b16 %v4492
    %v5161 = vunpack.c.h.b16 %v4492
    %v5162 = vunpack.c.l.b16 %v4493
    %v5163 = vunpack.c.h.b16 %v4493
    %v5164 = vunpack.c.l.b16 %v4494
    %v5165 = vunpack.c.h.b16 %v4494
    %v5166 = vunpack.c.l.b16 %v4495
    %v5167 = vunpack.c.h.b16 %v4495
    %v5168 = vunpack.c.l.b16 %v4496
    %v5169 = vunpack.c.h.b16 %v4496
    %v5170 = vunpack.c.l.b16 %v4497
    %v5171 = vunpack.c.h.b16 %v4497
    %v5172 = vunpack.c.l.b16 %v4498
    %v5173 = vunpack.c.h.b16 %v4498
    %v5174 = vunpack.c.l.b16 %v4499
    %v5175 = vunpack.c.h.b16 %v4499
    %v5176 = vunpack.c.l.b16 %v4500
    %v5177 = vunpack.c.h.b16 %v4500
    %v5178 = vunpack.c.l.b16 %v4501
    %v5179 = vunpack.c.h.b16 %v4501
    %v5180 = vunpack.c.l.b16 %v4502
    %v5181 = vunpack.c.h.b16 %v4502
    %v5182 = vunpack.c.l.b16 %v4503
    %v5183 = vunpack.c.h.b16 %v4503
    %v5184 = vunpack.c.l.b16 %v4504
    %v5185 = vunpack.c.h.b16 %v4504
    %v5186 = vunpack.c.l.b16 %v4505
    %v5187 = vunpack.c.h.b16 %v4505
    %v5188 = vunpack.c.l.b16 %v4506
    %v5189 = vunpack.c.h.b16 %v4506
    %v5190 = vunpack.c.l.b16 %v4507
    %v5191 = vunpack.c.h.b16 %v4507
    %v5192 = vunpack.c.l.b16 %v4508
    %v5193 = vunpack.c.h.b16 %v4508
    %v5194 = vunpack.c.l.b16 %v4509
    %v5195 = vunpack.c.h.b16 %v4509
    %v5196 = vunpack.c.l.b16 %v4510
    %v5197 = vunpack.c.h.b16 %v4510
    %v5198 = vunpack.c.l.b16 %v4511
    %v5199 = vunpack.c.h.b16 %v4511
    %v5200 = vunpack.c.l.b16 %v4512
    %v5201 = vunpack.c.h.b16 %v4512
    %v5202 = vunpack.c.l.b16 %v4513
    %v5203 = vunpack.c.h.b16 %v4513
    %v5204 = vunpack.c.l.b16 %v4514
    %v5205 = vunpack.c.h.b16 %v4514
    %v5206 = vunpack.c.l.b16 %v4515
    %v5207 = vunpack.c.h.b16 %v4515
    %v5208 = vunpack.c.l.b16 %v4516
    %v5209 = vunpack.c.h.b16 %v4516
    %v5210 = vunpack.c.l.b16 %v4517
    %v5211 = vunpack.c.h.b16 %v4517
    %v5212 = vunpack.c.l.b16 %v4518
    %v5213 = vunpack.c.h.b16 %v4518
    %v5214 = vunpack.c.l.b16 %v4519
    %v5215 = vunpack.c.h.b16 %v4519
    %v5216 = vunpack.c.l.b16 %v4520
    %v5217 = vunpack.c.h.b16 %v4520
    %v5218 = vunpack.c.l.b16 %v4521
    %v5219 = vunpack.c.h.b16 %v4521
    %v5220 = vunpack.c.l.b16 %v4522
    %v5221 = vunpack.c.h.b16 %v4522
    %v5222 = vunpack.c.l.b16 %v4523
    %v5223 = vunpack.c.h.b16 %v4523
    %v5224 = vunpack.c.l.b16 %v4524
    %v5225 = vunpack.c.h.b16 %v4524
    %v5226 = vunpack.c.l.b16 %v4525
    %v5227 = vunpack.c.h.b16 %v4525
    %v5228 = vunpack.c.l.b16 %v4526
    %v5229 = vunpack.c.h.b16 %v4526
    %v5230 = vunpack.c.l.b16 %v4527
    %v5231 = vunpack.c.h.b16 %v4527
    %v5232 = vunpack.c.l.b16 %v4528
    %v5233 = vunpack.c.h.b16 %v4528
    %v5234 = vunpack.c.l.b16 %v4529
    %v5235 = vunpack.c.h.b16 %v4529
    %v5236 = vunpack.c.l.b16 %v4530
    %v5237 = vunpack.c.h.b16 %v4530
    %v5238 = vunpack.c.l.b16 %v4531
    %v5239 = vunpack.c.h.b16 %v4531
    %v5240 = vunpack.c.l.b16 %v4532
    %v5241 = vunpack.c.h.b16 %v4532
    %v5242 = vunpack.c.l.b16 %v4533
    %v5243 = vunpack.c.h.b16 %v4533
    %v5244 = vunpack.c.l.b16 %v4534
    %v5245 = vunpack.c.h.b16 %v4534
    %v5246 = vunpack.c.l.b16 %v4535
    %v5247 = vunpack.c.h.b16 %v4535
    %v5248 = vunpack.c.l.b16 %v4536
    %v5249 = vunpack.c.h.b16 %v4536
    %v5250 = vunpack.c.l.b16 %v4537
    %v5251 = vunpack.c.h.b16 %v4537
    %v5252 = vunpack.c.l.b16 %v4538
    %v5253 = vunpack.c.h.b16 %v4538
    %v5254 = vunpack.c.l.b16 %v4539
    %v5255 = vunpack.c.h.b16 %v4539
    %v5256 = vunpack.c.l.b16 %v4540
    %v5257 = vunpack.c.h.b16 %v4540
    %v5258 = vunpack.c.l.b16 %v4541
    %v5259 = vunpack.c.h.b16 %v4541
    %v5260 = vunpack.c.l.b16 %v4542
    %v5261 = vunpack.c.h.b16 %v4542
    %v5262 = vunpack.c.l.b16 %v4543
    %v5263 = vunpack.c.h.b16 %v4543
    %v5264 = vunpack.c.l.b16 %v4544
    %v5265 = vunpack.c.h.b16 %v4544
    %v5266 = vunpack.c.l.b16 %v4545
    %v5267 = vunpack.c.h.b16 %v4545
    %v5268 = vunpack.c.l.b16 %v4546
    %v5269 = vunpack.c.h.b16 %v4546
    %v5270 = vunpack.c.l.b16 %v4547
    %v5271 = vunpack.c.h.b16 %v4547
    %v5272 = vunpack.c.l.b16 %v4548
    %v5273 = vunpack.c.h.b16 %v4548
    %v5274 = vunpack.c.l.b16 %v4549
    %v5275 = vunpack.c.h.b16 %v4549
    %v5276 = vunpack.c.l.b16 %v4550
    %v5277 = vunpack.c.h.b16 %v4550
    %v5278 = vunpack.c.l.b16 %v4551
    %v5279 = vunpack.c.h.b16 %v4551
    %v5280 = vunpack.c.l.b16 %v4552
    %v5281 = vunpack.c.h.b16 %v4552
    %v5282 = vunpack.c.l.b16 %v4553
    %v5283 = vunpack.c.h.b16 %v4553
    %v5284 = vunpack.c.l.b16 %v4554
    %v5285 = vunpack.c.h.b16 %v4554
    %v5286 = vunpack.c.l.b16 %v4555
    %v5287 = vunpack.c.h.b16 %v4555
    %v5288 = vunpack.c.l.b16 %v4556
    %v5289 = vunpack.c.h.b16 %v4556
    %v5290 = vunpack.c.l.b16 %v4557
    %v5291 = vunpack.c.h.b16 %v4557
    %v5292 = vunpack.c.l.b16 %v4558
    %v5293 = vunpack.c.h.b16 %v4558
    %v5294 = vunpack.c.l.b16 %v4559
    %v5295 = vunpack.c.h.b16 %v4559
    %v5296 = vunpack.c.l.b16 %v4560
    %v5297 = vunpack.c.h.b16 %v4560
    %v5298 = vunpack.c.l.b16 %v4561
    %v5299 = vunpack.c.h.b16 %v4561
    %v5300 = vunpack.c.l.b16 %v4562
    %v5301 = vunpack.c.h.b16 %v4562
    %v5302 = vunpack.c.l.b16 %v4563
    %v5303 = vunpack.c.h.b16 %v4563
    %v5304 = vunpack.c.l.b16 %v4564
    %v5305 = vunpack.c.h.b16 %v4564
    %v5306 = vunpack.c.l.b16 %v4565
    %v5307 = vunpack.c.h.b16 %v4565
    %v5308 = vunpack.c.l.b16 %v4566
    %v5309 = vunpack.c.h.b16 %v4566
    %v5310 = vunpack.c.l.b16 %v4567
    %v5311 = vunpack.c.h.b16 %v4567
    %v5312 = vunpack.c.l.b16 %v4568
    %v5313 = vunpack.c.h.b16 %v4568
    %v5314 = vunpack.c.l.b16 %v4569
    %v5315 = vunpack.c.h.b16 %v4569
    %v5316 = vunpack.c.l.b16 %v4570
    %v5317 = vunpack.c.h.b16 %v4570
    %v5318 = vunpack.c.l.b16 %v4571
    %v5319 = vunpack.c.h.b16 %v4571
    %v5320 = vunpack.c.l.b16 %v4572
    %v5321 = vunpack.c.h.b16 %v4572
    %v5322 = vunpack.c.l.b16 %v4573
    %v5323 = vunpack.c.h.b16 %v4573
    %v5324 = vunpack.c.l.b16 %v4574
    %v5325 = vunpack.c.h.b16 %v4574
    %v5326 = vunpack.c.l.b16 %v4575
    %v5327 = vunpack.c.h.b16 %v4575
    %v5328 = vunpack.c.l.b16 %v4576
    %v5329 = vunpack.c.h.b16 %v4576
    %v5330 = vunpack.c.l.b16 %v4577
    %v5331 = vunpack.c.h.b16 %v4577
    %v5332 = vunpack.c.l.b16 %v4578
    %v5333 = vunpack.c.h.b16 %v4578
    %v5334 = vunpack.c.l.b16 %v4579
    %v5335 = vunpack.c.h.b16 %v4579
    %v5336 = vunpack.c.l.b16 %v4580
    %v5337 = vunpack.c.h.b16 %v4580
    %v5338 = vunpack.c.l.b16 %v4581
    %v5339 = vunpack.c.h.b16 %v4581
    %v5340 = vunpack.c.l.b16 %v4582
    %v5341 = vunpack.c.h.b16 %v4582
    %v5342 = vunpack.c.l.b16 %v4583
    %v5343 = vunpack.c.h.b16 %v4583
    %v5344 = vunpack.c.l.b16 %v4584
    %v5345 = vunpack.c.h.b16 %v4584
    %v5346 = vunpack.c.l.b16 %v4585
    %v5347 = vunpack.c.h.b16 %v4585
    %v5348 = vunpack.c.l.b16 %v4586
    %v5349 = vunpack.c.h.b16 %v4586
    %v5350 = vunpack.c.l.b16 %v4587
    %v5351 = vunpack.c.h.b16 %v4587
    %v5352 = vunpack.c.l.b16 %v4588
    %v5353 = vunpack.c.h.b16 %v4588
    %v5354 = vunpack.c.l.b16 %v4589
    %v5355 = vunpack.c.h.b16 %v4589
    %v5356 = vunpack.c.l.b16 %v4590
    %v5357 = vunpack.c.h.b16 %v4590
    %v5358 = vunpack.c.l.b16 %v4591
    %v5359 = vunpack.c.h.b16 %v4591
    %v5360 = vunpack.c.l.b16 %v4592
    %v5361 = vunpack.c.h.b16 %v4592
    %v5362 = vunpack.c.l.b16 %v4593
    %v5363 = vunpack.c.h.b16 %v4593
    %v5364 = vunpack.c.l.b16 %v4594
    %v5365 = vunpack.c.h.b16 %v4594
    %v5366 = vunpack.c.l.b16 %v4595
    %v5367 = vunpack.c.h.b16 %v4595
    %v5368 = vunpack.c.l.b16 %v4596
    %v5369 = vunpack.c.h.b16 %v4596
    %v5370 = vunpack.c.l.b16 %v4597
    %v5371 = vunpack.c.h.b16 %v4597
    %v5372 = vunpack.c.l.b16 %v4598
    %v5373 = vunpack.c.h.b16 %v4598
    %v5374 = vunpack.c.l.b16 %v4599
    %v5375 = vunpack.c.h.b16 %v4599
    %v5376 = vunpack.c.l.b16 %v4600
    %v5377 = vunpack.c.h.b16 %v4600
    %v5378 = vunpack.c.l.b16 %v4601
    %v5379 = vunpack.c.h.b16 %v4601
    %v5380 = vunpack.c.l.b16 %v4602
    %v5381 = vunpack.c.h.b16 %v4602
    %v5382 = vunpack.c.l.b16 %v4603
    %v5383 = vunpack.c.h.b16 %v4603
    %v5384 = vunpack.c.l.b16 %v4604
    %v5385 = vunpack.c.h.b16 %v4604
    %v5386 = vunpack.c.l.b16 %v4605
    %v5387 = vunpack.c.h.b16 %v4605
    %v5388 = vunpack.c.l.b16 %v4606
    %v5389 = vunpack.c.h.b16 %v4606
    %v5390 = vunpack.c.l.b16 %v4607
    %v5391 = vunpack.c.h.b16 %v4607
    %v5392 = vunpack.c.l.b16 %v4608
    %v5393 = vunpack.c.h.b16 %v4608
    %v5394 = vunpack.c.l.b16 %v4609
    %v5395 = vunpack.c.h.b16 %v4609
    %v5396 = vunpack.c.l.b16 %v4610
    %v5397 = vunpack.c.h.b16 %v4610
    %v5398 = vunpack.c.l.b16 %v4611
    %v5399 = vunpack.c.h.b16 %v4611
    %v5400 = vunpack.c.l.b16 %v4612
    %v5401 = vunpack.c.h.b16 %v4612
    %v5402 = vunpack.c.l.b16 %v4613
    %v5403 = vunpack.c.h.b16 %v4613
    %v5404 = vunpack.c.l.b16 %v4614
    %v5405 = vunpack.c.h.b16 %v4614
    %v5406 = vunpack.c.l.b16 %v4615
    %v5407 = vunpack.c.h.b16 %v4615
    %v5408 = vunpack.c.l.b16 %v4616
    %v5409 = vunpack.c.h.b16 %v4616
    %v5410 = vunpack.c.l.b16 %v4617
    %v5411 = vunpack.c.h.b16 %v4617
    %v5412 = vunpack.c.l.b16 %v4618
    %v5413 = vunpack.c.h.b16 %v4618
    %v5414 = vunpack.c.l.b16 %v4619
    %v5415 = vunpack.c.h.b16 %v4619
    %v5416 = vunpack.c.l.b16 %v4620
    %v5417 = vunpack.c.h.b16 %v4620
    %v5418 = vunpack.c.l.b16 %v4621
    %v5419 = vunpack.c.h.b16 %v4621
    %v5420 = vunpack.c.l.b16 %v4622
    %v5421 = vunpack.c.h.b16 %v4622
    %v5422 = vunpack.c.l.b16 %v4623
    %v5423 = vunpack.c.h.b16 %v4623
    %v5424 = vunpack.c.l.b16 %v4624
    %v5425 = vunpack.c.h.b16 %v4624
    %v5426 = vunpack.c.l.b16 %v4625
    %v5427 = vunpack.c.h.b16 %v4625
    %v5428 = vunpack.c.l.b16 %v4626
    %v5429 = vunpack.c.h.b16 %v4626
    %v5430 = vunpack.c.l.b16 %v4627
    %v5431 = vunpack.c.h.b16 %v4627
    %v5432 = vunpack.c.l.b16 %v4628
    %v5433 = vunpack.c.h.b16 %v4628
    %v5434 = vunpack.c.l.b16 %v4629
    %v5435 = vunpack.c.h.b16 %v4629
    %v5436 = vunpack.c.l.b16 %v4630
    %v5437 = vunpack.c.h.b16 %v4630
    %v5438 = vunpack.c.l.b16 %v4631
    %v5439 = vunpack.c.h.b16 %v4631
    %v5440 = vunpack.c.l.b16 %v4632
    %v5441 = vunpack.c.h.b16 %v4632
    %v5442 = vunpack.c.l.b16 %v4633
    %v5443 = vunpack.c.h.b16 %v4633
    %v5444 = vunpack.c.l.b16 %v4634
    %v5445 = vunpack.c.h.b16 %v4634
    %v5446 = vunpack.c.l.b16 %v4635
    %v5447 = vunpack.c.h.b16 %v4635
    %v5448 = vunpack.c.l.b16 %v4636
    %v5449 = vunpack.c.h.b16 %v4636
    %v5450 = vunpack.c.l.b16 %v4637
    %v5451 = vunpack.c.h.b16 %v4637
    %v5452 = vunpack.c.l.b16 %v4638
    %v5453 = vunpack.c.h.b16 %v4638
    %v5454 = vunpack.c.l.b16 %v4639
    %v5455 = vunpack.c.h.b16 %v4639
    %v5456 = vunpack.c.l.b16 %v4640
    %v5457 = vunpack.c.h.b16 %v4640
    %v5458 = vunpack.c.l.b16 %v4641
    %v5459 = vunpack.c.h.b16 %v4641
    %v5460 = vunpack.c.l.b16 %v4642
    %v5461 = vunpack.c.h.b16 %v4642
    %v5462 = vunpack.c.l.b16 %v4643
    %v5463 = vunpack.c.h.b16 %v4643
    %v5464 = vunpack.c.l.b16 %v4644
    %v5465 = vunpack.c.h.b16 %v4644
    %v5466 = vunpack.c.l.b16 %v4645
    %v5467 = vunpack.c.h.b16 %v4645
    %v5468 = vunpack.c.l.b16 %v4646
    %v5469 = vunpack.c.h.b16 %v4646
    %v5470 = vunpack.c.l.b16 %v4647
    %v5471 = vunpack.c.h.b16 %v4647
    %v5472 = vunpack.c.l.b16 %v4648
    %v5473 = vunpack.c.h.b16 %v4648
    %v5474 = vunpack.c.l.b16 %v4649
    %v5475 = vunpack.c.h.b16 %v4649
    %v5476 = vunpack.c.l.b16 %v4650
    %v5477 = vunpack.c.h.b16 %v4650
    %v5478 = vunpack.c.l.b16 %v4651
    %v5479 = vunpack.c.h.b16 %v4651
    %v5480 = vunpack.c.l.b16 %v4652
    %v5481 = vunpack.c.h.b16 %v4652
    %v5482 = vunpack.c.l.b16 %v4653
    %v5483 = vunpack.c.h.b16 %v4653
    %v5484 = vunpack.c.l.b16 %v4654
    %v5485 = vunpack.c.h.b16 %v4654
    %v5486 = vunpack.c.l.b16 %v4655
    %v5487 = vunpack.c.h.b16 %v4655
    %v5488 = vunpack.c.l.b16 %v4656
    %v5489 = vunpack.c.h.b16 %v4656
    %v5490 = vunpack.c.l.b16 %v4657
    %v5491 = vunpack.c.h.b16 %v4657
    %v5492 = vunpack.c.l.b16 %v4658
    %v5493 = vunpack.c.h.b16 %v4658
    %v5494 = vunpack.c.l.b16 %v4659
    %v5495 = vunpack.c.h.b16 %v4659
    %v5496 = vunpack.c.l.b16 %v4660
    %v5497 = vunpack.c.h.b16 %v4660
    %v5498 = vunpack.c.l.b16 %v4661
    %v5499 = vunpack.c.h.b16 %v4661
    %v5500 = vunpack.c.l.b16 %v4662
    %v5501 = vunpack.c.h.b16 %v4662
    %v5502 = vunpack.c.l.b16 %v4663
    %v5503 = vunpack.c.h.b16 %v4663
    %v5504 = vunpack.c.l.b16 %v4664
    %v5505 = vunpack.c.h.b16 %v4664
    %v5506 = vunpack.c.l.b16 %v4665
    %v5507 = vunpack.c.h.b16 %v4665
    %v5508 = vunpack.c.l.b16 %v4666
    %v5509 = vunpack.c.h.b16 %v4666
    %v5510 = vunpack.c.l.b16 %v4667
    %v5511 = vunpack.c.h.b16 %v4667
    %v5512 = vunpack.c.l.b16 %v4668
    %v5513 = vunpack.c.h.b16 %v4668
    %v5514 = vunpack.c.l.b16 %v4669
    %v5515 = vunpack.c.h.b16 %v4669
    %v5516 = vunpack.c.l.b16 %v4670
    %v5517 = vunpack.c.h.b16 %v4670
    %v5518 = vunpack.c.l.b16 %v4671
    %v5519 = vunpack.c.h.b16 %v4671
    %v5520 = vunpack.c.l.b16 %v4672
    %v5521 = vunpack.c.h.b16 %v4672
    %v5522 = vunpack.c.l.b16 %v4673
    %v5523 = vunpack.c.h.b16 %v4673
    %v5524 = vunpack.c.l.b16 %v4674
    %v5525 = vunpack.c.h.b16 %v4674
    %v5526 = vunpack.c.l.b16 %v4675
    %v5527 = vunpack.c.h.b16 %v4675
    %v5528 = vunpack.c.l.b16 %v4676
    %v5529 = vunpack.c.h.b16 %v4676
    %v5530 = vunpack.c.l.b16 %v4677
    %v5531 = vunpack.c.h.b16 %v4677
    %v5532 = vunpack.c.l.b16 %v4678
    %v5533 = vunpack.c.h.b16 %v4678
    %v5534 = vunpack.c.l.b16 %v4679
    %v5535 = vunpack.c.h.b16 %v4679
    %v5536 = vunpack.c.l.b16 %v4680
    %v5537 = vunpack.c.h.b16 %v4680
    %v5538 = vunpack.c.l.b16 %v4681
    %v5539 = vunpack.c.h.b16 %v4681
    %v5540 = vunpack.c.l.b16 %v4682
    %v5541 = vunpack.c.h.b16 %v4682
    %v5542 = vunpack.c.l.b16 %v4683
    %v5543 = vunpack.c.h.b16 %v4683
    %v5544 = vunpack.c.l.b16 %v4684
    %v5545 = vunpack.c.h.b16 %v4684
    %v5546 = vunpack.c.l.b16 %v4685
    %v5547 = vunpack.c.h.b16 %v4685
    %v5548 = vunpack.c.l.b16 %v4686
    %v5549 = vunpack.c.h.b16 %v4686
    %v5550 = vunpack.c.l.b16 %v4687
    %v5551 = vunpack.c.h.b16 %v4687
    %v5552 = vunpack.c.l.b16 %v4688
    %v5553 = vunpack.c.h.b16 %v4688
    %v5554 = vunpack.c.l.b16 %v4689
    %v5555 = vunpack.c.h.b16 %v4689
    %v5556 = vunpack.c.l.b16 %v4690
    %v5557 = vunpack.c.h.b16 %v4690
    %v5558 = vunpack.c.l.b16 %v4691
    %v5559 = vunpack.c.h.b16 %v4691
    %v5560 = vunpack.c.l.b16 %v4692
    %v5561 = vunpack.c.h.b16 %v4692
    %v5562 = vunpack.c.l.b16 %v4693
    %v5563 = vunpack.c.h.b16 %v4693
    %v5564 = vunpack.c.l.b16 %v4694
    %v5565 = vunpack.c.h.b16 %v4694
    %v5566 = vunpack.c.l.b16 %v4695
    %v5567 = vunpack.c.h.b16 %v4695
    %v5568 = vunpack.c.l.b16 %v4696
    %v5569 = vunpack.c.h.b16 %v4696
    %v5570 = vunpack.c.l.b16 %v4697
    %v5571 = vunpack.c.h.b16 %v4697
    %v5572 = vunpack.c.l.b16 %v4698
    %v5573 = vunpack.c.h.b16 %v4698
    %v5574 = vunpack.c.l.b16 %v4699
    %v5575 = vunpack.c.h.b16 %v4699
    %v5576 = vunpack.c.l.b16 %v4700
    %v5577 = vunpack.c.h.b16 %v4700
    %v5578 = vunpack.c.l.b16 %v4701
    %v5579 = vunpack.c.h.b16 %v4701
    %v5580 = vunpack.c.l.b16 %v4702
    %v5581 = vunpack.c.h.b16 %v4702
    %v5582 = vunpack.c.l.b16 %v4703
    %v5583 = vunpack.c.h.b16 %v4703
    %v5584 = vunpack.c.l.b16 %v4704
    %v5585 = vunpack.c.h.b16 %v4704
    %v5586 = vunpack.c.l.b16 %v4705
    %v5587 = vunpack.c.h.b16 %v4705
    %v5588 = vunpack.c.l.b16 %v4706
    %v5589 = vunpack.c.h.b16 %v4706
    %v5590 = vunpack.c.l.b16 %v4707
    %v5591 = vunpack.c.h.b16 %v4707
    %v5592 = vunpack.c.l.b16 %v4708
    %v5593 = vunpack.c.h.b16 %v4708
    %v5594 = vunpack.c.l.b16 %v4709
    %v5595 = vunpack.c.h.b16 %v4709
    %v5596 = vunpack.c.l.b16 %v4710
    %v5597 = vunpack.c.h.b16 %v4710
    %v5598 = vunpack.c.l.b16 %v4711
    %v5599 = vunpack.c.h.b16 %v4711
    %v5600 = vunpack.c.l.b16 %v4712
    %v5601 = vunpack.c.h.b16 %v4712
    %v5602 = vunpack.c.l.b16 %v4713
    %v5603 = vunpack.c.h.b16 %v4713
    %v5604 = vunpack.c.l.b16 %v4714
    %v5605 = vunpack.c.h.b16 %v4714
    %v5606 = vunpack.c.l.b16 %v4715
    %v5607 = vunpack.c.h.b16 %v4715
    %v5608 = vunpack.c.l.b16 %v4716
    %v5609 = vunpack.c.h.b16 %v4716
    %v5610 = vunpack.c.l.b16 %v4717
    %v5611 = vunpack.c.h.b16 %v4717
    %v5612 = vunpack.c.l.b16 %v4718
    %v5613 = vunpack.c.h.b16 %v4718
    %v5614 = vunpack.c.l.b16 %v4719
    %v5615 = vunpack.c.h.b16 %v4719
    %v5616 = vpack.c.b16 %v5046, %v5040
    %v5617 = vpack.c.b16 %v5047, %v5041
    %v5618 = vpack.c.b16 %v5048, %v5042
    %v5619 = vpack.c.b16 %v5049, %v5043
    %v5620 = vpack.c.b16 %v5050, %v5044
    %v5621 = vpack.c.b16 %v5051, %v5045
    %v5622 = vpack.c.b16 %v5058, %v5052
    %v5623 = vpack.c.b16 %v5059, %v5053
    %v5624 = vpack.c.b16 %v5060, %v5054
    %v5625 = vpack.c.b16 %v5061, %v5055
    %v5626 = vpack.c.b16 %v5062, %v5056
    %v5627 = vpack.c.b16 %v5063, %v5057
    %v5628 = vpack.c.b16 %v5070, %v5064
    %v5629 = vpack.c.b16 %v5071, %v5065
    %v5630 = vpack.c.b16 %v5072, %v5066
    %v5631 = vpack.c.b16 %v5073, %v5067
    %v5632 = vpack.c.b16 %v5074, %v5068
    %v5633 = vpack.c.b16 %v5075, %v5069
    %v5634 = vpack.c.b16 %v5082, %v5076
    %v5635 = vpack.c.b16 %v5083, %v5077
    %v5636 = vpack.c.b16 %v5084, %v5078
    %v5637 = vpack.c.b16 %v5085, %v5079
    %v5638 = vpack.c.b16 %v5086, %v5080
    %v5639 = vpack.c.b16 %v5087, %v5081
    %v5640 = vpack.c.b16 %v5094, %v5088
    %v5641 = vpack.c.b16 %v5095, %v5089
    %v5642 = vpack.c.b16 %v5096, %v5090
    %v5643 = vpack.c.b16 %v5097, %v5091
    %v5644 = vpack.c.b16 %v5098, %v5092
    %v5645 = vpack.c.b16 %v5099, %v5093
    %v5646 = vpack.c.b16 %v5106, %v5100
    %v5647 = vpack.c.b16 %v5107, %v5101
    %v5648 = vpack.c.b16 %v5108, %v5102
    %v5649 = vpack.c.b16 %v5109, %v5103
    %v5650 = vpack.c.b16 %v5110, %v5104
    %v5651 = vpack.c.b16 %v5111, %v5105
    %v5652 = vpack.c.b16 %v5118, %v5112
    %v5653 = vpack.c.b16 %v5119, %v5113
    %v5654 = vpack.c.b16 %v5120, %v5114
    %v5655 = vpack.c.b16 %v5121, %v5115
    %v5656 = vpack.c.b16 %v5122, %v5116
    %v5657 = vpack.c.b16 %v5123, %v5117
    %v5658 = vpack.c.b16 %v5130, %v5124
    %v5659 = vpack.c.b16 %v5131, %v5125
    %v5660 = vpack.c.b16 %v5132, %v5126
    %v5661 = vpack.c.b16 %v5133, %v5127
    %v5662 = vpack.c.b16 %v5134, %v5128
    %v5663 = vpack.c.b16 %v5135, %v5129
    %v5664 = vpack.c.b16 %v5142, %v5136
    %v5665 = vpack.c.b16 %v5143, %v5137
    %v5666 = vpack.c.b16 %v5144, %v5138
    %v5667 = vpack.c.b16 %v5145, %v5139
    %v5668 = vpack.c.b16 %v5146, %v5140
    %v5669 = vpack.c.b16 %v5147, %v5141
    %v5670 = vpack.c.b16 %v5154, %v5148
    %v5671 = vpack.c.b16 %v5155, %v5149
    %v5672 = vpack.c.b16 %v5156, %v5150
    %v5673 = vpack.c.b16 %v5157, %v5151
    %v5674 = vpack.c.b16 %v5158, %v5152
    %v5675 = vpack.c.b16 %v5159, %v5153
    %v5676 = vpack.c.b16 %v5166, %v5160
    %v5677 = vpack.c.b16 %v5167, %v5161
    %v5678 = vpack.c.b16 %v5168, %v5162
    %v5679 = vpack.c.b16 %v5169, %v5163
    %v5680 = vpack.c.b16 %v5170, %v5164
    %v5681 = vpack.c.b16 %v5171, %v5165
    %v5682 = vpack.c.b16 %v5178, %v5172
    %v5683 = vpack.c.b16 %v5179, %v5173
    %v5684 = vpack.c.b16 %v5180, %v5174
    %v5685 = vpack.c.b16 %v5181, %v5175
    %v5686 = vpack.c.b16 %v5182, %v5176
    %v5687 = vpack.c.b16 %v5183, %v5177
    %v5688 = vpack.c.b16 %v5190, %v5184
    %v5689 = vpack.c.b16 %v5191, %v5185
    %v5690 = vpack.c.b16 %v5192, %v5186
    %v5691 = vpack.c.b16 %v5193, %v5187
    %v5692 = vpack.c.b16 %v5194, %v5188
    %v5693 = vpack.c.b16 %v5195, %v5189
    %v5694 = vpack.c.b16 %v5202, %v5196
    %v5695 = vpack.c.b16 %v5203, %v5197
    %v5696 = vpack.c.b16 %v5204, %v5198
    %v5697 = vpack.c.b16 %v5205, %v5199
    %v5698 = vpack.c.b16 %v5206, %v5200
    %v5699 = vpack.c.b16 %v5207, %v5201
    %v5700 = vpack.c.b16 %v5214, %v5208
    %v5701 = vpack.c.b16 %v5215, %v5209
    %v5702 = vpack.c.b16 %v5216, %v5210
    %v5703 = vpack.c.b16 %v5217, %v5211
    %v5704 = vpack.c.b16 %v5218, %v5212
    %v5705 = vpack.c.b16 %v5219, %v5213
    %v5706 = vpack.c.b16 %v5226, %v5220
    %v5707 = vpack.c.b16 %v5227, %v5221
    %v5708 = vpack.c.b16 %v5228, %v5222
    %v5709 = vpack.c.b16 %v5229, %v5223
    %v5710 = vpack.c.b16 %v5230, %v5224
    %v5711 = vpack.c.b16 %v5231, %v5225
    %v5712 = vpack.c.b16 %v5238, %v5232
    %v5713 = vpack.c.b16 %v5239, %v5233
    %v5714 = vpack.c.b16 %v5240, %v5234
    %v5715 = vpack.c.b16 %v5241, %v5235
    %v5716 = vpack.c.b16 %v5242, %v5236
    %v5717 = vpack.c.b16 %v5243, %v5237
    %v5718 = vpack.c.b16 %v5250, %v5244
    %v5719 = vpack.c.b16 %v5251, %v5245
    %v5720 = vpack.c.b16 %v5252, %v5246
    %v5721 = vpack.c.b16 %v5253, %v5247
    %v5722 = vpack.c.b16 %v5254, %v5248
    %v5723 = vpack.c.b16 %v5255, %v5249
    %v5724 = vpack.c.b16 %v5262, %v5256
    %v5725 = vpack.c.b16 %v5263, %v5257
    %v5726 = vpack.c.b16 %v5264, %v5258
    %v5727 = vpack.c.b16 %v5265, %v5259
    %v5728 = vpack.c.b16 %v5266, %v5260
    %v5729 = vpack.c.b16 %v5267, %v5261
    %v5730 = vpack.c.b16 %v5274, %v5268
    %v5731 = vpack.c.b16 %v5275, %v5269
    %v5732 = vpack.c.b16 %v5276, %v5270
    %v5733 = vpack.c.b16 %v5277, %v5271
    %v5734 = vpack.c.b16 %v5278, %v5272
    %v5735 = vpack.c.b16 %v5279, %v5273
    %v5736 = vpack.c.b16 %v5286, %v5280
    %v5737 = vpack.c.b16 %v5287, %v5281
    %v5738 = vpack.c.b16 %v5288, %v5282
    %v5739 = vpack.c.b16 %v5289, %v5283
    %v5740 = vpack.c.b16 %v5290, %v5284
    %v5741 = vpack.c.b16 %v5291, %v5285
    %v5742 = vpack.c.b16 %v5298, %v5292
    %v5743 = vpack.c.b16 %v5299, %v5293
    %v5744 = vpack.c.b16 %v5300, %v5294
    %v5745 = vpack.c.b16 %v5301, %v5295
    %v5746 = vpack.c.b16 %v5302, %v5296
    %v5747 = vpack.c.b16 %v5303, %v5297
    %v5748 = vpack.c.b16 %v5310, %v5304
    %v5749 = vpack.c.b16 %v5311, %v5305
    %v5750 = vpack.c.b16 %v5312, %v5306
    %v5751 = vpack.c.b16 %v5313, %v5307
    %v5752 = vpack.c.b16 %v5314, %v5308
    %v5753 = vpack.c.b16 %v5315, %v5309
    %v5754 = vpack.c.b16 %v5322, %v5316
    %v5755 = vpack.c.b16 %v5323, %v5317
    %v5756 = vpack.c.b16 %v5324, %v5318
    %v5757 = vpack.c.b16 %v5325, %v5319
    %v5758 = vpack.c.b16 %v5326, %v5320
    %v5759 = vpack.c.b16 %v5327, %v5321
    %v5760 = vpack.c.b16 %v5334, %v5328
    %v5761 = vpack.c.b16 %v5335, %v5329
    %v5762 = vpack.c.b16 %v5336, %v5330
    %v5763 = vpack.c.b16 %v5337, %v5331
    %v5764 = vpack.c.b16 %v5338, %v5332
    %v5765 = vpack.c.b16 %v5339, %v5333
    %v5766 = vpack.c.b16 %v5346, %v5340
    %v5767 = vpack.c.b16 %v5347, %v5341
    %v5768 = vpack.c.b16 %v5348, %v5342
    %v5769 = vpack.c.b16 %v5349, %v5343
    %v5770 = vpack.c.b16 %v5350, %v5344
    %v5771 = vpack.c.b16 %v5351, %v5345
    %v5772 = vpack.c.b16 %v5358, %v5352
    %v5773 = vpack.c.b16 %v5359, %v5353
    %v5774 = vpack.c.b16 %v5360, %v5354
    %v5775 = vpack.c.b16 %v5361, %v5355
    %v5776 = vpack.c.b16 %v5362, %v5356
    %v5777 = vpack.c.b16 %v5363, %v5357
    %v5778 = vpack.c.b16 %v5370, %v5364
    %v5779 = vpack.c.b16 %v5371, %v5365
    %v5780 = vpack.c.b16 %v5372, %v5366
    %v5781 = vpack.c.b16 %v5373, %v5367
    %v5782 = vpack.c.b16 %v5374, %v5368
    %v5783 = vpack.c.b16 %v5375, %v5369
    %v5784 = vpack.c.b16 %v5382, %v5376
    %v5785 = vpack.c.b16 %v5383, %v5377
    %v5786 = vpack.c.b16 %v5384, %v5378
    %v5787 = vpack.c.b16 %v5385, %v5379
    %v5788 = vpack.c.b16 %v5386, %v5380
    %v5789 = vpack.c.b16 %v5387, %v5381
    %v5790 = vpack.c.b16 %v5394, %v5388
    %v5791 = vpack.c.b16 %v5395, %v5389
    %v5792 = vpack.c.b16 %v5396, %v5390
    %v5793 = vpack.c.b16 %v5397, %v5391
    %v5794 = vpack.c.b16 %v5398, %v5392
    %v5795 = vpack.c.b16 %v5399, %v5393
    %v5796 = vpack.c.b16 %v5406, %v5400
    %v5797 = vpack.c.b16 %v5407, %v5401
    %v5798 = vpack.c.b16 %v5408, %v5402
    %v5799 = vpack.c.b16 %v5409, %v5403
    %v5800 = vpack.c.b16 %v5410, %v5404
    %v5801 = vpack.c.b16 %v5411, %v5405
    %v5802 = vpack.c.b16 %v5418, %v5412
    %v5803 = vpack.c.b16 %v5419, %v5413
    %v5804 = vpack.c.b16 %v5420, %v5414
    %v5805 = vpack.c.b16 %v5421, %v5415
    %v5806 = vpack.c.b16 %v5422, %v5416
    %v5807 = vpack.c.b16 %v5423, %v5417
    %v5808 = vpack.c.b16 %v5430, %v5424
    %v5809 = vpack.c.b16 %v5431, %v5425
    %v5810 = vpack.c.b16 %v5432, %v5426
    %v5811 = vpack.c.b16 %v5433, %v5427
    %v5812 = vpack.c.b16 %v5434, %v5428
    %v5813 = vpack.c.b16 %v5435, %v5429
    %v5814 = vpack.c.b16 %v5442, %v5436
    %v5815 = vpack.c.b16 %v5443, %v5437
    %v5816 = vpack.c.b16 %v5444, %v5438
    %v5817 = vpack.c.b16 %v5445, %v5439
    %v5818 = vpack.c.b16 %v5446, %v5440
    %v5819 = vpack.c.b16 %v5447, %v5441
    %v5820 = vpack.c.b16 %v5454, %v5448
    %v5821 = vpack.c.b16 %v5455, %v5449
    %v5822 = vpack.c.b16 %v5456, %v5450
    %v5823 = vpack.c.b16 %v5457, %v5451
    %v5824 = vpack.c.b16 %v5458, %v5452
    %v5825 = vpack.c.b16 %v5459, %v5453
    %v5826 = vpack.c.b16 %v5466, %v5460
    %v5827 = vpack.c.b16 %v5467, %v5461
    %v5828 = vpack.c.b16 %v5468, %v5462
    %v5829 = vpack.c.b16 %v5469, %v5463
    %v5830 = vpack.c.b16 %v5470, %v5464
    %v5831 = vpack.c.b16 %v5471, %v5465
    %v5832 = vpack.c.b16 %v5478, %v5472
    %v5833 = vpack.c.b16 %v5479, %v5473
    %v5834 = vpack.c.b16 %v5480, %v5474
    %v5835 = vpack.c.b16 %v5481, %v5475
    %v5836 = vpack.c.b16 %v5482, %v5476
    %v5837 = vpack.c.b16 %v5483, %v5477
    %v5838 = vpack.c.b16 %v5490, %v5484
    %v5839 = vpack.c.b16 %v5491, %v5485
    %v5840 = vpack.c.b16 %v5492, %v5486
    %v5841 = vpack.c.b16 %v5493, %v5487
    %v5842 = vpack.c.b16 %v5494, %v5488
    %v5843 = vpack.c.b16 %v5495, %v5489
    %v5844 = vpack.c.b16 %v5502, %v5496
    %v5845 = vpack.c.b16 %v5503, %v5497
    %v5846 = vpack.c.b16 %v5504, %v5498
    %v5847 = vpack.c.b16 %v5505, %v5499
    %v5848 = vpack.c.b16 %v5506, %v5500
    %v5849 = vpack.c.b16 %v5507, %v5501
    %v5850 = vpack.c.b16 %v5514, %v5508
    %v5851 = vpack.c.b16 %v5515, %v5509
    %v5852 = vpack.c.b16 %v5516, %v5510
    %v5853 = vpack.c.b16 %v5517, %v5511
    %v5854 = vpack.c.b16 %v5518, %v5512
    %v5855 = vpack.c.b16 %v5519, %v5513
    %v5856 = vpack.c.b16 %v5526, %v5520
    %v5857 = vpack.c.b16 %v5527, %v5521
    %v5858 = vpack.c.b16 %v5528, %v5522
    %v5859 = vpack.c.b16 %v5529, %v5523
    %v5860 = vpack.c.b16 %v5530, %v5524
    %v5861 = vpack.c.b16 %v5531, %v5525
    %v5862 = vpack.c.b16 %v5538, %v5532
    %v5863 = vpack.c.b16 %v5539, %v5533
    %v5864 = vpack.c.b16 %v5540, %v5534
    %v5865 = vpack.c.b16 %v5541, %v5535
    %v5866 = vpack.c.b16 %v5542, %v5536
    %v5867 = vpack.c.b16 %v5543, %v5537
    %v5868 = vpack.c.b16 %v5550, %v5544
    %v5869 = vpack.c.b16 %v5551, %v5545
    %v5870 = vpack.c.b16 %v5552, %v5546
    %v5871 = vpack.c.b16 %v5553, %v5547
    %v5872 = vpack.c.b16 %v5554, %v5548
    %v5873 = vpack.c.b16 %v5555, %v5549
    %v5874 = vpack.c.b16 %v5562, %v5556
    %v5875 = vpack.c.b16 %v5563, %v5557
    %v5876 = vpack.c.b16 %v5564, %v5558
    %v5877 = vpack.c.b16 %v5565, %v5559
    %v5878 = vpack.c.b16 %v5566, %v5560
    %v5879 = vpack.c.b16 %v5567, %v5561
    %v5880 = vpack.c.b16 %v5574, %v5568
    %v5881 = vpack.c.b16 %v5575, %v5569
    %v5882 = vpack.c.b16 %v5576, %v5570
    %v5883 = vpack.c.b16 %v5577, %v5571
    %v5884 = vpack.c.b16 %v5578, %v5572
    %v5885 = vpack.c.b16 %v5579, %v5573
    %v5886 = vpack.c.b16 %v5586, %v5580
    %v5887 = vpack.c.b16 %v5587, %v5581
    %v5888 = vpack.c.b16 %v5588, %v5582
    %v5889 = vpack.c.b16 %v5589, %v5583
    %v5890 = vpack.c.b16 %v5590, %v5584
    %v5891 = vpack.c.b16 %v5591, %v5585
    %v5892 = vpack.c.b16 %v5598, %v5592
    %v5893 = vpack.c.b16 %v5599, %v5593
    %v5894 = vpack.c.b16 %v5600, %v5594
    %v5895 = vpack.c.b16 %v5601, %v5595
    %v5896 = vpack.c.b16 %v5602, %v5596
    %v5897 = vpack.c.b16 %v5603, %v5597
    %v5898 = vpack.c.b16 %v5610, %v5604
    %v5899 = vpack.c.b16 %v5611, %v5605
    %v5900 = vpack.c.b16 %v5612, %v5606
    %v5901 = vpack.c.b16 %v5613, %v5607
    %v5902 = vpack.c.b16 %v5614, %v5608
    %v5903 = vpack.c.b16 %v5615, %v5609
    %6192 = vmatprep.subr.bf16.mxu0 %v5659
    %6193 = vmatpush1.bf16.msra.mxu0 %v5658
    %6194 = vmatprep.subr.bf16.mxu0 %v5653
    %6195 = vmatpush1.bf16.msra.mxu0 %v5652
    %6196 = vmatprep.subr.bf16.mxu0 %v5647
    %6197 = vmatpush1.bf16.msra.mxu0 %v5646
    %6198 = vmatprep.subr.bf16.mxu0 %v5641
    %6199 = vmatpush1.bf16.msra.mxu0 %v5640
    %6200 = vmatprep.subr.bf16.mxu0 %v5635
    %6201 = vmatpush1.bf16.msra.mxu0 %v5634
    %6202 = vmatprep.subr.bf16.mxu0 %v5629
    %6203 = vmatpush1.bf16.msra.mxu0 %v5628
    %6204 = vmatprep.subr.bf16.mxu0 %v5623
    %6205 = vmatpush1.bf16.msra.mxu0 %v5622
    %6206 = vmatprep.subr.bf16.mxu0 %v5617
    %6207 = vmatpush1.bf16.msra.mxu0 %v5616
    %6208 = vmatprep.subr.bf16.mxu0 %v5707
    %6209 = vmatpush2.bf16.msra.mxu0 %v5706
    %6210 = vmatprep.subr.bf16.mxu0 %v5701
    %6211 = vmatpush2.bf16.msra.mxu0 %v5700
    %6212 = vmatprep.subr.bf16.mxu0 %v5695
    %6213 = vmatpush2.bf16.msra.mxu0 %v5694
    %6214 = vmatprep.subr.bf16.mxu0 %v5689
    %6215 = vmatpush2.bf16.msra.mxu0 %v5688
    %6216 = vmatprep.subr.bf16.mxu0 %v5683
    %6217 = vmatpush2.bf16.msra.mxu0 %v5682
    %6218 = vmatprep.subr.bf16.mxu0 %v5677
    %6219 = vmatpush2.bf16.msra.mxu0 %v5676
    %6220 = vmatprep.subr.bf16.mxu0 %v5671
    %6221 = vmatpush2.bf16.msra.mxu0 %v5670
    %6222 = vmatprep.subr.bf16.mxu0 %v5665
    %6223 = vmatpush2.bf16.msra.mxu0 %v5664
    %6224 = vmatprep.mubr.bf16.mxu0 %v4427
    %6225 = vmatmul.mubr.bf16.gmra.mxu0 %v4426
    %v6226 = vpop.f32.mrf.mxu0
    %v6227 = vadd.f32 %v4725, %v6226
    %v6228 = vpop.f32.mrf.mxu0
    %v6229 = vadd.f32 %v4729, %v6228
    %v6230 = vpop.f32.mrf.mxu0
    %v6231 = vpop.f32.mrf.mxu0
    %6232 = vdwg.mxu0
    %6233 = vmatprep.subr.bf16.mxu0 %v5755
    %6234 = vmatpush1.bf16.msra.mxu0 %v5754
    %6235 = vmatprep.subr.bf16.mxu0 %v5749
    %6236 = vmatpush1.bf16.msra.mxu0 %v5748
    %6237 = vmatprep.subr.bf16.mxu0 %v5743
    %6238 = vmatpush1.bf16.msra.mxu0 %v5742
    %6239 = vmatprep.subr.bf16.mxu0 %v5737
    %6240 = vmatpush1.bf16.msra.mxu0 %v5736
    %6241 = vmatprep.subr.bf16.mxu0 %v5731
    %6242 = vmatpush1.bf16.msra.mxu0 %v5730
    %6243 = vmatprep.subr.bf16.mxu0 %v5725
    %6244 = vmatpush1.bf16.msra.mxu0 %v5724
    %6245 = vmatprep.subr.bf16.mxu0 %v5719
    %6246 = vmatpush1.bf16.msra.mxu0 %v5718
    %6247 = vmatprep.subr.bf16.mxu0 %v5713
    %6248 = vmatpush1.bf16.msra.mxu0 %v5712
    %6249 = vmatprep.subr.bf16.mxu0 %v5803
    %6250 = vmatpush2.bf16.msra.mxu0 %v5802
    %6251 = vmatprep.subr.bf16.mxu0 %v5797
    %6252 = vmatpush2.bf16.msra.mxu0 %v5796
    %6253 = vmatprep.subr.bf16.mxu0 %v5791
    %6254 = vmatpush2.bf16.msra.mxu0 %v5790
    %6255 = vmatprep.subr.bf16.mxu0 %v5785
    %6256 = vmatpush2.bf16.msra.mxu0 %v5784
    %6257 = vmatprep.subr.bf16.mxu0 %v5779
    %6258 = vmatpush2.bf16.msra.mxu0 %v5778
    %6259 = vmatprep.subr.bf16.mxu0 %v5773
    %6260 = vmatpush2.bf16.msra.mxu0 %v5772
    %6261 = vmatprep.subr.bf16.mxu0 %v5767
    %6262 = vmatpush2.bf16.msra.mxu0 %v5766
    %6263 = vmatprep.subr.bf16.mxu0 %v5761
    %6264 = vmatpush2.bf16.msra.mxu0 %v5760
    %6265 = vmatprep.mubr.bf16.mxu0 %v4429
    %6266 = vmatmul.mubr.bf16.gmra.mxu0 %v4428
    %v6267 = vpop.f32.mrf.mxu0
    %v6268 = vadd.f32 %v6227, %v6267
    %v6269 = vpop.f32.mrf.mxu0
    %v6270 = vadd.f32 %v6229, %v6269
    %v6271 = vpop.f32.mrf.mxu0
    %v6272 = vpop.f32.mrf.mxu0
    %6273 = vdwg.mxu0
    %6274 = vmatprep.subr.bf16.mxu0 %v5851
    %6275 = vmatpush1.bf16.msra.mxu0 %v5850
    %6276 = vmatprep.subr.bf16.mxu0 %v5845
    %6277 = vmatpush1.bf16.msra.mxu0 %v5844
    %6278 = vmatprep.subr.bf16.mxu0 %v5839
    %6279 = vmatpush1.bf16.msra.mxu0 %v5838
    %6280 = vmatprep.subr.bf16.mxu0 %v5833
    %6281 = vmatpush1.bf16.msra.mxu0 %v5832
    %6282 = vmatprep.subr.bf16.mxu0 %v5827
    %6283 = vmatpush1.bf16.msra.mxu0 %v5826
    %6284 = vmatprep.subr.bf16.mxu0 %v5821
    %6285 = vmatpush1.bf16.msra.mxu0 %v5820
    %6286 = vmatprep.subr.bf16.mxu0 %v5815
    %6287 = vmatpush1.bf16.msra.mxu0 %v5814
    %6288 = vmatprep.subr.bf16.mxu0 %v5809
    %6289 = vmatpush1.bf16.msra.mxu0 %v5808
    %6290 = vmatprep.subr.bf16.mxu0 %v5899
    %6291 = vmatpush2.bf16.msra.mxu0 %v5898
    %6292 = vmatprep.subr.bf16.mxu0 %v5893
    %6293 = vmatpush2.bf16.msra.mxu0 %v5892
    %6294 = vmatprep.subr.bf16.mxu0 %v5887
    %6295 = vmatpush2.bf16.msra.mxu0 %v5886
    %6296 = vmatprep.subr.bf16.mxu0 %v5881
    %6297 = vmatpush2.bf16.msra.mxu0 %v5880
    %6298 = vmatprep.subr.bf16.mxu0 %v5875
    %6299 = vmatpush2.bf16.msra.mxu0 %v5874
    %6300 = vmatprep.subr.bf16.mxu0 %v5869
    %6301 = vmatpush2.bf16.msra.mxu0 %v5868
    %6302 = vmatprep.subr.bf16.mxu0 %v5863
    %6303 = vmatpush2.bf16.msra.mxu0 %v5862
    %6304 = vmatprep.subr.bf16.mxu0 %v5857
    %6305 = vmatpush2.bf16.msra.mxu0 %v5856
    %6306 = vmatprep.mubr.bf16.mxu0 %v4431
    %6307 = vmatmul.mubr.bf16.gmra.mxu0 %v4430
    %v6308 = vpop.f32.mrf.mxu0
    %v6309 = vadd.f32 %v6268, %v6308
    %v6310 = vpop.f32.mrf.mxu0
    %v6311 = vadd.f32 %v6270, %v6310
    %v6312 = vpop.f32.mrf.mxu0
    %v6313 = vpop.f32.mrf.mxu0
    %6314 = vdwg.mxu0
    %6315 = vmatprep.subr.bf16.mxu0 %v5661
    %6316 = vmatpush1.bf16.msra.mxu0 %v5660
    %6317 = vmatprep.subr.bf16.mxu0 %v5655
    %6318 = vmatpush1.bf16.msra.mxu0 %v5654
    %6319 = vmatprep.subr.bf16.mxu0 %v5649
    %6320 = vmatpush1.bf16.msra.mxu0 %v5648
    %6321 = vmatprep.subr.bf16.mxu0 %v5643
    %6322 = vmatpush1.bf16.msra.mxu0 %v5642
    %6323 = vmatprep.subr.bf16.mxu0 %v5637
    %6324 = vmatpush1.bf16.msra.mxu0 %v5636
    %6325 = vmatprep.subr.bf16.mxu0 %v5631
    %6326 = vmatpush1.bf16.msra.mxu0 %v5630
    %6327 = vmatprep.subr.bf16.mxu0 %v5625
    %6328 = vmatpush1.bf16.msra.mxu0 %v5624
    %6329 = vmatprep.subr.bf16.mxu0 %v5619
    %6330 = vmatpush1.bf16.msra.mxu0 %v5618
    %6331 = vmatprep.subr.bf16.mxu0 %v5709
    %6332 = vmatpush2.bf16.msra.mxu0 %v5708
    %6333 = vmatprep.subr.bf16.mxu0 %v5703
    %6334 = vmatpush2.bf16.msra.mxu0 %v5702
    %6335 = vmatprep.subr.bf16.mxu0 %v5697
    %6336 = vmatpush2.bf16.msra.mxu0 %v5696
    %6337 = vmatprep.subr.bf16.mxu0 %v5691
    %6338 = vmatpush2.bf16.msra.mxu0 %v5690
    %6339 = vmatprep.subr.bf16.mxu0 %v5685
    %6340 = vmatpush2.bf16.msra.mxu0 %v5684
    %6341 = vmatprep.subr.bf16.mxu0 %v5679
    %6342 = vmatpush2.bf16.msra.mxu0 %v5678
    %6343 = vmatprep.subr.bf16.mxu0 %v5673
    %6344 = vmatpush2.bf16.msra.mxu0 %v5672
    %6345 = vmatprep.subr.bf16.mxu0 %v5667
    %6346 = vmatpush2.bf16.msra.mxu0 %v5666
    %6347 = vmatprep.mubr.bf16.mxu0 %v4427
    %6348 = vmatmul.mubr.bf16.gmra.mxu0 %v4426
    %v6349 = vpop.f32.mrf.mxu0
    %v6350 = vadd.f32 %v4733, %v6349
    %v6351 = vpop.f32.mrf.mxu0
    %v6352 = vadd.f32 %v4737, %v6351
    %v6353 = vpop.f32.mrf.mxu0
    %v6354 = vpop.f32.mrf.mxu0
    %6355 = vdwg.mxu0
    %6356 = vmatprep.subr.bf16.mxu0 %v5757
    %6357 = vmatpush1.bf16.msra.mxu0 %v5756
    %6358 = vmatprep.subr.bf16.mxu0 %v5751
    %6359 = vmatpush1.bf16.msra.mxu0 %v5750
    %6360 = vmatprep.subr.bf16.mxu0 %v5745
    %6361 = vmatpush1.bf16.msra.mxu0 %v5744
    %6362 = vmatprep.subr.bf16.mxu0 %v5739
    %6363 = vmatpush1.bf16.msra.mxu0 %v5738
    %6364 = vmatprep.subr.bf16.mxu0 %v5733
    %6365 = vmatpush1.bf16.msra.mxu0 %v5732
    %6366 = vmatprep.subr.bf16.mxu0 %v5727
    %6367 = vmatpush1.bf16.msra.mxu0 %v5726
    %6368 = vmatprep.subr.bf16.mxu0 %v5721
    %6369 = vmatpush1.bf16.msra.mxu0 %v5720
    %6370 = vmatprep.subr.bf16.mxu0 %v5715
    %6371 = vmatpush1.bf16.msra.mxu0 %v5714
    %6372 = vmatprep.subr.bf16.mxu0 %v5805
    %6373 = vmatpush2.bf16.msra.mxu0 %v5804
    %6374 = vmatprep.subr.bf16.mxu0 %v5799
    %6375 = vmatpush2.bf16.msra.mxu0 %v5798
    %6376 = vmatprep.subr.bf16.mxu0 %v5793
    %6377 = vmatpush2.bf16.msra.mxu0 %v5792
    %6378 = vmatprep.subr.bf16.mxu0 %v5787
    %6379 = vmatpush2.bf16.msra.mxu0 %v5786
    %6380 = vmatprep.subr.bf16.mxu0 %v5781
    %6381 = vmatpush2.bf16.msra.mxu0 %v5780
    %6382 = vmatprep.subr.bf16.mxu0 %v5775
    %6383 = vmatpush2.bf16.msra.mxu0 %v5774
    %6384 = vmatprep.subr.bf16.mxu0 %v5769
    %6385 = vmatpush2.bf16.msra.mxu0 %v5768
    %6386 = vmatprep.subr.bf16.mxu0 %v5763
    %6387 = vmatpush2.bf16.msra.mxu0 %v5762
    %6388 = vmatprep.mubr.bf16.mxu0 %v4429
    %6389 = vmatmul.mubr.bf16.gmra.mxu0 %v4428
    %v6390 = vpop.f32.mrf.mxu0
    %v6391 = vadd.f32 %v6350, %v6390
    %v6392 = vpop.f32.mrf.mxu0
    %v6393 = vadd.f32 %v6352, %v6392
    %v6394 = vpop.f32.mrf.mxu0
    %v6395 = vpop.f32.mrf.mxu0
    %6396 = vdwg.mxu0
    %6397 = vmatprep.subr.bf16.mxu0 %v5853
    %6398 = vmatpush1.bf16.msra.mxu0 %v5852
    %6399 = vmatprep.subr.bf16.mxu0 %v5847
    %6400 = vmatpush1.bf16.msra.mxu0 %v5846
    %6401 = vmatprep.subr.bf16.mxu0 %v5841
    %6402 = vmatpush1.bf16.msra.mxu0 %v5840
    %6403 = vmatprep.subr.bf16.mxu0 %v5835
    %6404 = vmatpush1.bf16.msra.mxu0 %v5834
    %6405 = vmatprep.subr.bf16.mxu0 %v5829
    %6406 = vmatpush1.bf16.msra.mxu0 %v5828
    %6407 = vmatprep.subr.bf16.mxu0 %v5823
    %6408 = vmatpush1.bf16.msra.mxu0 %v5822
    %6409 = vmatprep.subr.bf16.mxu0 %v5817
    %6410 = vmatpush1.bf16.msra.mxu0 %v5816
    %6411 = vmatprep.subr.bf16.mxu0 %v5811
    %6412 = vmatpush1.bf16.msra.mxu0 %v5810
    %6413 = vmatprep.subr.bf16.mxu0 %v5901
    %6414 = vmatpush2.bf16.msra.mxu0 %v5900
    %6415 = vmatprep.subr.bf16.mxu0 %v5895
    %6416 = vmatpush2.bf16.msra.mxu0 %v5894
    %6417 = vmatprep.subr.bf16.mxu0 %v5889
    %6418 = vmatpush2.bf16.msra.mxu0 %v5888
    %6419 = vmatprep.subr.bf16.mxu0 %v5883
    %6420 = vmatpush2.bf16.msra.mxu0 %v5882
    %6421 = vmatprep.subr.bf16.mxu0 %v5877
    %6422 = vmatpush2.bf16.msra.mxu0 %v5876
    %6423 = vmatprep.subr.bf16.mxu0 %v5871
    %6424 = vmatpush2.bf16.msra.mxu0 %v5870
    %6425 = vmatprep.subr.bf16.mxu0 %v5865
    %6426 = vmatpush2.bf16.msra.mxu0 %v5864
    %6427 = vmatprep.subr.bf16.mxu0 %v5859
    %6428 = vmatpush2.bf16.msra.mxu0 %v5858
    %6429 = vmatprep.mubr.bf16.mxu0 %v4431
    %6430 = vmatmul.mubr.bf16.gmra.mxu0 %v4430
    %v6431 = vpop.f32.mrf.mxu0
    %v6432 = vadd.f32 %v6391, %v6431
    %v6433 = vpop.f32.mrf.mxu0
    %v6434 = vadd.f32 %v6393, %v6433
    %v6435 = vpop.f32.mrf.mxu0
    %v6436 = vpop.f32.mrf.mxu0
    %6437 = vdwg.mxu0
    %6438 = vmatprep.subr.bf16.mxu0 %v5663
    %6439 = vmatpush1.bf16.msra.mxu0 %v5662
    %6440 = vmatprep.subr.bf16.mxu0 %v5657
    %6441 = vmatpush1.bf16.msra.mxu0 %v5656
    %6442 = vmatprep.subr.bf16.mxu0 %v5651
    %6443 = vmatpush1.bf16.msra.mxu0 %v5650
    %6444 = vmatprep.subr.bf16.mxu0 %v5645
    %6445 = vmatpush1.bf16.msra.mxu0 %v5644
    %6446 = vmatprep.subr.bf16.mxu0 %v5639
    %6447 = vmatpush1.bf16.msra.mxu0 %v5638
    %6448 = vmatprep.subr.bf16.mxu0 %v5633
    %6449 = vmatpush1.bf16.msra.mxu0 %v5632
    %6450 = vmatprep.subr.bf16.mxu0 %v5627
    %6451 = vmatpush1.bf16.msra.mxu0 %v5626
    %6452 = vmatprep.subr.bf16.mxu0 %v5621
    %6453 = vmatpush1.bf16.msra.mxu0 %v5620
    %6454 = vmatprep.subr.bf16.mxu0 %v5711
    %6455 = vmatpush2.bf16.msra.mxu0 %v5710
    %6456 = vmatprep.subr.bf16.mxu0 %v5705
    %6457 = vmatpush2.bf16.msra.mxu0 %v5704
    %6458 = vmatprep.subr.bf16.mxu0 %v5699
    %6459 = vmatpush2.bf16.msra.mxu0 %v5698
    %6460 = vmatprep.subr.bf16.mxu0 %v5693
    %6461 = vmatpush2.bf16.msra.mxu0 %v5692
    %6462 = vmatprep.subr.bf16.mxu0 %v5687
    %6463 = vmatpush2.bf16.msra.mxu0 %v5686
    %6464 = vmatprep.subr.bf16.mxu0 %v5681
    %6465 = vmatpush2.bf16.msra.mxu0 %v5680
    %6466 = vmatprep.subr.bf16.mxu0 %v5675
    %6467 = vmatpush2.bf16.msra.mxu0 %v5674
    %6468 = vmatprep.subr.bf16.mxu0 %v5669
    %6469 = vmatpush2.bf16.msra.mxu0 %v5668
    %6470 = vmatprep.mubr.bf16.mxu0 %v4427
    %6471 = vmatmul.mubr.bf16.gmra.mxu0 %v4426
    %v6472 = vpop.f32.mrf.mxu0
    %v6473 = vadd.f32 %v4741, %v6472
    %v6474 = vpop.f32.mrf.mxu0
    %v6475 = vadd.f32 %v4745, %v6474
    %v6476 = vpop.f32.mrf.mxu0
    %v6477 = vpop.f32.mrf.mxu0
    %6478 = vdwg.mxu0
    %6479 = vmatprep.subr.bf16.mxu0 %v5759
    %6480 = vmatpush1.bf16.msra.mxu0 %v5758
    %6481 = vmatprep.subr.bf16.mxu0 %v5753
    %6482 = vmatpush1.bf16.msra.mxu0 %v5752
    %6483 = vmatprep.subr.bf16.mxu0 %v5747
    %6484 = vmatpush1.bf16.msra.mxu0 %v5746
    %6485 = vmatprep.subr.bf16.mxu0 %v5741
    %6486 = vmatpush1.bf16.msra.mxu0 %v5740
    %6487 = vmatprep.subr.bf16.mxu0 %v5735
    %6488 = vmatpush1.bf16.msra.mxu0 %v5734
    %6489 = vmatprep.subr.bf16.mxu0 %v5729
    %6490 = vmatpush1.bf16.msra.mxu0 %v5728
    %6491 = vmatprep.subr.bf16.mxu0 %v5723
    %6492 = vmatpush1.bf16.msra.mxu0 %v5722
    %6493 = vmatprep.subr.bf16.mxu0 %v5717
    %6494 = vmatpush1.bf16.msra.mxu0 %v5716
    %6495 = vmatprep.subr.bf16.mxu0 %v5807
    %6496 = vmatpush2.bf16.msra.mxu0 %v5806
    %6497 = vmatprep.subr.bf16.mxu0 %v5801
    %6498 = vmatpush2.bf16.msra.mxu0 %v5800
    %6499 = vmatprep.subr.bf16.mxu0 %v5795
    %6500 = vmatpush2.bf16.msra.mxu0 %v5794
    %6501 = vmatprep.subr.bf16.mxu0 %v5789
    %6502 = vmatpush2.bf16.msra.mxu0 %v5788
    %6503 = vmatprep.subr.bf16.mxu0 %v5783
    %6504 = vmatpush2.bf16.msra.mxu0 %v5782
    %6505 = vmatprep.subr.bf16.mxu0 %v5777
    %6506 = vmatpush2.bf16.msra.mxu0 %v5776
    %6507 = vmatprep.subr.bf16.mxu0 %v5771
    %6508 = vmatpush2.bf16.msra.mxu0 %v5770
    %6509 = vmatprep.subr.bf16.mxu0 %v5765
    %6510 = vmatpush2.bf16.msra.mxu0 %v5764
    %6511 = vmatprep.mubr.bf16.mxu0 %v4429
    %6512 = vmatmul.mubr.bf16.gmra.mxu0 %v4428
    %v6513 = vpop.f32.mrf.mxu0
    %v6514 = vadd.f32 %v6473, %v6513
    %v6515 = vpop.f32.mrf.mxu0
    %v6516 = vadd.f32 %v6475, %v6515
    %v6517 = vpop.f32.mrf.mxu0
    %v6518 = vpop.f32.mrf.mxu0
    %6519 = vdwg.mxu0
    %6520 = vmatprep.subr.bf16.mxu0 %v5855
    %6521 = vmatpush1.bf16.msra.mxu0 %v5854
    %6522 = vmatprep.subr.bf16.mxu0 %v5849
    %6523 = vmatpush1.bf16.msra.mxu0 %v5848
    %6524 = vmatprep.subr.bf16.mxu0 %v5843
    %6525 = vmatpush1.bf16.msra.mxu0 %v5842
    %6526 = vmatprep.subr.bf16.mxu0 %v5837
    %6527 = vmatpush1.bf16.msra.mxu0 %v5836
    %6528 = vmatprep.subr.bf16.mxu0 %v5831
    %6529 = vmatpush1.bf16.msra.mxu0 %v5830
    %6530 = vmatprep.subr.bf16.mxu0 %v5825
    %6531 = vmatpush1.bf16.msra.mxu0 %v5824
    %6532 = vmatprep.subr.bf16.mxu0 %v5819
    %6533 = vmatpush1.bf16.msra.mxu0 %v5818
    %6534 = vmatprep.subr.bf16.mxu0 %v5813
    %6535 = vmatpush1.bf16.msra.mxu0 %v5812
    %6536 = vmatprep.subr.bf16.mxu0 %v5903
    %6537 = vmatpush2.bf16.msra.mxu0 %v5902
    %6538 = vmatprep.subr.bf16.mxu0 %v5897
    %6539 = vmatpush2.bf16.msra.mxu0 %v5896
    %6540 = vmatprep.subr.bf16.mxu0 %v5891
    %6541 = vmatpush2.bf16.msra.mxu0 %v5890
    %6542 = vmatprep.subr.bf16.mxu0 %v5885
    %6543 = vmatpush2.bf16.msra.mxu0 %v5884
    %6544 = vmatprep.subr.bf16.mxu0 %v5879
    %6545 = vmatpush2.bf16.msra.mxu0 %v5878
    %6546 = vmatprep.subr.bf16.mxu0 %v5873
    %6547 = vmatpush2.bf16.msra.mxu0 %v5872
    %6548 = vmatprep.subr.bf16.mxu0 %v5867
    %6549 = vmatpush2.bf16.msra.mxu0 %v5866
    %6550 = vmatprep.subr.bf16.mxu0 %v5861
    %6551 = vmatpush2.bf16.msra.mxu0 %v5860
    %6552 = vmatprep.mubr.bf16.mxu0 %v4431
    %6553 = vmatmul.mubr.bf16.gmra.mxu0 %v4430
    %v6554 = vpop.f32.mrf.mxu0
    %v6555 = vadd.f32 %v6514, %v6554
    %v6556 = vpop.f32.mrf.mxu0
    %v6557 = vadd.f32 %v6516, %v6556
    %v6558 = vpop.f32.mrf.mxu0
    %v6559 = vpop.f32.mrf.mxu0
    %6560 = vdwg.mxu0
    %vm6561 = vcmp.gt.f32.partialorder %v6309, 0.0
    %vm6562 = vcmp.gt.f32.partialorder %v6311, 0.0
    %vm6563 = vcmp.gt.f32.partialorder %v6432, 0.0
    %vm6564 = vcmp.gt.f32.partialorder %v6434, 0.0
    %vm6565 = vcmp.gt.f32.partialorder %v6555, 0.0
    %vm6566 = vcmp.gt.f32.partialorder %v6557, 0.0
    %v6567 = vmul.f32 %v6309, 0.01
    %v6568 = vmul.f32 %v6311, 0.01
    %v6569 = vmul.f32 %v6432, 0.01
    %v6570 = vmul.f32 %v6434, 0.01
    %v6571 = vmul.f32 %v6555, 0.01
    %v6572 = vmul.f32 %v6557, 0.01
    %v6573 = vsel %vm6561, %v6309, %v6567
    %v6574 = vsel %vm6562, %v6311, %v6568
    %v6575 = vsel %vm6563, %v6432, %v6569
    %v6576 = vsel %vm6564, %v6434, %v6570
    %v6577 = vsel %vm6565, %v6555, %v6571
    %v6578 = vsel %vm6566, %v6557, %v6572
    %6579 = vst [vmem:[#allocation14] sm:$0xff] %v6573
    %6580 = vst [vmem:[#allocation14 + $0x8] sm:$0xff] %v6574
    %6581 = vst [vmem:[#allocation14 + $0x10] sm:$0xff] %v6575
    %6582 = vst [vmem:[#allocation14 + $0x18] sm:$0xff] %v6576
    %6583 = vst [vmem:[#allocation14 + $0x20] sm:$0xff] %v6577
    %6584 = vst [vmem:[#allocation14 + $0x28] sm:$0xff] %v6578
    // Predicated region
    $region58: #{manual_alignment_forward.1} parent=1 // pred_check
      _
    $region59: #{manual_alignment_forward.1} parent=1 // pred_check_branch
      %6586 = sbr.rel (0) target = $region61
    $region60: #{manual_alignment_forward.1} parent=1 // pred_region
      %s6588 = ssub.s32 768, 768
      %6589 = vsyncadd [#allocation4], %s6588
      %s6591 = sshll.u32 [#allocation14], 4
      %s6592 = int_to_ptr.vmem [resolvable:$true] %s6591
      %6594 = dma.vmem_to_hbm [thread:$0]  %s6592, 768, %s7, [#allocation4]
    $region61: #{manual_alignment_forward.1} parent=1 // pred_fallthru
      _
    // Predicated region
    $region62: #{manual_alignment_forward.1} parent=1 // pred_check
      _
    $region63: #{manual_alignment_forward.1} parent=1 // pred_check_branch
      %6596 = sbr.rel (0) target = $region65
    $region64: #{manual_alignment_forward.1} parent=1 // pred_region
      %6597 = dma.done [#allocation4], 768
    $region65: #{manual_alignment_forward.1} parent=1 // pred_fallthru
      _
    %6598 = vsyncpa [#allocation3], 1
    %6599 = vsyncpa [#allocation6], 1
    %6600 = vsyncpa [#allocation9], 1
    %6601 = vsyncpa [#allocation12], 1
    %6602 = vsyncpa [#allocation4], 1

</llo_original>
